<compile_context>
chip_gen: v7x
topology: tpu7x:2x2x1
jax: 0.10.0
libtpu: 0.0.40
codegen_flags: <defaults>
</compile_context>

<pallas_src>
import math

import jax
import jax.numpy as jnp
import numpy as np
from jax.experimental import pallas as pl
from jax.experimental.pallas import tpu as pltpu

PRIOR_PAD = 128  # lane-dense width for the (num_edges=2)-wide prior head output


# ----------------------------------------------------------------------------
# Fused Pallas kernel: the entire DNRI encoder forward for one batch element.
# ----------------------------------------------------------------------------
def _dnri_fused_kernel(
    # per-batch activation blocks
    inp_ref, h0_ref, c0_ref,
    # resident graph-structure matrices
    send_ref, recv_ref, e2n_ref,
    # mlp1
    m1_w1, m1_b1, m1_w2, m1_b2, m1_w3, m1_b3,
    # mlp2 (first layer split row-wise: [send | recv])
    m2_w1s, m2_w1r, m2_b1, m2_w2, m2_b2, m2_w3, m2_b3,
    # mlp3
    m3_w1, m3_b1, m3_w2, m3_b2, m3_w3, m3_b3,
    # mlp4 (first layer split row-wise: [send | recv | skip])
    m4_w1s, m4_w1r, m4_w1k, m4_b1, m4_w2, m4_b2, m4_w3, m4_b3,
    # lstm
    l_wih, l_whh, l_b,
    # prior head (last layer padded to PRIOR_PAD lanes)
    p_w1, p_b1, p_w2, p_b2, p_w3, p_b3,
    # outputs
    prior_ref, h1_ref, c1_ref,
):
    f32 = jnp.float32
    bf16 = jnp.bfloat16
    hidden = h0_ref.shape[-1]

    def dotb(a, b):
        # MXU matmul: bf16 operands, f32 accumulate.
        return jnp.dot(a.astype(bf16), b.astype(bf16), preferred_element_type=f32)

    def relu(v):
        return jnp.maximum(v, 0.0)

    def sigmoid(v):
        # exp + approximate reciprocal both run on the EUP (no VPU divide).
        return pl.reciprocal(1.0 + jnp.exp(-v), approx=True)

    def mlp(x, w1, b1, w2, b2, w3, b3):
        a = relu(dotb(x, w1[...]) + b1[...])
        a = relu(dotb(a, w2[...]) + b2[...])
        return dotb(a, w3[...]) + b3[...]

    x_in = inp_ref[0]                       # (N, D_in)  f32
    h0 = h0_ref[0]                          # (E, H)     f32
    c0 = c0_ref[0]                          # (E, H)     f32
    send = send_ref[...]                    # (E, N) one-hot, bf16
    recv = recv_ref[...]                    # (E, N) one-hot, bf16
    e2n = e2n_ref[...]                      # (N, E) pre-scaled by 1/(N-1), bf16

    # --- mlp1: per-node embedding ------------------------------------------
    xn = mlp(x_in, m1_w1, m1_b1, m1_w2, m1_b2, m1_w3, m1_b3)            # (N, H)

    # --- node2edge: one-hot gathers as MXU matmuls (no concat) -------------
    sx = dotb(send, xn)                                                  # (E, H)
    rx = dotb(recv, xn)                                                  # (E, H)

    # --- mlp2: relu([sx|rx] @ W1 + b1) == relu(sx@W1s + rx@W1r + b1) -------
    a = relu(dotb(sx, m2_w1s[...]) + dotb(rx, m2_w1r[...]) + m2_b1[...])
    a = relu(dotb(a, m2_w2[...]) + m2_b2[...])
    x_edge = dotb(a, m2_w3[...]) + m2_b3[...]                            # (E, H)
    x_skip = x_edge

    # --- edge2node (1/(num_vars-1) folded into e2n on the host) ------------
    xn2 = dotb(e2n, x_edge)                                              # (N, H)

    # --- mlp3 ----------------------------------------------------------------
    xn2 = mlp(xn2, m3_w1, m3_b1, m3_w2, m3_b2, m3_w3, m3_b3)             # (N, H)

    # --- node2edge again -----------------------------------------------------
    sx2 = dotb(send, xn2)                                                # (E, H)
    rx2 = dotb(recv, xn2)                                                # (E, H)

    # --- mlp4: [sx2 | rx2 | x_skip] @ W1 via 3-way split ---------------------
    a = relu(dotb(sx2, m4_w1s[...]) + dotb(rx2, m4_w1r[...])
             + dotb(x_skip, m4_w1k[...]) + m4_b1[...])
    a = relu(dotb(a, m4_w2[...]) + m4_b2[...])
    x_e = dotb(a, m4_w3[...]) + m4_b3[...]                               # (E, H)

    # --- single LSTM step (torch gate order i, f, g, o); 4H == 128 lanes ----
    gates = dotb(x_e, l_wih[...]) + dotb(h0, l_whh[...]) + l_b[...]      # (E, 4H)
    i_g = sigmoid(gates[:, 0 * hidden:1 * hidden])
    f_g = sigmoid(gates[:, 1 * hidden:2 * hidden])
    g_g = jnp.tanh(gates[:, 2 * hidden:3 * hidden])
    o_g = sigmoid(gates[:, 3 * hidden:4 * hidden])
    c_new = f_g * c0 + i_g * g_g
    h_new = o_g * jnp.tanh(c_new)
    c1_ref[0] = c_new
    h1_ref[0] = h_new

    # --- prior head; last layer padded to PRIOR_PAD lanes --------------------
    a = relu(dotb(h_new, p_w1[...]) + p_b1[...])
    a = relu(dotb(a, p_w2[...]) + p_b2[...])
    prior_ref[0] = dotb(a, p_w3[...]) + p_b3[...]                        # (E, PRIOR_PAD)


# ----------------------------------------------------------------------------
# Host-side prep: graph matrices, split/padded weights, bf16 casts
# ----------------------------------------------------------------------------
def build_edges(num_vars):
    """Graph structure + f32 edge2node matrix (used by the pure-JAX reference)."""
    edges = np.ones((num_vars, num_vars)) - np.eye(num_vars)
    send_edges, recv_edges = np.where(edges)
    edge2node_mat = (recv_edges[None, :] == np.arange(num_vars)[:, None]).astype(
        np.float32)
    return send_edges, recv_edges, jnp.asarray(edge2node_mat)


def prepare_kernel_consts(params, num_vars, out_pad=PRIOR_PAD):
    """Flat tuple of resident arrays in the exact order the fused kernel expects."""
    n = num_vars
    edges = np.ones((n, n)) - np.eye(n)
    send_edges, recv_edges = np.where(edges)
    send_mat = (send_edges[:, None] == np.arange(n)[None, :]).astype(np.float32)  # (E,N)
    recv_mat = (recv_edges[:, None] == np.arange(n)[None, :]).astype(np.float32)  # (E,N)
    # fold the 1/(num_vars-1) average into the aggregation matrix
    e2n_mat = (recv_edges[None, :] == np.arange(n)[:, None]).astype(np.float32) / (n - 1)

    bf = jnp.bfloat16
    m1, m2, m3, m4 = params["mlp1"], params["mlp2"], params["mlp3"], params["mlp4"]
    pf, lstm = params["prior_fc_out"], params["lstm"]
    h = m1["w3"].shape[1]
    num_edge_types = pf["w3"].shape[1]

    # split first-layer weights so the node2edge concats never materialize
    m2_w1s, m2_w1r = m2["w1"][:h], m2["w1"][h:2 * h]
    m4_w1s, m4_w1r, m4_w1k = m4["w1"][:h], m4["w1"][h:2 * h], m4["w1"][2 * h:3 * h]

    # pad the num_edges(=2)-wide prior head to a lane-dense out_pad-wide block
    p_w3 = jnp.zeros((h, out_pad), jnp.float32).at[:, :num_edge_types].set(pf["w3"])
    p_b3 = jnp.zeros((1, out_pad), jnp.float32).at[:, :num_edge_types].set(pf["b3"])

    return (
        jnp.asarray(send_mat, bf), jnp.asarray(recv_mat, bf), jnp.asarray(e2n_mat, bf),
        m1["w1"].astype(bf), m1["b1"], m1["w2"].astype(bf), m1["b2"],
        m1["w3"].astype(bf), m1["b3"],
        m2_w1s.astype(bf), m2_w1r.astype(bf), m2["b1"], m2["w2"].astype(bf), m2["b2"],
        m2["w3"].astype(bf), m2["b3"],
        m3["w1"].astype(bf), m3["b1"], m3["w2"].astype(bf), m3["b2"],
        m3["w3"].astype(bf), m3["b3"],
        m4_w1s.astype(bf), m4_w1r.astype(bf), m4_w1k.astype(bf), m4["b1"],
        m4["w2"].astype(bf), m4["b2"], m4["w3"].astype(bf), m4["b3"],
        lstm["w_ih"].astype(bf), lstm["w_hh"].astype(bf), lstm["b"],
        pf["w1"].astype(bf), pf["b1"], pf["w2"].astype(bf), pf["b2"],
        p_w3.astype(bf), p_b3,
    )


# ----------------------------------------------------------------------------
# Wrapper: one pallas_call, gridded over batch
# ----------------------------------------------------------------------------
def dnri_encoder_forward(kernel_consts, inputs, prior_state, *, num_edge_types=2,
                         out_pad=PRIOR_PAD):
    b, n, d_in = inputs.shape
    h0, c0 = prior_state
    _, e, h = h0.shape

    per_batch = lambda i: (i, 0, 0)
    resident2d = lambda i: (0, 0)   # weights/graph mats stay resident in VMEM

    in_specs = [
        pl.BlockSpec((1, n, d_in), per_batch),
        pl.BlockSpec((1, e, h), per_batch),
        pl.BlockSpec((1, e, h), per_batch),
    ] + [pl.BlockSpec(w.shape, resident2d) for w in kernel_consts]

    out_shape = (
        jax.ShapeDtypeStruct((b, e, out_pad), jnp.float32),
        jax.ShapeDtypeStruct((b, e, h), jnp.float32),
        jax.ShapeDtypeStruct((b, e, h), jnp.float32),
    )
    out_specs = (
        pl.BlockSpec((1, e, out_pad), per_batch),
        pl.BlockSpec((1, e, h), per_batch),
        pl.BlockSpec((1, e, h), per_batch),
    )

    prior_pad, h1, c1 = pl.pallas_call(
        _dnri_fused_kernel,
        grid=(b,),
        out_shape=out_shape,
        in_specs=in_specs,
        out_specs=out_specs,
        # LSTM state is updated in place (h0 -> h1, c0 -> c1).
        input_output_aliases={1: 1, 2: 2},
        compiler_params=pltpu.CompilerParams(
            dimension_semantics=("parallel",),       # both TensorCores on v7x
            vmem_limit_bytes=32 * 1024 * 1024,       # explicit, fits every gen
        ),
    )(inputs, h0, c0, *kernel_consts)

    prior = prior_pad[:, :, :num_edge_types]         # drop the lane padding
    return prior, (h1, c1)


# ----------------------------------------------------------------------------
# Parameter init (deterministic, synthetic) — matches torch module semantics
# ----------------------------------------------------------------------------
def xavier_normal(key, in_dim, out_dim):
    std = math.sqrt(2.0 / (in_dim + out_dim))
    return std * jax.random.normal(key, (in_dim, out_dim), jnp.float32)


def init_mlp(key, in_dim, out_dim, hidden):
    k1, k2, k3 = jax.random.split(key, 3)
    return dict(
        w1=xavier_normal(k1, in_dim, hidden),
        b1=jnp.full((1, hidden), 0.1, jnp.float32),
        w2=xavier_normal(k2, hidden, hidden),
        b2=jnp.full((1, hidden), 0.1, jnp.float32),
        w3=xavier_normal(k3, hidden, out_dim),
        b3=jnp.full((1, out_dim), 0.1, jnp.float32),
    )


def init_lstm(key, hidden):
    k1, k2, k3, k4 = jax.random.split(key, 4)
    bound = 1.0 / math.sqrt(hidden)
    u = lambda k, shape: jax.random.uniform(
        k, shape, jnp.float32, minval=-bound, maxval=bound)
    w_ih = u(k1, (hidden, 4 * hidden))
    w_hh = u(k2, (hidden, 4 * hidden))
    b = (u(k3, (4 * hidden,)) + u(k4, (4 * hidden,))).reshape(1, 4 * hidden)
    return dict(w_ih=w_ih, w_hh=w_hh, b=b)


def init_params(key, input_dim, hidden, num_edges):
    ks = jax.random.split(key, 6)
    return dict(
        mlp1=init_mlp(ks[0], input_dim, hidden, hidden),
        mlp2=init_mlp(ks[1], 2 * hidden, hidden, hidden),
        mlp3=init_mlp(ks[2], hidden, hidden, hidden),
        mlp4=init_mlp(ks[3], 3 * hidden, hidden, hidden),
        prior_fc_out=init_mlp(ks[4], hidden, num_edges, hidden),
        lstm=init_lstm(ks[5], hidden),
    )


# ----------------------------------------------------------------------------
# Pure-JAX f32 reference (for correctness check)
# ----------------------------------------------------------------------------
def _ref_mlp(x, p):
    h1 = jnp.maximum(x @ p["w1"] + p["b1"], 0.0)
    h2 = jnp.maximum(h1 @ p["w2"] + p["b2"], 0.0)
    return h2 @ p["w3"] + p["b3"]


def node2edge_ref(x, send_edges, recv_edges):
    return jnp.concatenate([x[:, send_edges, :], x[:, recv_edges, :]], axis=-1)


def reference_forward(params, inputs, prior_state, send_edges, recv_edges,
                      edge2node_mat, num_vars, num_edges=2):
    b, n, _ = inputs.shape
    h = params["mlp1"]["w3"].shape[1]
    e = send_edges.shape[0]

    x = _ref_mlp(inputs, params["mlp1"])
    x = node2edge_ref(x, send_edges, recv_edges)
    x = _ref_mlp(x, params["mlp2"])
    x_skip = x
    x = jnp.einsum("ne,beh->bnh", edge2node_mat, x) / (num_vars - 1)
    x = _ref_mlp(x, params["mlp3"])
    x = node2edge_ref(x, send_edges, recv_edges)
    x = jnp.concatenate([x, x_skip], axis=-1)
    x = _ref_mlp(x, params["mlp4"]).reshape(b * e, h)

    h0 = prior_state[0].reshape(b * e, h)
    c0 = prior_state[1].reshape(b * e, h)
    p = params["lstm"]
    gates = x @ p["w_ih"] + h0 @ p["w_hh"] + p["b"]
    i = jax.nn.sigmoid(gates[:, 0 * h:1 * h])
    f = jax.nn.sigmoid(gates[:, 1 * h:2 * h])
    g = jnp.tanh(gates[:, 2 * h:3 * h])
    o = jax.nn.sigmoid(gates[:, 3 * h:4 * h])
    c1 = f * c0 + i * g
    h1 = o * jnp.tanh(c1)

    prior = _ref_mlp(h1, params["prior_fc_out"]).reshape(b, e, num_edges)
    return prior, (h1.reshape(b, e, h), c1.reshape(b, e, h))


# ----------------------------------------------------------------------------
if __name__ == "__main__":
    B, NUM_VARS, INPUT_DIM, HIDDEN = 2, 4, 16, 32
    NUM_EDGE_TYPES = 2
    E = NUM_VARS * (NUM_VARS - 1)

    send_edges, recv_edges, edge2node_mat = build_edges(NUM_VARS)

    key = jax.random.PRNGKey(0)
    k_params, k_in, k_h, k_c = jax.random.split(key, 4)
    params = init_params(k_params, INPUT_DIM, HIDDEN, NUM_EDGE_TYPES)

    inputs = jax.random.normal(k_in, (B, NUM_VARS, INPUT_DIM), jnp.float32)
    prior_state = (
        0.1 * jax.random.normal(k_h, (B, E, HIDDEN), jnp.float32),
        0.1 * jax.random.normal(k_c, (B, E, HIDDEN), jnp.float32),
    )

    kernel_consts = prepare_kernel_consts(params, NUM_VARS)

    fwd = jax.jit(lambda consts, x, st: dnri_encoder_forward(
        consts, x, st, num_edge_types=NUM_EDGE_TYPES))
    prior, new_state = fwd(kernel_consts, inputs, prior_state)
    jax.block_until_ready((prior, new_state))

    ref_prior, ref_state = reference_forward(
        params, inputs, prior_state, send_edges, recv_edges, edge2node_mat,
        NUM_VARS, NUM_EDGE_TYPES,
    )

    assert prior.shape == (B, E, NUM_EDGE_TYPES)
    assert new_state[0].shape == (B, E, HIDDEN) and new_state[1].shape == (B, E, HIDDEN)
    np.testing.assert_allclose(np.asarray(prior), np.asarray(ref_prior),
                               rtol=5e-2, atol=5e-2)
    np.testing.assert_allclose(np.asarray(new_state[0]), np.asarray(ref_state[0]),
                               rtol=5e-2, atol=5e-2)
    np.testing.assert_allclose(np.asarray(new_state[1]), np.asarray(ref_state[1]),
                               rtol=5e-2, atol=5e-2)

    print("KERNEL_OK")
</pallas_src>

<mosaic_0001>
module attributes {stable_mosaic.version = 11 : i64} {
  func.func @_dnri_fused_kernel(%arg0: i32, %arg1: memref<1x4x16xf32, #tpu.memory_space<vmem>>, %arg2: memref<1x12x32xf32, #tpu.memory_space<vmem>>, %arg3: memref<1x12x32xf32, #tpu.memory_space<vmem>>, %arg4: memref<12x4xbf16, #tpu.memory_space<vmem>>, %arg5: memref<12x4xbf16, #tpu.memory_space<vmem>>, %arg6: memref<4x12xbf16, #tpu.memory_space<vmem>>, %arg7: memref<16x32xbf16, #tpu.memory_space<vmem>>, %arg8: memref<1x32xf32, #tpu.memory_space<vmem>>, %arg9: memref<32x32xbf16, #tpu.memory_space<vmem>>, %arg10: memref<1x32xf32, #tpu.memory_space<vmem>>, %arg11: memref<32x32xbf16, #tpu.memory_space<vmem>>, %arg12: memref<1x32xf32, #tpu.memory_space<vmem>>, %arg13: memref<32x32xbf16, #tpu.memory_space<vmem>>, %arg14: memref<32x32xbf16, #tpu.memory_space<vmem>>, %arg15: memref<1x32xf32, #tpu.memory_space<vmem>>, %arg16: memref<32x32xbf16, #tpu.memory_space<vmem>>, %arg17: memref<1x32xf32, #tpu.memory_space<vmem>>, %arg18: memref<32x32xbf16, #tpu.memory_space<vmem>>, %arg19: memref<1x32xf32, #tpu.memory_space<vmem>>, %arg20: memref<32x32xbf16, #tpu.memory_space<vmem>>, %arg21: memref<1x32xf32, #tpu.memory_space<vmem>>, %arg22: memref<32x32xbf16, #tpu.memory_space<vmem>>, %arg23: memref<1x32xf32, #tpu.memory_space<vmem>>, %arg24: memref<32x32xbf16, #tpu.memory_space<vmem>>, %arg25: memref<1x32xf32, #tpu.memory_space<vmem>>, %arg26: memref<32x32xbf16, #tpu.memory_space<vmem>>, %arg27: memref<32x32xbf16, #tpu.memory_space<vmem>>, %arg28: memref<32x32xbf16, #tpu.memory_space<vmem>>, %arg29: memref<1x32xf32, #tpu.memory_space<vmem>>, %arg30: memref<32x32xbf16, #tpu.memory_space<vmem>>, %arg31: memref<1x32xf32, #tpu.memory_space<vmem>>, %arg32: memref<32x32xbf16, #tpu.memory_space<vmem>>, %arg33: memref<1x32xf32, #tpu.memory_space<vmem>>, %arg34: memref<32x128xbf16, #tpu.memory_space<vmem>>, %arg35: memref<32x128xbf16, #tpu.memory_space<vmem>>, %arg36: memref<1x128xf32, #tpu.memory_space<vmem>>, %arg37: memref<32x32xbf16, #tpu.memory_space<vmem>>, %arg38: memref<1x32xf32, #tpu.memory_space<vmem>>, %arg39: memref<32x32xbf16, #tpu.memory_space<vmem>>, %arg40: memref<1x32xf32, #tpu.memory_space<vmem>>, %arg41: memref<32x128xbf16, #tpu.memory_space<vmem>>, %arg42: memref<1x128xf32, #tpu.memory_space<vmem>>, %arg43: memref<1x12x128xf32, #tpu.memory_space<vmem>>, %arg44: memref<1x12x32xf32, #tpu.memory_space<vmem>>, %arg45: memref<1x12x32xf32, #tpu.memory_space<vmem>>) attributes {dimension_semantics = [#tpu.dimension_semantics<parallel>], iteration_bounds = array<i64: 2>, scalar_prefetch = 0 : i64, scratch_operands = 0 : i64, tpu.core_type = #tpu.core_type<tc>, window_params = [{transform_indices = @transform_0, window_bounds = array<i64: 1, 4, 16>}, {transform_indices = @transform_1, window_bounds = array<i64: 1, 12, 32>}, {transform_indices = @transform_2, window_bounds = array<i64: 1, 12, 32>}, {pipeline_mode = #tpu.pipeline_mode<synchronous>, transform_indices = @transform_3, window_bounds = array<i64: 12, 4>}, {pipeline_mode = #tpu.pipeline_mode<synchronous>, transform_indices = @transform_4, window_bounds = array<i64: 12, 4>}, {pipeline_mode = #tpu.pipeline_mode<synchronous>, transform_indices = @transform_5, window_bounds = array<i64: 4, 12>}, {pipeline_mode = #tpu.pipeline_mode<synchronous>, transform_indices = @transform_6, window_bounds = array<i64: 16, 32>}, {pipeline_mode = #tpu.pipeline_mode<synchronous>, transform_indices = @transform_7, window_bounds = array<i64: 1, 32>}, {pipeline_mode = #tpu.pipeline_mode<synchronous>, transform_indices = @transform_8, window_bounds = array<i64: 32, 32>}, {pipeline_mode = #tpu.pipeline_mode<synchronous>, transform_indices = @transform_9, window_bounds = array<i64: 1, 32>}, {pipeline_mode = #tpu.pipeline_mode<synchronous>, transform_indices = @transform_10, window_bounds = array<i64: 32, 32>}, {pipeline_mode = #tpu.pipeline_mode<synchronous>, transform_indices = @transform_11, window_bounds = array<i64: 1, 32>}, {pipeline_mode = #tpu.pipeline_mode<synchronous>, transform_indices = @transform_12, window_bounds = array<i64: 32, 32>}, {pipeline_mode = #tpu.pipeline_mode<synchronous>, transform_indices = @transform_13, window_bounds = array<i64: 32, 32>}, {pipeline_mode = #tpu.pipeline_mode<synchronous>, transform_indices = @transform_14, window_bounds = array<i64: 1, 32>}, {pipeline_mode = #tpu.pipeline_mode<synchronous>, transform_indices = @transform_15, window_bounds = array<i64: 32, 32>}, {pipeline_mode = #tpu.pipeline_mode<synchronous>, transform_indices = @transform_16, window_bounds = array<i64: 1, 32>}, {pipeline_mode = #tpu.pipeline_mode<synchronous>, transform_indices = @transform_17, window_bounds = array<i64: 32, 32>}, {pipeline_mode = #tpu.pipeline_mode<synchronous>, transform_indices = @transform_18, window_bounds = array<i64: 1, 32>}, {pipeline_mode = #tpu.pipeline_mode<synchronous>, transform_indices = @transform_19, window_bounds = array<i64: 32, 32>}, {pipeline_mode = #tpu.pipeline_mode<synchronous>, transform_indices = @transform_20, window_bounds = array<i64: 1, 32>}, {pipeline_mode = #tpu.pipeline_mode<synchronous>, transform_indices = @transform_21, window_bounds = array<i64: 32, 32>}, {pipeline_mode = #tpu.pipeline_mode<synchronous>, transform_indices = @transform_22, window_bounds = array<i64: 1, 32>}, {pipeline_mode = #tpu.pipeline_mode<synchronous>, transform_indices = @transform_23, window_bounds = array<i64: 32, 32>}, {pipeline_mode = #tpu.pipeline_mode<synchronous>, transform_indices = @transform_24, window_bounds = array<i64: 1, 32>}, {pipeline_mode = #tpu.pipeline_mode<synchronous>, transform_indices = @transform_25, window_bounds = array<i64: 32, 32>}, {pipeline_mode = #tpu.pipeline_mode<synchronous>, transform_indices = @transform_26, window_bounds = array<i64: 32, 32>}, {pipeline_mode = #tpu.pipeline_mode<synchronous>, transform_indices = @transform_27, window_bounds = array<i64: 32, 32>}, {pipeline_mode = #tpu.pipeline_mode<synchronous>, transform_indices = @transform_28, window_bounds = array<i64: 1, 32>}, {pipeline_mode = #tpu.pipeline_mode<synchronous>, transform_indices = @transform_29, window_bounds = array<i64: 32, 32>}, {pipeline_mode = #tpu.pipeline_mode<synchronous>, transform_indices = @transform_30, window_bounds = array<i64: 1, 32>}, {pipeline_mode = #tpu.pipeline_mode<synchronous>, transform_indices = @transform_31, window_bounds = array<i64: 32, 32>}, {pipeline_mode = #tpu.pipeline_mode<synchronous>, transform_indices = @transform_32, window_bounds = array<i64: 1, 32>}, {pipeline_mode = #tpu.pipeline_mode<synchronous>, transform_indices = @transform_33, window_bounds = array<i64: 32, 128>}, {pipeline_mode = #tpu.pipeline_mode<synchronous>, transform_indices = @transform_34, window_bounds = array<i64: 32, 128>}, {pipeline_mode = #tpu.pipeline_mode<synchronous>, transform_indices = @transform_35, window_bounds = array<i64: 1, 128>}, {pipeline_mode = #tpu.pipeline_mode<synchronous>, transform_indices = @transform_36, window_bounds = array<i64: 32, 32>}, {pipeline_mode = #tpu.pipeline_mode<synchronous>, transform_indices = @transform_37, window_bounds = array<i64: 1, 32>}, {pipeline_mode = #tpu.pipeline_mode<synchronous>, transform_indices = @transform_38, window_bounds = array<i64: 32, 32>}, {pipeline_mode = #tpu.pipeline_mode<synchronous>, transform_indices = @transform_39, window_bounds = array<i64: 1, 32>}, {pipeline_mode = #tpu.pipeline_mode<synchronous>, transform_indices = @transform_40, window_bounds = array<i64: 32, 128>}, {pipeline_mode = #tpu.pipeline_mode<synchronous>, transform_indices = @transform_41, window_bounds = array<i64: 1, 128>}, {transform_indices = @transform_42, window_bounds = array<i64: 1, 12, 128>}, {transform_indices = @transform_43, window_bounds = array<i64: 1, 12, 32>}, {transform_indices = @transform_44, window_bounds = array<i64: 1, 12, 32>}]} {
    %c0 = arith.constant 0 : index
    %c0_0 = arith.constant 0 : index
    %c0_1 = arith.constant 0 : index
    %0 = vector.load %arg1[%c0, %c0_0, %c0_1] : memref<1x4x16xf32, #tpu.memory_space<vmem>>, vector<1x4x16xf32>
    %1 = vector.shape_cast %0 : vector<1x4x16xf32> to vector<4x16xf32>
    %c0_2 = arith.constant 0 : index
    %c0_3 = arith.constant 0 : index
    %c0_4 = arith.constant 0 : index
    %2 = vector.load %arg2[%c0_2, %c0_3, %c0_4] : memref<1x12x32xf32, #tpu.memory_space<vmem>>, vector<1x12x32xf32>
    %3 = vector.shape_cast %2 : vector<1x12x32xf32> to vector<12x32xf32>
    %c0_5 = arith.constant 0 : index
    %c0_6 = arith.constant 0 : index
    %c0_7 = arith.constant 0 : index
    %4 = vector.load %arg3[%c0_5, %c0_6, %c0_7] : memref<1x12x32xf32, #tpu.memory_space<vmem>>, vector<1x12x32xf32>
    %5 = vector.shape_cast %4 : vector<1x12x32xf32> to vector<12x32xf32>
    %c0_8 = arith.constant 0 : index
    %c0_9 = arith.constant 0 : index
    %6 = vector.load %arg4[%c0_8, %c0_9] : memref<12x4xbf16, #tpu.memory_space<vmem>>, vector<12x4xbf16>
    %c0_10 = arith.constant 0 : index
    %c0_11 = arith.constant 0 : index
    %7 = vector.load %arg5[%c0_10, %c0_11] : memref<12x4xbf16, #tpu.memory_space<vmem>>, vector<12x4xbf16>
    %c0_12 = arith.constant 0 : index
    %c0_13 = arith.constant 0 : index
    %8 = vector.load %arg6[%c0_12, %c0_13] : memref<4x12xbf16, #tpu.memory_space<vmem>>, vector<4x12xbf16>
    %c0_14 = arith.constant 0 : index
    %c0_15 = arith.constant 0 : index
    %9 = vector.load %arg7[%c0_14, %c0_15] : memref<16x32xbf16, #tpu.memory_space<vmem>>, vector<16x32xbf16>
    %10 = arith.truncf %1 : vector<4x16xf32> to vector<4x16xbf16>
    %cst = arith.constant dense<0.000000e+00> : vector<4x32xf32>
    %11 = tpu.matmul %10, %9, %cst {dimension_numbers = #tpu.dot_dimension_numbers<[1], [0], [0], [1], [0, 0, 1, 1], [], []>} : vector<4x16xbf16>, vector<16x32xbf16>, vector<4x32xf32> -> vector<4x32xf32>
    %c0_16 = arith.constant 0 : index
    %c0_17 = arith.constant 0 : index
    %12 = vector.load %arg8[%c0_16, %c0_17] : memref<1x32xf32, #tpu.memory_space<vmem>>, vector<1x32xf32>
    %13 = vector.broadcast %12 : vector<1x32xf32> to vector<4x32xf32>
    %14 = arith.addf %11, %13 : vector<4x32xf32>
    %cst_18 = arith.constant 0.000000e+00 : f32
    %15 = vector.broadcast %cst_18 : f32 to vector<4x32xf32>
    %16 = arith.maximumf %14, %15 : vector<4x32xf32>
    %c0_19 = arith.constant 0 : index
    %c0_20 = arith.constant 0 : index
    %17 = vector.load %arg9[%c0_19, %c0_20] : memref<32x32xbf16, #tpu.memory_space<vmem>>, vector<32x32xbf16>
    %18 = arith.truncf %16 : vector<4x32xf32> to vector<4x32xbf16>
    %cst_21 = arith.constant dense<0.000000e+00> : vector<4x32xf32>
    %19 = tpu.matmul %18, %17, %cst_21 {dimension_numbers = #tpu.dot_dimension_numbers<[1], [0], [0], [1], [0, 0, 1, 1], [], []>} : vector<4x32xbf16>, vector<32x32xbf16>, vector<4x32xf32> -> vector<4x32xf32>
    %c0_22 = arith.constant 0 : index
    %c0_23 = arith.constant 0 : index
    %20 = vector.load %arg10[%c0_22, %c0_23] : memref<1x32xf32, #tpu.memory_space<vmem>>, vector<1x32xf32>
    %21 = vector.broadcast %20 : vector<1x32xf32> to vector<4x32xf32>
    %22 = arith.addf %19, %21 : vector<4x32xf32>
    %cst_24 = arith.constant 0.000000e+00 : f32
    %23 = vector.broadcast %cst_24 : f32 to vector<4x32xf32>
    %24 = arith.maximumf %22, %23 : vector<4x32xf32>
    %c0_25 = arith.constant 0 : index
    %c0_26 = arith.constant 0 : index
    %25 = vector.load %arg11[%c0_25, %c0_26] : memref<32x32xbf16, #tpu.memory_space<vmem>>, vector<32x32xbf16>
    %26 = arith.truncf %24 : vector<4x32xf32> to vector<4x32xbf16>
    %cst_27 = arith.constant dense<0.000000e+00> : vector<4x32xf32>
    %27 = tpu.matmul %26, %25, %cst_27 {dimension_numbers = #tpu.dot_dimension_numbers<[1], [0], [0], [1], [0, 0, 1, 1], [], []>} : vector<4x32xbf16>, vector<32x32xbf16>, vector<4x32xf32> -> vector<4x32xf32>
    %c0_28 = arith.constant 0 : index
    %c0_29 = arith.constant 0 : index
    %28 = vector.load %arg12[%c0_28, %c0_29] : memref<1x32xf32, #tpu.memory_space<vmem>>, vector<1x32xf32>
    %29 = vector.broadcast %28 : vector<1x32xf32> to vector<4x32xf32>
    %30 = arith.addf %27, %29 : vector<4x32xf32>
    %31 = arith.truncf %30 : vector<4x32xf32> to vector<4x32xbf16>
    %cst_30 = arith.constant dense<0.000000e+00> : vector<12x32xf32>
    %32 = tpu.matmul %6, %31, %cst_30 {dimension_numbers = #tpu.dot_dimension_numbers<[1], [0], [0], [1], [0, 0, 1, 1], [], []>} : vector<12x4xbf16>, vector<4x32xbf16>, vector<12x32xf32> -> vector<12x32xf32>
    %33 = arith.truncf %30 : vector<4x32xf32> to vector<4x32xbf16>
    %cst_31 = arith.constant dense<0.000000e+00> : vector<12x32xf32>
    %34 = tpu.matmul %7, %33, %cst_31 {dimension_numbers = #tpu.dot_dimension_numbers<[1], [0], [0], [1], [0, 0, 1, 1], [], []>} : vector<12x4xbf16>, vector<4x32xbf16>, vector<12x32xf32> -> vector<12x32xf32>
    %c0_32 = arith.constant 0 : index
    %c0_33 = arith.constant 0 : index
    %35 = vector.load %arg13[%c0_32, %c0_33] : memref<32x32xbf16, #tpu.memory_space<vmem>>, vector<32x32xbf16>
    %36 = arith.truncf %32 : vector<12x32xf32> to vector<12x32xbf16>
    %cst_34 = arith.constant dense<0.000000e+00> : vector<12x32xf32>
    %37 = tpu.matmul %36, %35, %cst_34 {dimension_numbers = #tpu.dot_dimension_numbers<[1], [0], [0], [1], [0, 0, 1, 1], [], []>} : vector<12x32xbf16>, vector<32x32xbf16>, vector<12x32xf32> -> vector<12x32xf32>
    %c0_35 = arith.constant 0 : index
    %c0_36 = arith.constant 0 : index
    %38 = vector.load %arg14[%c0_35, %c0_36] : memref<32x32xbf16, #tpu.memory_space<vmem>>, vector<32x32xbf16>
    %39 = arith.truncf %34 : vector<12x32xf32> to vector<12x32xbf16>
    %cst_37 = arith.constant dense<0.000000e+00> : vector<12x32xf32>
    %40 = tpu.matmul %39, %38, %cst_37 {dimension_numbers = #tpu.dot_dimension_numbers<[1], [0], [0], [1], [0, 0, 1, 1], [], []>} : vector<12x32xbf16>, vector<32x32xbf16>, vector<12x32xf32> -> vector<12x32xf32>
    %41 = arith.addf %37, %40 : vector<12x32xf32>
    %c0_38 = arith.constant 0 : index
    %c0_39 = arith.constant 0 : index
    %42 = vector.load %arg15[%c0_38, %c0_39] : memref<1x32xf32, #tpu.memory_space<vmem>>, vector<1x32xf32>
    %43 = vector.broadcast %42 : vector<1x32xf32> to vector<12x32xf32>
    %44 = arith.addf %41, %43 : vector<12x32xf32>
    %cst_40 = arith.constant 0.000000e+00 : f32
    %45 = vector.broadcast %cst_40 : f32 to vector<12x32xf32>
    %46 = arith.maximumf %44, %45 : vector<12x32xf32>
    %c0_41 = arith.constant 0 : index
    %c0_42 = arith.constant 0 : index
    %47 = vector.load %arg16[%c0_41, %c0_42] : memref<32x32xbf16, #tpu.memory_space<vmem>>, vector<32x32xbf16>
    %48 = arith.truncf %46 : vector<12x32xf32> to vector<12x32xbf16>
    %cst_43 = arith.constant dense<0.000000e+00> : vector<12x32xf32>
    %49 = tpu.matmul %48, %47, %cst_43 {dimension_numbers = #tpu.dot_dimension_numbers<[1], [0], [0], [1], [0, 0, 1, 1], [], []>} : vector<12x32xbf16>, vector<32x32xbf16>, vector<12x32xf32> -> vector<12x32xf32>
    %c0_44 = arith.constant 0 : index
    %c0_45 = arith.constant 0 : index
    %50 = vector.load %arg17[%c0_44, %c0_45] : memref<1x32xf32, #tpu.memory_space<vmem>>, vector<1x32xf32>
    %51 = vector.broadcast %50 : vector<1x32xf32> to vector<12x32xf32>
    %52 = arith.addf %49, %51 : vector<12x32xf32>
    %cst_46 = arith.constant 0.000000e+00 : f32
    %53 = vector.broadcast %cst_46 : f32 to vector<12x32xf32>
    %54 = arith.maximumf %52, %53 : vector<12x32xf32>
    %c0_47 = arith.constant 0 : index
    %c0_48 = arith.constant 0 : index
    %55 = vector.load %arg18[%c0_47, %c0_48] : memref<32x32xbf16, #tpu.memory_space<vmem>>, vector<32x32xbf16>
    %56 = arith.truncf %54 : vector<12x32xf32> to vector<12x32xbf16>
    %cst_49 = arith.constant dense<0.000000e+00> : vector<12x32xf32>
    %57 = tpu.matmul %56, %55, %cst_49 {dimension_numbers = #tpu.dot_dimension_numbers<[1], [0], [0], [1], [0, 0, 1, 1], [], []>} : vector<12x32xbf16>, vector<32x32xbf16>, vector<12x32xf32> -> vector<12x32xf32>
    %c0_50 = arith.constant 0 : index
    %c0_51 = arith.constant 0 : index
    %58 = vector.load %arg19[%c0_50, %c0_51] : memref<1x32xf32, #tpu.memory_space<vmem>>, vector<1x32xf32>
    %59 = vector.broadcast %58 : vector<1x32xf32> to vector<12x32xf32>
    %60 = arith.addf %57, %59 : vector<12x32xf32>
    %61 = arith.truncf %60 : vector<12x32xf32> to vector<12x32xbf16>
    %cst_52 = arith.constant dense<0.000000e+00> : vector<4x32xf32>
    %62 = tpu.matmul %8, %61, %cst_52 {dimension_numbers = #tpu.dot_dimension_numbers<[1], [0], [0], [1], [0, 0, 1, 1], [], []>} : vector<4x12xbf16>, vector<12x32xbf16>, vector<4x32xf32> -> vector<4x32xf32>
    %c0_53 = arith.constant 0 : index
    %c0_54 = arith.constant 0 : index
    %63 = vector.load %arg20[%c0_53, %c0_54] : memref<32x32xbf16, #tpu.memory_space<vmem>>, vector<32x32xbf16>
    %64 = arith.truncf %62 : vector<4x32xf32> to vector<4x32xbf16>
    %cst_55 = arith.constant dense<0.000000e+00> : vector<4x32xf32>
    %65 = tpu.matmul %64, %63, %cst_55 {dimension_numbers = #tpu.dot_dimension_numbers<[1], [0], [0], [1], [0, 0, 1, 1], [], []>} : vector<4x32xbf16>, vector<32x32xbf16>, vector<4x32xf32> -> vector<4x32xf32>
    %c0_56 = arith.constant 0 : index
    %c0_57 = arith.constant 0 : index
    %66 = vector.load %arg21[%c0_56, %c0_57] : memref<1x32xf32, #tpu.memory_space<vmem>>, vector<1x32xf32>
    %67 = vector.broadcast %66 : vector<1x32xf32> to vector<4x32xf32>
    %68 = arith.addf %65, %67 : vector<4x32xf32>
    %cst_58 = arith.constant 0.000000e+00 : f32
    %69 = vector.broadcast %cst_58 : f32 to vector<4x32xf32>
    %70 = arith.maximumf %68, %69 : vector<4x32xf32>
    %c0_59 = arith.constant 0 : index
    %c0_60 = arith.constant 0 : index
    %71 = vector.load %arg22[%c0_59, %c0_60] : memref<32x32xbf16, #tpu.memory_space<vmem>>, vector<32x32xbf16>
    %72 = arith.truncf %70 : vector<4x32xf32> to vector<4x32xbf16>
    %cst_61 = arith.constant dense<0.000000e+00> : vector<4x32xf32>
    %73 = tpu.matmul %72, %71, %cst_61 {dimension_numbers = #tpu.dot_dimension_numbers<[1], [0], [0], [1], [0, 0, 1, 1], [], []>} : vector<4x32xbf16>, vector<32x32xbf16>, vector<4x32xf32> -> vector<4x32xf32>
    %c0_62 = arith.constant 0 : index
    %c0_63 = arith.constant 0 : index
    %74 = vector.load %arg23[%c0_62, %c0_63] : memref<1x32xf32, #tpu.memory_space<vmem>>, vector<1x32xf32>
    %75 = vector.broadcast %74 : vector<1x32xf32> to vector<4x32xf32>
    %76 = arith.addf %73, %75 : vector<4x32xf32>
    %cst_64 = arith.constant 0.000000e+00 : f32
    %77 = vector.broadcast %cst_64 : f32 to vector<4x32xf32>
    %78 = arith.maximumf %76, %77 : vector<4x32xf32>
    %c0_65 = arith.constant 0 : index
    %c0_66 = arith.constant 0 : index
    %79 = vector.load %arg24[%c0_65, %c0_66] : memref<32x32xbf16, #tpu.memory_space<vmem>>, vector<32x32xbf16>
    %80 = arith.truncf %78 : vector<4x32xf32> to vector<4x32xbf16>
    %cst_67 = arith.constant dense<0.000000e+00> : vector<4x32xf32>
    %81 = tpu.matmul %80, %79, %cst_67 {dimension_numbers = #tpu.dot_dimension_numbers<[1], [0], [0], [1], [0, 0, 1, 1], [], []>} : vector<4x32xbf16>, vector<32x32xbf16>, vector<4x32xf32> -> vector<4x32xf32>
    %c0_68 = arith.constant 0 : index
    %c0_69 = arith.constant 0 : index
    %82 = vector.load %arg25[%c0_68, %c0_69] : memref<1x32xf32, #tpu.memory_space<vmem>>, vector<1x32xf32>
    %83 = vector.broadcast %82 : vector<1x32xf32> to vector<4x32xf32>
    %84 = arith.addf %81, %83 : vector<4x32xf32>
    %85 = arith.truncf %84 : vector<4x32xf32> to vector<4x32xbf16>
    %cst_70 = arith.constant dense<0.000000e+00> : vector<12x32xf32>
    %86 = tpu.matmul %6, %85, %cst_70 {dimension_numbers = #tpu.dot_dimension_numbers<[1], [0], [0], [1], [0, 0, 1, 1], [], []>} : vector<12x4xbf16>, vector<4x32xbf16>, vector<12x32xf32> -> vector<12x32xf32>
    %87 = arith.truncf %84 : vector<4x32xf32> to vector<4x32xbf16>
    %cst_71 = arith.constant dense<0.000000e+00> : vector<12x32xf32>
    %88 = tpu.matmul %7, %87, %cst_71 {dimension_numbers = #tpu.dot_dimension_numbers<[1], [0], [0], [1], [0, 0, 1, 1], [], []>} : vector<12x4xbf16>, vector<4x32xbf16>, vector<12x32xf32> -> vector<12x32xf32>
    %c0_72 = arith.constant 0 : index
    %c0_73 = arith.constant 0 : index
    %89 = vector.load %arg26[%c0_72, %c0_73] : memref<32x32xbf16, #tpu.memory_space<vmem>>, vector<32x32xbf16>
    %90 = arith.truncf %86 : vector<12x32xf32> to vector<12x32xbf16>
    %cst_74 = arith.constant dense<0.000000e+00> : vector<12x32xf32>
    %91 = tpu.matmul %90, %89, %cst_74 {dimension_numbers = #tpu.dot_dimension_numbers<[1], [0], [0], [1], [0, 0, 1, 1], [], []>} : vector<12x32xbf16>, vector<32x32xbf16>, vector<12x32xf32> -> vector<12x32xf32>
    %c0_75 = arith.constant 0 : index
    %c0_76 = arith.constant 0 : index
    %92 = vector.load %arg27[%c0_75, %c0_76] : memref<32x32xbf16, #tpu.memory_space<vmem>>, vector<32x32xbf16>
    %93 = arith.truncf %88 : vector<12x32xf32> to vector<12x32xbf16>
    %cst_77 = arith.constant dense<0.000000e+00> : vector<12x32xf32>
    %94 = tpu.matmul %93, %92, %cst_77 {dimension_numbers = #tpu.dot_dimension_numbers<[1], [0], [0], [1], [0, 0, 1, 1], [], []>} : vector<12x32xbf16>, vector<32x32xbf16>, vector<12x32xf32> -> vector<12x32xf32>
    %95 = arith.addf %91, %94 : vector<12x32xf32>
    %c0_78 = arith.constant 0 : index
    %c0_79 = arith.constant 0 : index
    %96 = vector.load %arg28[%c0_78, %c0_79] : memref<32x32xbf16, #tpu.memory_space<vmem>>, vector<32x32xbf16>
    %97 = arith.truncf %60 : vector<12x32xf32> to vector<12x32xbf16>
    %cst_80 = arith.constant dense<0.000000e+00> : vector<12x32xf32>
    %98 = tpu.matmul %97, %96, %cst_80 {dimension_numbers = #tpu.dot_dimension_numbers<[1], [0], [0], [1], [0, 0, 1, 1], [], []>} : vector<12x32xbf16>, vector<32x32xbf16>, vector<12x32xf32> -> vector<12x32xf32>
    %99 = arith.addf %95, %98 : vector<12x32xf32>
    %c0_81 = arith.constant 0 : index
    %c0_82 = arith.constant 0 : index
    %100 = vector.load %arg29[%c0_81, %c0_82] : memref<1x32xf32, #tpu.memory_space<vmem>>, vector<1x32xf32>
    %101 = vector.broadcast %100 : vector<1x32xf32> to vector<12x32xf32>
    %102 = arith.addf %99, %101 : vector<12x32xf32>
    %cst_83 = arith.constant 0.000000e+00 : f32
    %103 = vector.broadcast %cst_83 : f32 to vector<12x32xf32>
    %104 = arith.maximumf %102, %103 : vector<12x32xf32>
    %c0_84 = arith.constant 0 : index
    %c0_85 = arith.constant 0 : index
    %105 = vector.load %arg30[%c0_84, %c0_85] : memref<32x32xbf16, #tpu.memory_space<vmem>>, vector<32x32xbf16>
    %106 = arith.truncf %104 : vector<12x32xf32> to vector<12x32xbf16>
    %cst_86 = arith.constant dense<0.000000e+00> : vector<12x32xf32>
    %107 = tpu.matmul %106, %105, %cst_86 {dimension_numbers = #tpu.dot_dimension_numbers<[1], [0], [0], [1], [0, 0, 1, 1], [], []>} : vector<12x32xbf16>, vector<32x32xbf16>, vector<12x32xf32> -> vector<12x32xf32>
    %c0_87 = arith.constant 0 : index
    %c0_88 = arith.constant 0 : index
    %108 = vector.load %arg31[%c0_87, %c0_88] : memref<1x32xf32, #tpu.memory_space<vmem>>, vector<1x32xf32>
    %109 = vector.broadcast %108 : vector<1x32xf32> to vector<12x32xf32>
    %110 = arith.addf %107, %109 : vector<12x32xf32>
    %cst_89 = arith.constant 0.000000e+00 : f32
    %111 = vector.broadcast %cst_89 : f32 to vector<12x32xf32>
    %112 = arith.maximumf %110, %111 : vector<12x32xf32>
    %c0_90 = arith.constant 0 : index
    %c0_91 = arith.constant 0 : index
    %113 = vector.load %arg32[%c0_90, %c0_91] : memref<32x32xbf16, #tpu.memory_space<vmem>>, vector<32x32xbf16>
    %114 = arith.truncf %112 : vector<12x32xf32> to vector<12x32xbf16>
    %cst_92 = arith.constant dense<0.000000e+00> : vector<12x32xf32>
    %115 = tpu.matmul %114, %113, %cst_92 {dimension_numbers = #tpu.dot_dimension_numbers<[1], [0], [0], [1], [0, 0, 1, 1], [], []>} : vector<12x32xbf16>, vector<32x32xbf16>, vector<12x32xf32> -> vector<12x32xf32>
    %c0_93 = arith.constant 0 : index
    %c0_94 = arith.constant 0 : index
    %116 = vector.load %arg33[%c0_93, %c0_94] : memref<1x32xf32, #tpu.memory_space<vmem>>, vector<1x32xf32>
    %117 = vector.broadcast %116 : vector<1x32xf32> to vector<12x32xf32>
    %118 = arith.addf %115, %117 : vector<12x32xf32>
    %c0_95 = arith.constant 0 : index
    %c0_96 = arith.constant 0 : index
    %119 = vector.load %arg34[%c0_95, %c0_96] : memref<32x128xbf16, #tpu.memory_space<vmem>>, vector<32x128xbf16>
    %120 = arith.truncf %118 : vector<12x32xf32> to vector<12x32xbf16>
    %cst_97 = arith.constant dense<0.000000e+00> : vector<12x128xf32>
    %121 = tpu.matmul %120, %119, %cst_97 {dimension_numbers = #tpu.dot_dimension_numbers<[1], [0], [0], [1], [0, 0, 1, 1], [], []>} : vector<12x32xbf16>, vector<32x128xbf16>, vector<12x128xf32> -> vector<12x128xf32>
    %c0_98 = arith.constant 0 : index
    %c0_99 = arith.constant 0 : index
    %122 = vector.load %arg35[%c0_98, %c0_99] : memref<32x128xbf16, #tpu.memory_space<vmem>>, vector<32x128xbf16>
    %123 = arith.truncf %3 : vector<12x32xf32> to vector<12x32xbf16>
    %cst_100 = arith.constant dense<0.000000e+00> : vector<12x128xf32>
    %124 = tpu.matmul %123, %122, %cst_100 {dimension_numbers = #tpu.dot_dimension_numbers<[1], [0], [0], [1], [0, 0, 1, 1], [], []>} : vector<12x32xbf16>, vector<32x128xbf16>, vector<12x128xf32> -> vector<12x128xf32>
    %125 = arith.addf %121, %124 : vector<12x128xf32>
    %c0_101 = arith.constant 0 : index
    %c0_102 = arith.constant 0 : index
    %126 = vector.load %arg36[%c0_101, %c0_102] : memref<1x128xf32, #tpu.memory_space<vmem>>, vector<1x128xf32>
    %127 = vector.broadcast %126 : vector<1x128xf32> to vector<12x128xf32>
    %128 = arith.addf %125, %127 : vector<12x128xf32>
    %129 = vector.extract_strided_slice %128 {offsets = [0, 0], sizes = [12, 32], strides = [1, 1]} : vector<12x128xf32> to vector<12x32xf32>
    %cst_103 = arith.constant 0.000000e+00 : f32
    %130 = vector.broadcast %cst_103 : f32 to vector<12x32xf32>
    %131 = arith.subf %130, %129 : vector<12x32xf32>
    %132 = math.exp %131 : vector<12x32xf32>
    %cst_104 = arith.constant 1.000000e+00 : f32
    %133 = vector.broadcast %cst_104 : f32 to vector<12x32xf32>
    %134 = arith.addf %133, %132 : vector<12x32xf32>
    %135 = tpu.reciprocal %134 {approx = true} : vector<12x32xf32> -> vector<12x32xf32>
    %136 = vector.extract_strided_slice %128 {offsets = [0, 32], sizes = [12, 32], strides = [1, 1]} : vector<12x128xf32> to vector<12x32xf32>
    %cst_105 = arith.constant 0.000000e+00 : f32
    %137 = vector.broadcast %cst_105 : f32 to vector<12x32xf32>
    %138 = arith.subf %137, %136 : vector<12x32xf32>
    %139 = math.exp %138 : vector<12x32xf32>
    %cst_106 = arith.constant 1.000000e+00 : f32
    %140 = vector.broadcast %cst_106 : f32 to vector<12x32xf32>
    %141 = arith.addf %140, %139 : vector<12x32xf32>
    %142 = tpu.reciprocal %141 {approx = true} : vector<12x32xf32> -> vector<12x32xf32>
    %143 = vector.extract_strided_slice %128 {offsets = [0, 64], sizes = [12, 32], strides = [1, 1]} : vector<12x128xf32> to vector<12x32xf32>
    %144 = math.tanh %143 : vector<12x32xf32>
    %145 = vector.extract_strided_slice %128 {offsets = [0, 96], sizes = [12, 32], strides = [1, 1]} : vector<12x128xf32> to vector<12x32xf32>
    %cst_107 = arith.constant 0.000000e+00 : f32
    %146 = vector.broadcast %cst_107 : f32 to vector<12x32xf32>
    %147 = arith.subf %146, %145 : vector<12x32xf32>
    %148 = math.exp %147 : vector<12x32xf32>
    %cst_108 = arith.constant 1.000000e+00 : f32
    %149 = vector.broadcast %cst_108 : f32 to vector<12x32xf32>
    %150 = arith.addf %149, %148 : vector<12x32xf32>
    %151 = tpu.reciprocal %150 {approx = true} : vector<12x32xf32> -> vector<12x32xf32>
    %152 = arith.mulf %142, %5 : vector<12x32xf32>
    %153 = arith.mulf %135, %144 : vector<12x32xf32>
    %154 = arith.addf %152, %153 : vector<12x32xf32>
    %155 = math.tanh %154 : vector<12x32xf32>
    %156 = arith.mulf %151, %155 : vector<12x32xf32>
    %c0_109 = arith.constant 0 : index
    %c0_110 = arith.constant 0 : index
    %c0_111 = arith.constant 0 : index
    %157 = vector.load %arg45[%c0_109, %c0_110, %c0_111] : memref<1x12x32xf32, #tpu.memory_space<vmem>>, vector<1x12x32xf32>
    %158 = vector.shape_cast %157 : vector<1x12x32xf32> to vector<12x32xf32>
    %159 = vector.shape_cast %154 : vector<12x32xf32> to vector<1x12x32xf32>
    tpu.vector_store %arg45[%c0_109, %c0_110, %c0_111], %159 {strides = array<i32>} : memref<1x12x32xf32, #tpu.memory_space<vmem>>, vector<1x12x32xf32>,
    %c0_112 = arith.constant 0 : index
    %c0_113 = arith.constant 0 : index
    %c0_114 = arith.constant 0 : index
    %160 = vector.load %arg44[%c0_112, %c0_113, %c0_114] : memref<1x12x32xf32, #tpu.memory_space<vmem>>, vector<1x12x32xf32>
    %161 = vector.shape_cast %160 : vector<1x12x32xf32> to vector<12x32xf32>
    %162 = vector.shape_cast %156 : vector<12x32xf32> to vector<1x12x32xf32>
    tpu.vector_store %arg44[%c0_112, %c0_113, %c0_114], %162 {strides = array<i32>} : memref<1x12x32xf32, #tpu.memory_space<vmem>>, vector<1x12x32xf32>,
    %c0_115 = arith.constant 0 : index
    %c0_116 = arith.constant 0 : index
    %163 = vector.load %arg37[%c0_115, %c0_116] : memref<32x32xbf16, #tpu.memory_space<vmem>>, vector<32x32xbf16>
    %164 = arith.truncf %156 : vector<12x32xf32> to vector<12x32xbf16>
    %cst_117 = arith.constant dense<0.000000e+00> : vector<12x32xf32>
    %165 = tpu.matmul %164, %163, %cst_117 {dimension_numbers = #tpu.dot_dimension_numbers<[1], [0], [0], [1], [0, 0, 1, 1], [], []>} : vector<12x32xbf16>, vector<32x32xbf16>, vector<12x32xf32> -> vector<12x32xf32>
    %c0_118 = arith.constant 0 : index
    %c0_119 = arith.constant 0 : index
    %166 = vector.load %arg38[%c0_118, %c0_119] : memref<1x32xf32, #tpu.memory_space<vmem>>, vector<1x32xf32>
    %167 = vector.broadcast %166 : vector<1x32xf32> to vector<12x32xf32>
    %168 = arith.addf %165, %167 : vector<12x32xf32>
    %cst_120 = arith.constant 0.000000e+00 : f32
    %169 = vector.broadcast %cst_120 : f32 to vector<12x32xf32>
    %170 = arith.maximumf %168, %169 : vector<12x32xf32>
    %c0_121 = arith.constant 0 : index
    %c0_122 = arith.constant 0 : index
    %171 = vector.load %arg39[%c0_121, %c0_122] : memref<32x32xbf16, #tpu.memory_space<vmem>>, vector<32x32xbf16>
    %172 = arith.truncf %170 : vector<12x32xf32> to vector<12x32xbf16>
    %cst_123 = arith.constant dense<0.000000e+00> : vector<12x32xf32>
    %173 = tpu.matmul %172, %171, %cst_123 {dimension_numbers = #tpu.dot_dimension_numbers<[1], [0], [0], [1], [0, 0, 1, 1], [], []>} : vector<12x32xbf16>, vector<32x32xbf16>, vector<12x32xf32> -> vector<12x32xf32>
    %c0_124 = arith.constant 0 : index
    %c0_125 = arith.constant 0 : index
    %174 = vector.load %arg40[%c0_124, %c0_125] : memref<1x32xf32, #tpu.memory_space<vmem>>, vector<1x32xf32>
    %175 = vector.broadcast %174 : vector<1x32xf32> to vector<12x32xf32>
    %176 = arith.addf %173, %175 : vector<12x32xf32>
    %cst_126 = arith.constant 0.000000e+00 : f32
    %177 = vector.broadcast %cst_126 : f32 to vector<12x32xf32>
    %178 = arith.maximumf %176, %177 : vector<12x32xf32>
    %c0_127 = arith.constant 0 : index
    %c0_128 = arith.constant 0 : index
    %179 = vector.load %arg41[%c0_127, %c0_128] : memref<32x128xbf16, #tpu.memory_space<vmem>>, vector<32x128xbf16>
    %180 = arith.truncf %178 : vector<12x32xf32> to vector<12x32xbf16>
    %cst_129 = arith.constant dense<0.000000e+00> : vector<12x128xf32>
    %181 = tpu.matmul %180, %179, %cst_129 {dimension_numbers = #tpu.dot_dimension_numbers<[1], [0], [0], [1], [0, 0, 1, 1], [], []>} : vector<12x32xbf16>, vector<32x128xbf16>, vector<12x128xf32> -> vector<12x128xf32>
    %c0_130 = arith.constant 0 : index
    %c0_131 = arith.constant 0 : index
    %182 = vector.load %arg42[%c0_130, %c0_131] : memref<1x128xf32, #tpu.memory_space<vmem>>, vector<1x128xf32>
    %183 = vector.broadcast %182 : vector<1x128xf32> to vector<12x128xf32>
    %184 = arith.addf %181, %183 : vector<12x128xf32>
    %c0_132 = arith.constant 0 : index
    %c0_133 = arith.constant 0 : index
    %c0_134 = arith.constant 0 : index
    %185 = vector.load %arg43[%c0_132, %c0_133, %c0_134] : memref<1x12x128xf32, #tpu.memory_space<vmem>>, vector<1x12x128xf32>
    %186 = vector.shape_cast %185 : vector<1x12x128xf32> to vector<12x128xf32>
    %187 = vector.shape_cast %184 : vector<12x128xf32> to vector<1x12x128xf32>
    tpu.vector_store %arg43[%c0_132, %c0_133, %c0_134], %187 {strides = array<i32>} : memref<1x12x128xf32, #tpu.memory_space<vmem>>, vector<1x12x128xf32>,
    return
  }
  func.func @transform_0(%arg0: i32) -> (i32, i32, i32) {
    %c0_i32 = arith.constant 0 : i32
    %c0_i32_0 = arith.constant 0 : i32
    %c0_i32_1 = arith.constant 0 : i32
    return %arg0, %c0_i32, %c0_i32_0 : i32, i32, i32
  }
  func.func @transform_1(%arg0: i32) -> (i32, i32, i32) {
    %c0_i32 = arith.constant 0 : i32
    %c0_i32_0 = arith.constant 0 : i32
    %c0_i32_1 = arith.constant 0 : i32
    return %arg0, %c0_i32, %c0_i32_0 : i32, i32, i32
  }
  func.func @transform_2(%arg0: i32) -> (i32, i32, i32) {
    %c0_i32 = arith.constant 0 : i32
    %c0_i32_0 = arith.constant 0 : i32
    %c0_i32_1 = arith.constant 0 : i32
    return %arg0, %c0_i32, %c0_i32_0 : i32, i32, i32
  }
  func.func @transform_3(%arg0: i32) -> (i32, i32) {
    %c0_i32 = arith.constant 0 : i32
    %c0_i32_0 = arith.constant 0 : i32
    %c0_i32_1 = arith.constant 0 : i32
    return %c0_i32, %c0_i32_0 : i32, i32
  }
  func.func @transform_4(%arg0: i32) -> (i32, i32) {
    %c0_i32 = arith.constant 0 : i32
    %c0_i32_0 = arith.constant 0 : i32
    %c0_i32_1 = arith.constant 0 : i32
    return %c0_i32, %c0_i32_0 : i32, i32
  }
  func.func @transform_5(%arg0: i32) -> (i32, i32) {
    %c0_i32 = arith.constant 0 : i32
    %c0_i32_0 = arith.constant 0 : i32
    %c0_i32_1 = arith.constant 0 : i32
    return %c0_i32, %c0_i32_0 : i32, i32
  }
  func.func @transform_6(%arg0: i32) -> (i32, i32) {
    %c0_i32 = arith.constant 0 : i32
    %c0_i32_0 = arith.constant 0 : i32
    %c0_i32_1 = arith.constant 0 : i32
    return %c0_i32, %c0_i32_0 : i32, i32
  }
  func.func @transform_7(%arg0: i32) -> (i32, i32) {
    %c0_i32 = arith.constant 0 : i32
    %c0_i32_0 = arith.constant 0 : i32
    %c0_i32_1 = arith.constant 0 : i32
    return %c0_i32, %c0_i32_0 : i32, i32
  }
  func.func @transform_8(%arg0: i32) -> (i32, i32) {
    %c0_i32 = arith.constant 0 : i32
    %c0_i32_0 = arith.constant 0 : i32
    %c0_i32_1 = arith.constant 0 : i32
    return %c0_i32, %c0_i32_0 : i32, i32
  }
  func.func @transform_9(%arg0: i32) -> (i32, i32) {
    %c0_i32 = arith.constant 0 : i32
    %c0_i32_0 = arith.constant 0 : i32
    %c0_i32_1 = arith.constant 0 : i32
    return %c0_i32, %c0_i32_0 : i32, i32
  }
  func.func @transform_10(%arg0: i32) -> (i32, i32) {
    %c0_i32 = arith.constant 0 : i32
    %c0_i32_0 = arith.constant 0 : i32
    %c0_i32_1 = arith.constant 0 : i32
    return %c0_i32, %c0_i32_0 : i32, i32
  }
  func.func @transform_11(%arg0: i32) -> (i32, i32) {
    %c0_i32 = arith.constant 0 : i32
    %c0_i32_0 = arith.constant 0 : i32
    %c0_i32_1 = arith.constant 0 : i32
    return %c0_i32, %c0_i32_0 : i32, i32
  }
  func.func @transform_12(%arg0: i32) -> (i32, i32) {
    %c0_i32 = arith.constant 0 : i32
    %c0_i32_0 = arith.constant 0 : i32
    %c0_i32_1 = arith.constant 0 : i32
    return %c0_i32, %c0_i32_0 : i32, i32
  }
  func.func @transform_13(%arg0: i32) -> (i32, i32) {
    %c0_i32 = arith.constant 0 : i32
    %c0_i32_0 = arith.constant 0 : i32
    %c0_i32_1 = arith.constant 0 : i32
    return %c0_i32, %c0_i32_0 : i32, i32
  }
  func.func @transform_14(%arg0: i32) -> (i32, i32) {
    %c0_i32 = arith.constant 0 : i32
    %c0_i32_0 = arith.constant 0 : i32
    %c0_i32_1 = arith.constant 0 : i32
    return %c0_i32, %c0_i32_0 : i32, i32
  }
  func.func @transform_15(%arg0: i32) -> (i32, i32) {
    %c0_i32 = arith.constant 0 : i32
    %c0_i32_0 = arith.constant 0 : i32
    %c0_i32_1 = arith.constant 0 : i32
    return %c0_i32, %c0_i32_0 : i32, i32
  }
  func.func @transform_16(%arg0: i32) -> (i32, i32) {
    %c0_i32 = arith.constant 0 : i32
    %c0_i32_0 = arith.constant 0 : i32
    %c0_i32_1 = arith.constant 0 : i32
    return %c0_i32, %c0_i32_0 : i32, i32
  }
  func.func @transform_17(%arg0: i32) -> (i32, i32) {
    %c0_i32 = arith.constant 0 : i32
    %c0_i32_0 = arith.constant 0 : i32
    %c0_i32_1 = arith.constant 0 : i32
    return %c0_i32, %c0_i32_0 : i32, i32
  }
  func.func @transform_18(%arg0: i32) -> (i32, i32) {
    %c0_i32 = arith.constant 0 : i32
    %c0_i32_0 = arith.constant 0 : i32
    %c0_i32_1 = arith.constant 0 : i32
    return %c0_i32, %c0_i32_0 : i32, i32
  }
  func.func @transform_19(%arg0: i32) -> (i32, i32) {
    %c0_i32 = arith.constant 0 : i32
    %c0_i32_0 = arith.constant 0 : i32
    %c0_i32_1 = arith.constant 0 : i32
    return %c0_i32, %c0_i32_0 : i32, i32
  }
  func.func @transform_20(%arg0: i32) -> (i32, i32) {
    %c0_i32 = arith.constant 0 : i32
    %c0_i32_0 = arith.constant 0 : i32
    %c0_i32_1 = arith.constant 0 : i32
    return %c0_i32, %c0_i32_0 : i32, i32
  }
  func.func @transform_21(%arg0: i32) -> (i32, i32) {
    %c0_i32 = arith.constant 0 : i32
    %c0_i32_0 = arith.constant 0 : i32
    %c0_i32_1 = arith.constant 0 : i32
    return %c0_i32, %c0_i32_0 : i32, i32
  }
  func.func @transform_22(%arg0: i32) -> (i32, i32) {
    %c0_i32 = arith.constant 0 : i32
    %c0_i32_0 = arith.constant 0 : i32
    %c0_i32_1 = arith.constant 0 : i32
    return %c0_i32, %c0_i32_0 : i32, i32
  }
  func.func @transform_23(%arg0: i32) -> (i32, i32) {
    %c0_i32 = arith.constant 0 : i32
    %c0_i32_0 = arith.constant 0 : i32
    %c0_i32_1 = arith.constant 0 : i32
    return %c0_i32, %c0_i32_0 : i32, i32
  }
  func.func @transform_24(%arg0: i32) -> (i32, i32) {
    %c0_i32 = arith.constant 0 : i32
    %c0_i32_0 = arith.constant 0 : i32
    %c0_i32_1 = arith.constant 0 : i32
    return %c0_i32, %c0_i32_0 : i32, i32
  }
  func.func @transform_25(%arg0: i32) -> (i32, i32) {
    %c0_i32 = arith.constant 0 : i32
    %c0_i32_0 = arith.constant 0 : i32
    %c0_i32_1 = arith.constant 0 : i32
    return %c0_i32, %c0_i32_0 : i32, i32
  }
  func.func @transform_26(%arg0: i32) -> (i32, i32) {
    %c0_i32 = arith.constant 0 : i32
    %c0_i32_0 = arith.constant 0 : i32
    %c0_i32_1 = arith.constant 0 : i32
    return %c0_i32, %c0_i32_0 : i32, i32
  }
  func.func @transform_27(%arg0: i32) -> (i32, i32) {
    %c0_i32 = arith.constant 0 : i32
    %c0_i32_0 = arith.constant 0 : i32
    %c0_i32_1 = arith.constant 0 : i32
    return %c0_i32, %c0_i32_0 : i32, i32
  }
  func.func @transform_28(%arg0: i32) -> (i32, i32) {
    %c0_i32 = arith.constant 0 : i32
    %c0_i32_0 = arith.constant 0 : i32
    %c0_i32_1 = arith.constant 0 : i32
    return %c0_i32, %c0_i32_0 : i32, i32
  }
  func.func @transform_29(%arg0: i32) -> (i32, i32) {
    %c0_i32 = arith.constant 0 : i32
    %c0_i32_0 = arith.constant 0 : i32
    %c0_i32_1 = arith.constant 0 : i32
    return %c0_i32, %c0_i32_0 : i32, i32
  }
  func.func @transform_30(%arg0: i32) -> (i32, i32) {
    %c0_i32 = arith.constant 0 : i32
    %c0_i32_0 = arith.constant 0 : i32
    %c0_i32_1 = arith.constant 0 : i32
    return %c0_i32, %c0_i32_0 : i32, i32
  }
  func.func @transform_31(%arg0: i32) -> (i32, i32) {
    %c0_i32 = arith.constant 0 : i32
    %c0_i32_0 = arith.constant 0 : i32
    %c0_i32_1 = arith.constant 0 : i32
    return %c0_i32, %c0_i32_0 : i32, i32
  }
  func.func @transform_32(%arg0: i32) -> (i32, i32) {
    %c0_i32 = arith.constant 0 : i32
    %c0_i32_0 = arith.constant 0 : i32
    %c0_i32_1 = arith.constant 0 : i32
    return %c0_i32, %c0_i32_0 : i32, i32
  }
  func.func @transform_33(%arg0: i32) -> (i32, i32) {
    %c0_i32 = arith.constant 0 : i32
    %c0_i32_0 = arith.constant 0 : i32
    %c0_i32_1 = arith.constant 0 : i32
    return %c0_i32, %c0_i32_0 : i32, i32
  }
  func.func @transform_34(%arg0: i32) -> (i32, i32) {
    %c0_i32 = arith.constant 0 : i32
    %c0_i32_0 = arith.constant 0 : i32
    %c0_i32_1 = arith.constant 0 : i32
    return %c0_i32, %c0_i32_0 : i32, i32
  }
  func.func @transform_35(%arg0: i32) -> (i32, i32) {
    %c0_i32 = arith.constant 0 : i32
    %c0_i32_0 = arith.constant 0 : i32
    %c0_i32_1 = arith.constant 0 : i32
    return %c0_i32, %c0_i32_0 : i32, i32
  }
  func.func @transform_36(%arg0: i32) -> (i32, i32) {
    %c0_i32 = arith.constant 0 : i32
    %c0_i32_0 = arith.constant 0 : i32
    %c0_i32_1 = arith.constant 0 : i32
    return %c0_i32, %c0_i32_0 : i32, i32
  }
  func.func @transform_37(%arg0: i32) -> (i32, i32) {
    %c0_i32 = arith.constant 0 : i32
    %c0_i32_0 = arith.constant 0 : i32
    %c0_i32_1 = arith.constant 0 : i32
    return %c0_i32, %c0_i32_0 : i32, i32
  }
  func.func @transform_38(%arg0: i32) -> (i32, i32) {
    %c0_i32 = arith.constant 0 : i32
    %c0_i32_0 = arith.constant 0 : i32
    %c0_i32_1 = arith.constant 0 : i32
    return %c0_i32, %c0_i32_0 : i32, i32
  }
  func.func @transform_39(%arg0: i32) -> (i32, i32) {
    %c0_i32 = arith.constant 0 : i32
    %c0_i32_0 = arith.constant 0 : i32
    %c0_i32_1 = arith.constant 0 : i32
    return %c0_i32, %c0_i32_0 : i32, i32
  }
  func.func @transform_40(%arg0: i32) -> (i32, i32) {
    %c0_i32 = arith.constant 0 : i32
    %c0_i32_0 = arith.constant 0 : i32
    %c0_i32_1 = arith.constant 0 : i32
    return %c0_i32, %c0_i32_0 : i32, i32
  }
  func.func @transform_41(%arg0: i32) -> (i32, i32) {
    %c0_i32 = arith.constant 0 : i32
    %c0_i32_0 = arith.constant 0 : i32
    %c0_i32_1 = arith.constant 0 : i32
    return %c0_i32, %c0_i32_0 : i32, i32
  }
  func.func @transform_42(%arg0: i32) -> (i32, i32, i32) {
    %c0_i32 = arith.constant 0 : i32
    %c0_i32_0 = arith.constant 0 : i32
    %c0_i32_1 = arith.constant 0 : i32
    return %arg0, %c0_i32, %c0_i32_0 : i32, i32, i32
  }
  func.func @transform_43(%arg0: i32) -> (i32, i32, i32) {
    %c0_i32 = arith.constant 0 : i32
    %c0_i32_0 = arith.constant 0 : i32
    %c0_i32_1 = arith.constant 0 : i32
    return %arg0, %c0_i32, %c0_i32_0 : i32, i32, i32
  }
  func.func @transform_44(%arg0: i32) -> (i32, i32, i32) {
    %c0_i32 = arith.constant 0 : i32
    %c0_i32_0 = arith.constant 0 : i32
    %c0_i32_1 = arith.constant 0 : i32
    return %arg0, %c0_i32, %c0_i32_0 : i32, i32, i32
  }
}

</mosaic_0001>

<llo_original>
// kernel: _lambda_.1
$region0: #{_lambda_.1}
  #allocation0 [shape = 'u32[]', space=smem, size = 0x4, offset = 0x4, fixed_abs, tag = 'smem constant byte address 0x4 - core index']
  #allocation1 [shape = 'u32[144,128]{1,0:T(1,128)}', space=vmem, size = 0x12000, scoped, tag = 'internal scratch']
  %s0 = inlined_call_operand.smem [shape: u32[45], index: -1, kind: input, shape index: {}]
  %s1 = sld [smem:[%s0]]
  %s2 = scalar_lea.smem %s0, 1
  %s3 = sld [smem:[%s2]]
  %s4 = scalar_lea.smem %s0, 2
  %s5 = sld [smem:[%s4]]
  %s6 = scalar_lea.smem %s0, 3
  %s7 = sld [smem:[%s6]]
  %s8 = scalar_lea.smem %s0, 4
  %s9 = sld [smem:[%s8]]
  %s10 = scalar_lea.smem %s0, 5
  %s11 = sld [smem:[%s10]]
  %s12 = scalar_lea.smem %s0, 6
  %s13 = sld [smem:[%s12]]
  %s14 = scalar_lea.smem %s0, 7
  %s15 = sld [smem:[%s14]]
  %s16 = scalar_lea.smem %s0, 8
  %s17 = sld [smem:[%s16]]
  %s18 = scalar_lea.smem %s0, 9
  %s19 = sld [smem:[%s18]]
  %s20 = scalar_lea.smem %s0, 10
  %s21 = sld [smem:[%s20]]
  %s22 = scalar_lea.smem %s0, 11
  %s23 = sld [smem:[%s22]]
  %s24 = scalar_lea.smem %s0, 12
  %s25 = sld [smem:[%s24]]
  %s26 = scalar_lea.smem %s0, 13
  %s27 = sld [smem:[%s26]]
  %s28 = scalar_lea.smem %s0, 14
  %s29 = sld [smem:[%s28]]
  %s30 = scalar_lea.smem %s0, 15
  %s31 = sld [smem:[%s30]]
  %s32 = scalar_lea.smem %s0, 16
  %s33 = sld [smem:[%s32]]
  %s34 = scalar_lea.smem %s0, 17
  %s35 = sld [smem:[%s34]]
  %s36 = scalar_lea.smem %s0, 18
  %s37 = sld [smem:[%s36]]
  %s38 = scalar_lea.smem %s0, 19
  %s39 = sld [smem:[%s38]]
  %s40 = scalar_lea.smem %s0, 20
  %s41 = sld [smem:[%s40]]
  %s42 = scalar_lea.smem %s0, 21
  %s43 = sld [smem:[%s42]]
  %s44 = scalar_lea.smem %s0, 22
  %s45 = sld [smem:[%s44]]
  %s46 = scalar_lea.smem %s0, 23
  %s47 = sld [smem:[%s46]]
  %s48 = scalar_lea.smem %s0, 24
  %s49 = sld [smem:[%s48]]
  %s50 = scalar_lea.smem %s0, 25
  %s51 = sld [smem:[%s50]]
  %s52 = scalar_lea.smem %s0, 26
  %s53 = sld [smem:[%s52]]
  %s54 = scalar_lea.smem %s0, 27
  %s55 = sld [smem:[%s54]]
  %s56 = scalar_lea.smem %s0, 28
  %s57 = sld [smem:[%s56]]
  %s58 = scalar_lea.smem %s0, 29
  %s59 = sld [smem:[%s58]]
  %s60 = scalar_lea.smem %s0, 30
  %s61 = sld [smem:[%s60]]
  %s62 = scalar_lea.smem %s0, 31
  %s63 = sld [smem:[%s62]]
  %s64 = scalar_lea.smem %s0, 32
  %s65 = sld [smem:[%s64]]
  %s66 = scalar_lea.smem %s0, 33
  %s67 = sld [smem:[%s66]]
  %s68 = scalar_lea.smem %s0, 34
  %s69 = sld [smem:[%s68]]
  %s70 = scalar_lea.smem %s0, 35
  %s71 = sld [smem:[%s70]]
  %s72 = scalar_lea.smem %s0, 36
  %s73 = sld [smem:[%s72]]
  %s74 = scalar_lea.smem %s0, 37
  %s75 = sld [smem:[%s74]]
  %s76 = scalar_lea.smem %s0, 38
  %s77 = sld [smem:[%s76]]
  %s78 = scalar_lea.smem %s0, 39
  %s79 = sld [smem:[%s78]]
  %s80 = scalar_lea.smem %s0, 40
  %s81 = sld [smem:[%s80]]
  %s82 = scalar_lea.smem %s0, 41
  %s83 = sld [smem:[%s82]]
  %s84 = scalar_lea.smem %s0, 42
  %s85 = sld [smem:[%s84]]
  %s86 = scalar_lea.smem %s0, 43
  %s87 = sld [smem:[%s86]]
  %s88 = scalar_lea.smem %s0, 44
  %s89 = sld [smem:[%s88]]
  %90 = xla_tuple %s85, %s87, %s89
  %s91 = sld [smem:[#allocation0]]
  $region309: #{_lambda_.1} parent=0
    _
  %s93 = ssub.s32 1, %s91
  %s94 = scalar_select 0, %s93, %s91
  $region1: #{_lambda_.1} parent=0
    #allocation2 [shape = 'u8[4096]{0}', space=vmem, size = 0x1000, scoped, tag = 'input window, operand 0']
    #allocation3 [shape = 's32[2]{0}', space=sflag, size = 0x8, scoped, tag = 'scoped memory for _lambda_.1']
    #allocation4 [shape = 'u8[1024]{0}', space=vmem, size = 0x400, scoped, tag = 'input window, operand 5, single buffered']
    #allocation5 [shape = 's32[1]{0}', space=sflag, size = 0x4, scoped, tag = 'scoped memory for _lambda_.1']
    #allocation6 [shape = 'u8[4096]{0}', space=vmem, size = 0x1000, scoped, tag = 'input window, operand 6, single buffered']
    #allocation7 [shape = 'u8[512]{0}', space=vmem, size = 0x400, scoped, tag = 'input window, operand 7, single buffered']
    #allocation8 [shape = 's32[1]{0}', space=sflag, size = 0x4, scoped, tag = 'scoped memory for _lambda_.1']
    #allocation9 [shape = 'u8[512]{0}', space=vmem, size = 0x400, scoped, tag = 'input window, operand 9, single buffered']
    #allocation10 [shape = 'u8[512]{0}', space=vmem, size = 0x400, scoped, tag = 'input window, operand 11, single buffered']
    #allocation11 [shape = 's32[1]{0}', space=sflag, size = 0x4, scoped, tag = 'scoped memory for _lambda_.1']
    #allocation12 [shape = 'u8[512]{0}', space=vmem, size = 0x400, scoped, tag = 'input window, operand 14, single buffered']
    #allocation13 [shape = 'u8[512]{0}', space=vmem, size = 0x400, scoped, tag = 'input window, operand 16, single buffered']
    #allocation14 [shape = 's32[1]{0}', space=sflag, size = 0x4, scoped, tag = 'scoped memory for _lambda_.1']
    #allocation15 [shape = 'u8[512]{0}', space=vmem, size = 0x400, scoped, tag = 'input window, operand 18, single buffered']
    #allocation16 [shape = 'u8[512]{0}', space=vmem, size = 0x400, scoped, tag = 'input window, operand 20, single buffered']
    #allocation17 [shape = 's32[1]{0}', space=sflag, size = 0x4, scoped, tag = 'scoped memory for _lambda_.1']
    #allocation18 [shape = 'u8[512]{0}', space=vmem, size = 0x400, scoped, tag = 'input window, operand 22, single buffered']
    #allocation19 [shape = 'u8[512]{0}', space=vmem, size = 0x400, scoped, tag = 'input window, operand 24, single buffered']
    #allocation20 [shape = 's32[1]{0}', space=sflag, size = 0x4, scoped, tag = 'scoped memory for _lambda_.1']
    #allocation21 [shape = 'u8[8192]{0}', space=vmem, size = 0x2000, scoped, tag = 'input window, operand 26, single buffered']
    #allocation22 [shape = 'u8[8192]{0}', space=vmem, size = 0x2000, scoped, tag = 'input window, operand 27, single buffered']
    #allocation23 [shape = 's32[1]{0}', space=sflag, size = 0x4, scoped, tag = 'scoped memory for _lambda_.1']
    #allocation24 [shape = 'u8[512]{0}', space=vmem, size = 0x400, scoped, tag = 'input window, operand 28, single buffered']
    #allocation25 [shape = 'u8[512]{0}', space=vmem, size = 0x400, scoped, tag = 'input window, operand 30, single buffered']
    #allocation26 [shape = 's32[1]{0}', space=sflag, size = 0x4, scoped, tag = 'scoped memory for _lambda_.1']
    #allocation27 [shape = 'u8[8192]{0}', space=vmem, size = 0x2000, scoped, tag = 'input window, operand 31, single buffered']
    #allocation28 [shape = 'u8[512]{0}', space=vmem, size = 0x400, scoped, tag = 'input window, operand 32, single buffered']
    #allocation29 [shape = 's32[1]{0}', space=sflag, size = 0x4, scoped, tag = 'scoped memory for _lambda_.1']
    #allocation30 [shape = 'u8[8192]{0}', space=vmem, size = 0x2000, scoped, tag = 'input window, operand 34, single buffered']
    #allocation31 [shape = 'u8[512]{0}', space=vmem, size = 0x400, scoped, tag = 'input window, operand 35, single buffered']
    #allocation32 [shape = 's32[1]{0}', space=sflag, size = 0x4, scoped, tag = 'scoped memory for _lambda_.1']
    #allocation33 [shape = 'u8[512]{0}', space=vmem, size = 0x400, scoped, tag = 'input window, operand 37, single buffered']
    #allocation34 [shape = 'u8[8192]{0}', space=vmem, size = 0x2000, scoped, tag = 'input window, operand 38, single buffered']
    #allocation35 [shape = 's32[1]{0}', space=sflag, size = 0x4, scoped, tag = 'scoped memory for _lambda_.1']
    #allocation36 [shape = 'u8[512]{0}', space=vmem, size = 0x400, scoped, tag = 'input window, operand 39, single buffered']
    %95 = vsyncpa [#allocation3], 0
    %s96 = scalar_lea.sflag [#allocation3], 1
    %97 = vsyncpa %s96, 0
    %98 = vsyncpa [#allocation5], 0
    %99 = vsyncpa [#allocation8], 0
    %100 = vsyncpa [#allocation11], 0
    %101 = vsyncpa [#allocation14], 0
    %102 = vsyncpa [#allocation17], 0
    %103 = vsyncpa [#allocation20], 0
    %104 = vsyncpa [#allocation23], 0
    %105 = vsyncpa [#allocation26], 0
    %106 = vsyncpa [#allocation29], 0
    %107 = vsyncpa [#allocation32], 0
    %108 = vsyncpa [#allocation35], 0
    loop: start=0, step=1, limit=4
    $region2: #{_lambda_.1} parent=1 // loop_pre_header
      _
    $region3: #{_lambda_.1} parent=1 // loop_header
      %s110 = sphi 0, %s114
      %p111 = scmp.ge.s32.totalorder %s110, 4
      %s120 = sphi 0, %s122
      %s123 = sphi 0, %s120
      %s124 = sphi 0, %s123
      %s140 = sphi 0, %s124
      %s146 = sphi 0, %s148
      %s149 = sphi 0, %s146
      %s150 = sphi 0, %s149
      %s166 = sphi 0, %s150
      %s172 = sphi 0, %s174
      %s175 = sphi 0, %s172
      %s176 = sphi 0, %s175
      %s192 = sphi 0, %s176
      %s196 = sphi 0, %s196
      %s198 = sphi 0, %s196
      %s199 = sphi 0, %s198
      %s213 = sphi 0, %s199
      %s217 = sphi 0, %s217
      %s219 = sphi 0, %s217
      %s220 = sphi 0, %s219
      %s234 = sphi 0, %s220
      %s238 = sphi 0, %s238
      %s240 = sphi 0, %s238
      %s241 = sphi 0, %s240
      %s255 = sphi 0, %s241
      %s259 = sphi 0, %s259
      %s261 = sphi 0, %s259
      %s262 = sphi 0, %s261
      %s276 = sphi 0, %s262
      %s280 = sphi 0, %s280
      %s282 = sphi 0, %s280
      %s283 = sphi 0, %s282
      %s297 = sphi 0, %s283
      %s301 = sphi 0, %s301
      %s303 = sphi 0, %s301
      %s304 = sphi 0, %s303
      %s318 = sphi 0, %s304
      %s322 = sphi 0, %s322
      %s324 = sphi 0, %s322
      %s325 = sphi 0, %s324
      %s339 = sphi 0, %s325
      %s343 = sphi 0, %s343
      %s345 = sphi 0, %s343
      %s346 = sphi 0, %s345
      %s360 = sphi 0, %s346
      %s364 = sphi 0, %s364
      %s366 = sphi 0, %s364
      %s367 = sphi 0, %s366
      %s381 = sphi 0, %s367
      %s385 = sphi 0, %s385
      %s387 = sphi 0, %s385
      %s388 = sphi 0, %s387
      %s402 = sphi 0, %s388
      %s406 = sphi 0, %s406
      %s408 = sphi 0, %s406
      %s409 = sphi 0, %s408
      %s423 = sphi 0, %s409
      %s427 = sphi 0, %s427
      %s429 = sphi 0, %s427
      %s430 = sphi 0, %s429
      %s444 = sphi 0, %s430
      %s448 = sphi 0, %s448
      %s450 = sphi 0, %s448
      %s451 = sphi 0, %s450
      %s465 = sphi 0, %s451
      %s469 = sphi 0, %s469
      %s471 = sphi 0, %s469
      %s472 = sphi 0, %s471
      %s486 = sphi 0, %s472
      %s490 = sphi 0, %s490
      %s492 = sphi 0, %s490
      %s493 = sphi 0, %s492
      %s507 = sphi 0, %s493
      %s511 = sphi 0, %s511
      %s513 = sphi 0, %s511
      %s514 = sphi 0, %s513
      %s528 = sphi 0, %s514
      %s532 = sphi 0, %s532
      %s534 = sphi 0, %s532
      %s535 = sphi 0, %s534
      %s549 = sphi 0, %s535
      %s553 = sphi 0, %s553
      %s555 = sphi 0, %s553
      %s556 = sphi 0, %s555
      %s570 = sphi 0, %s556
      %s574 = sphi 0, %s574
      %s576 = sphi 0, %s574
      %s577 = sphi 0, %s576
      %s591 = sphi 0, %s577
      %s595 = sphi 0, %s595
      %s597 = sphi 0, %s595
      %s598 = sphi 0, %s597
      %s612 = sphi 0, %s598
      %s616 = sphi 0, %s616
      %s618 = sphi 0, %s616
      %s619 = sphi 0, %s618
      %s633 = sphi 0, %s619
      %s637 = sphi 0, %s637
      %s639 = sphi 0, %s637
      %s640 = sphi 0, %s639
      %s654 = sphi 0, %s640
      %s658 = sphi 0, %s658
      %s660 = sphi 0, %s658
      %s661 = sphi 0, %s660
      %s675 = sphi 0, %s661
      %s679 = sphi 0, %s679
      %s681 = sphi 0, %s679
      %s682 = sphi 0, %s681
      %s696 = sphi 0, %s682
      %s700 = sphi 0, %s700
      %s702 = sphi 0, %s700
      %s703 = sphi 0, %s702
      %s717 = sphi 0, %s703
      %s721 = sphi 0, %s721
      %s723 = sphi 0, %s721
      %s724 = sphi 0, %s723
      %s738 = sphi 0, %s724
      %s742 = sphi 0, %s742
      %s744 = sphi 0, %s742
      %s745 = sphi 0, %s744
      %s759 = sphi 0, %s745
      %s763 = sphi 0, %s763
      %s765 = sphi 0, %s763
      %s766 = sphi 0, %s765
      %s780 = sphi 0, %s766
      %s784 = sphi 0, %s784
      %s786 = sphi 0, %s784
      %s787 = sphi 0, %s786
      %s801 = sphi 0, %s787
      %s805 = sphi 0, %s805
      %s807 = sphi 0, %s805
      %s808 = sphi 0, %s807
      %s822 = sphi 0, %s808
      %s826 = sphi 0, %s826
      %s828 = sphi 0, %s826
      %s829 = sphi 0, %s828
      %s843 = sphi 0, %s829
      %s847 = sphi 0, %s847
      %s849 = sphi 0, %s847
      %s850 = sphi 0, %s849
      %s864 = sphi 0, %s850
      %s868 = sphi 0, %s868
      %s870 = sphi 0, %s868
      %s871 = sphi 0, %s870
      %s885 = sphi 0, %s871
      %s889 = sphi 0, %s889
      %s891 = sphi 0, %s889
      %s892 = sphi 0, %s891
      %s906 = sphi 0, %s892
      %s910 = sphi 0, %s910
      %s912 = sphi 0, %s910
      %s913 = sphi 0, %s912
      %s927 = sphi 0, %s913
      %s931 = sphi 0, %s931
      %s933 = sphi 0, %s931
      %s934 = sphi 0, %s933
      %s948 = sphi 0, %s934
      %s952 = sphi 0, %s952
      %s954 = sphi 0, %s952
      %s955 = sphi 0, %s954
      %s969 = sphi 0, %s955
      %s973 = sphi 0, %s973
      %s975 = sphi 0, %s973
      %s976 = sphi 0, %s975
      %s990 = sphi 0, %s976
      %s994 = sphi 0, %s994
      %s996 = sphi 0, %s994
      %s997 = sphi 0, %s996
      %s1011 = sphi 0, %s997
      %s1017 = sphi 0, %s1019
      %s1020 = sphi 0, %s1017
      %s1021 = sphi 0, %s1020
      %s1037 = sphi 0, %s1021
      %s1043 = sphi 0, %s1045
      %s1046 = sphi 0, %s1043
      %s1047 = sphi 0, %s1046
      %s1063 = sphi 0, %s1047
      %s1069 = sphi 0, %s1071
      %s1072 = sphi 0, %s1069
      %s1073 = sphi 0, %s1072
      %s1089 = sphi 0, %s1073
    $region4: #{_lambda_.1} parent=1 // loop_header_branch
      %113 = sbr.rel (%p111) target = $region8
    $region5: #{_lambda_.1} parent=1 // loop_body
      %s115 = ssub.s32 %s110, 1
      %s116 = ssub.s32 %s110, 2
      %s117 = sadd.s32 %s110, 1
      %s118 = ssub.s32 %s110, %s117
      %p119 = scmp.eq.s32.totalorder %s118, 0
      %s121 = sadd.s32 %s120, 1
      %s122 = scalar_select %p119, %s120, %s121
      %p125 = pneg %p119
      %p126 = scmp.eq.s32.totalorder %s110, 1
      %p127 = por %p125, %p126
      %p128 = scmp.ne.s32.totalorder %s120, %s123
      %p129 = scmp.eq.s32.totalorder %s110, 0
      %p130 = por %p128, %p129
      %p131 = scmp.ne.s32.totalorder %s120, %s123
      %p132 = scmp.eq.s32.totalorder %s115, 1
      %p133 = por %p131, %p132
      %p134 = scmp.ne.s32.totalorder %s123, %s124
      %p135 = scmp.eq.s32.totalorder %s115, 0
      %p136 = por %p134, %p135
      %p137 = scmp.ne.s32.totalorder %s123, %s124
      %p138 = scmp.eq.s32.totalorder %s116, 1
      %p139 = por %p137, %p138
      %p141 = scmp.ne.s32.totalorder %s124, %s140
      %p142 = scmp.eq.s32.totalorder %s116, 0
      %p143 = por %p141, %p142
      %s144 = ssub.s32 %s110, %s117
      %p145 = scmp.eq.s32.totalorder %s144, 0
      %s147 = sadd.s32 %s146, 1
      %s148 = scalar_select %p145, %s146, %s147
      %p151 = pneg %p145
      %p152 = scmp.eq.s32.totalorder %s110, 1
      %p153 = por %p151, %p152
      %p154 = scmp.ne.s32.totalorder %s146, %s149
      %p155 = scmp.eq.s32.totalorder %s110, 0
      %p156 = por %p154, %p155
      %p157 = scmp.ne.s32.totalorder %s146, %s149
      %p158 = scmp.eq.s32.totalorder %s115, 1
      %p159 = por %p157, %p158
      %p160 = scmp.ne.s32.totalorder %s149, %s150
      %p161 = scmp.eq.s32.totalorder %s115, 0
      %p162 = por %p160, %p161
      %p163 = scmp.ne.s32.totalorder %s149, %s150
      %p164 = scmp.eq.s32.totalorder %s116, 1
      %p165 = por %p163, %p164
      %p167 = scmp.ne.s32.totalorder %s150, %s166
      %p168 = scmp.eq.s32.totalorder %s116, 0
      %p169 = por %p167, %p168
      %s170 = ssub.s32 %s110, %s117
      %p171 = scmp.eq.s32.totalorder %s170, 0
      %s173 = sadd.s32 %s172, 1
      %s174 = scalar_select %p171, %s172, %s173
      %p177 = pneg %p171
      %p178 = scmp.eq.s32.totalorder %s110, 1
      %p179 = por %p177, %p178
      %p180 = scmp.ne.s32.totalorder %s172, %s175
      %p181 = scmp.eq.s32.totalorder %s110, 0
      %p182 = por %p180, %p181
      %p183 = scmp.ne.s32.totalorder %s172, %s175
      %p184 = scmp.eq.s32.totalorder %s115, 1
      %p185 = por %p183, %p184
      %p186 = scmp.ne.s32.totalorder %s175, %s176
      %p187 = scmp.eq.s32.totalorder %s115, 0
      %p188 = por %p186, %p187
      %p189 = scmp.ne.s32.totalorder %s175, %s176
      %p190 = scmp.eq.s32.totalorder %s116, 1
      %p191 = por %p189, %p190
      %p193 = scmp.ne.s32.totalorder %s176, %s192
      %p194 = scmp.eq.s32.totalorder %s116, 0
      %p195 = por %p193, %p194
      %s197 = sadd.s32 %s196, 1
      %p200 = scmp.eq.s32.totalorder %s110, 1
      %p201 = scmp.ne.s32.totalorder %s196, %s198
      %p202 = scmp.eq.s32.totalorder %s110, 0
      %p203 = por %p201, %p202
      %p204 = scmp.ne.s32.totalorder %s196, %s198
      %p205 = scmp.eq.s32.totalorder %s115, 1
      %p206 = por %p204, %p205
      %p207 = scmp.ne.s32.totalorder %s198, %s199
      %p208 = scmp.eq.s32.totalorder %s115, 0
      %p209 = por %p207, %p208
      %p210 = scmp.ne.s32.totalorder %s198, %s199
      %p211 = scmp.eq.s32.totalorder %s116, 1
      %p212 = por %p210, %p211
      %p214 = scmp.ne.s32.totalorder %s199, %s213
      %p215 = scmp.eq.s32.totalorder %s116, 0
      %p216 = por %p214, %p215
      %s218 = sadd.s32 %s217, 1
      %p221 = scmp.eq.s32.totalorder %s110, 1
      %p222 = scmp.ne.s32.totalorder %s217, %s219
      %p223 = scmp.eq.s32.totalorder %s110, 0
      %p224 = por %p222, %p223
      %p225 = scmp.ne.s32.totalorder %s217, %s219
      %p226 = scmp.eq.s32.totalorder %s115, 1
      %p227 = por %p225, %p226
      %p228 = scmp.ne.s32.totalorder %s219, %s220
      %p229 = scmp.eq.s32.totalorder %s115, 0
      %p230 = por %p228, %p229
      %p231 = scmp.ne.s32.totalorder %s219, %s220
      %p232 = scmp.eq.s32.totalorder %s116, 1
      %p233 = por %p231, %p232
      %p235 = scmp.ne.s32.totalorder %s220, %s234
      %p236 = scmp.eq.s32.totalorder %s116, 0
      %p237 = por %p235, %p236
      %s239 = sadd.s32 %s238, 1
      %p242 = scmp.eq.s32.totalorder %s110, 1
      %p243 = scmp.ne.s32.totalorder %s238, %s240
      %p244 = scmp.eq.s32.totalorder %s110, 0
      %p245 = por %p243, %p244
      %p246 = scmp.ne.s32.totalorder %s238, %s240
      %p247 = scmp.eq.s32.totalorder %s115, 1
      %p248 = por %p246, %p247
      %p249 = scmp.ne.s32.totalorder %s240, %s241
      %p250 = scmp.eq.s32.totalorder %s115, 0
      %p251 = por %p249, %p250
      %p252 = scmp.ne.s32.totalorder %s240, %s241
      %p253 = scmp.eq.s32.totalorder %s116, 1
      %p254 = por %p252, %p253
      %p256 = scmp.ne.s32.totalorder %s241, %s255
      %p257 = scmp.eq.s32.totalorder %s116, 0
      %p258 = por %p256, %p257
      %s260 = sadd.s32 %s259, 1
      %p263 = scmp.eq.s32.totalorder %s110, 1
      %p264 = scmp.ne.s32.totalorder %s259, %s261
      %p265 = scmp.eq.s32.totalorder %s110, 0
      %p266 = por %p264, %p265
      %p267 = scmp.ne.s32.totalorder %s259, %s261
      %p268 = scmp.eq.s32.totalorder %s115, 1
      %p269 = por %p267, %p268
      %p270 = scmp.ne.s32.totalorder %s261, %s262
      %p271 = scmp.eq.s32.totalorder %s115, 0
      %p272 = por %p270, %p271
      %p273 = scmp.ne.s32.totalorder %s261, %s262
      %p274 = scmp.eq.s32.totalorder %s116, 1
      %p275 = por %p273, %p274
      %p277 = scmp.ne.s32.totalorder %s262, %s276
      %p278 = scmp.eq.s32.totalorder %s116, 0
      %p279 = por %p277, %p278
      %s281 = sadd.s32 %s280, 1
      %p284 = scmp.eq.s32.totalorder %s110, 1
      %p285 = scmp.ne.s32.totalorder %s280, %s282
      %p286 = scmp.eq.s32.totalorder %s110, 0
      %p287 = por %p285, %p286
      %p288 = scmp.ne.s32.totalorder %s280, %s282
      %p289 = scmp.eq.s32.totalorder %s115, 1
      %p290 = por %p288, %p289
      %p291 = scmp.ne.s32.totalorder %s282, %s283
      %p292 = scmp.eq.s32.totalorder %s115, 0
      %p293 = por %p291, %p292
      %p294 = scmp.ne.s32.totalorder %s282, %s283
      %p295 = scmp.eq.s32.totalorder %s116, 1
      %p296 = por %p294, %p295
      %p298 = scmp.ne.s32.totalorder %s283, %s297
      %p299 = scmp.eq.s32.totalorder %s116, 0
      %p300 = por %p298, %p299
      %s302 = sadd.s32 %s301, 1
      %p305 = scmp.eq.s32.totalorder %s110, 1
      %p306 = scmp.ne.s32.totalorder %s301, %s303
      %p307 = scmp.eq.s32.totalorder %s110, 0
      %p308 = por %p306, %p307
      %p309 = scmp.ne.s32.totalorder %s301, %s303
      %p310 = scmp.eq.s32.totalorder %s115, 1
      %p311 = por %p309, %p310
      %p312 = scmp.ne.s32.totalorder %s303, %s304
      %p313 = scmp.eq.s32.totalorder %s115, 0
      %p314 = por %p312, %p313
      %p315 = scmp.ne.s32.totalorder %s303, %s304
      %p316 = scmp.eq.s32.totalorder %s116, 1
      %p317 = por %p315, %p316
      %p319 = scmp.ne.s32.totalorder %s304, %s318
      %p320 = scmp.eq.s32.totalorder %s116, 0
      %p321 = por %p319, %p320
      %s323 = sadd.s32 %s322, 1
      %p326 = scmp.eq.s32.totalorder %s110, 1
      %p327 = scmp.ne.s32.totalorder %s322, %s324
      %p328 = scmp.eq.s32.totalorder %s110, 0
      %p329 = por %p327, %p328
      %p330 = scmp.ne.s32.totalorder %s322, %s324
      %p331 = scmp.eq.s32.totalorder %s115, 1
      %p332 = por %p330, %p331
      %p333 = scmp.ne.s32.totalorder %s324, %s325
      %p334 = scmp.eq.s32.totalorder %s115, 0
      %p335 = por %p333, %p334
      %p336 = scmp.ne.s32.totalorder %s324, %s325
      %p337 = scmp.eq.s32.totalorder %s116, 1
      %p338 = por %p336, %p337
      %p340 = scmp.ne.s32.totalorder %s325, %s339
      %p341 = scmp.eq.s32.totalorder %s116, 0
      %p342 = por %p340, %p341
      %s344 = sadd.s32 %s343, 1
      %p347 = scmp.eq.s32.totalorder %s110, 1
      %p348 = scmp.ne.s32.totalorder %s343, %s345
      %p349 = scmp.eq.s32.totalorder %s110, 0
      %p350 = por %p348, %p349
      %p351 = scmp.ne.s32.totalorder %s343, %s345
      %p352 = scmp.eq.s32.totalorder %s115, 1
      %p353 = por %p351, %p352
      %p354 = scmp.ne.s32.totalorder %s345, %s346
      %p355 = scmp.eq.s32.totalorder %s115, 0
      %p356 = por %p354, %p355
      %p357 = scmp.ne.s32.totalorder %s345, %s346
      %p358 = scmp.eq.s32.totalorder %s116, 1
      %p359 = por %p357, %p358
      %p361 = scmp.ne.s32.totalorder %s346, %s360
      %p362 = scmp.eq.s32.totalorder %s116, 0
      %p363 = por %p361, %p362
      %s365 = sadd.s32 %s364, 1
      %p368 = scmp.eq.s32.totalorder %s110, 1
      %p369 = scmp.ne.s32.totalorder %s364, %s366
      %p370 = scmp.eq.s32.totalorder %s110, 0
      %p371 = por %p369, %p370
      %p372 = scmp.ne.s32.totalorder %s364, %s366
      %p373 = scmp.eq.s32.totalorder %s115, 1
      %p374 = por %p372, %p373
      %p375 = scmp.ne.s32.totalorder %s366, %s367
      %p376 = scmp.eq.s32.totalorder %s115, 0
      %p377 = por %p375, %p376
      %p378 = scmp.ne.s32.totalorder %s366, %s367
      %p379 = scmp.eq.s32.totalorder %s116, 1
      %p380 = por %p378, %p379
      %p382 = scmp.ne.s32.totalorder %s367, %s381
      %p383 = scmp.eq.s32.totalorder %s116, 0
      %p384 = por %p382, %p383
      %s386 = sadd.s32 %s385, 1
      %p389 = scmp.eq.s32.totalorder %s110, 1
      %p390 = scmp.ne.s32.totalorder %s385, %s387
      %p391 = scmp.eq.s32.totalorder %s110, 0
      %p392 = por %p390, %p391
      %p393 = scmp.ne.s32.totalorder %s385, %s387
      %p394 = scmp.eq.s32.totalorder %s115, 1
      %p395 = por %p393, %p394
      %p396 = scmp.ne.s32.totalorder %s387, %s388
      %p397 = scmp.eq.s32.totalorder %s115, 0
      %p398 = por %p396, %p397
      %p399 = scmp.ne.s32.totalorder %s387, %s388
      %p400 = scmp.eq.s32.totalorder %s116, 1
      %p401 = por %p399, %p400
      %p403 = scmp.ne.s32.totalorder %s388, %s402
      %p404 = scmp.eq.s32.totalorder %s116, 0
      %p405 = por %p403, %p404
      %s407 = sadd.s32 %s406, 1
      %p410 = scmp.eq.s32.totalorder %s110, 1
      %p411 = scmp.ne.s32.totalorder %s406, %s408
      %p412 = scmp.eq.s32.totalorder %s110, 0
      %p413 = por %p411, %p412
      %p414 = scmp.ne.s32.totalorder %s406, %s408
      %p415 = scmp.eq.s32.totalorder %s115, 1
      %p416 = por %p414, %p415
      %p417 = scmp.ne.s32.totalorder %s408, %s409
      %p418 = scmp.eq.s32.totalorder %s115, 0
      %p419 = por %p417, %p418
      %p420 = scmp.ne.s32.totalorder %s408, %s409
      %p421 = scmp.eq.s32.totalorder %s116, 1
      %p422 = por %p420, %p421
      %p424 = scmp.ne.s32.totalorder %s409, %s423
      %p425 = scmp.eq.s32.totalorder %s116, 0
      %p426 = por %p424, %p425
      %s428 = sadd.s32 %s427, 1
      %p431 = scmp.eq.s32.totalorder %s110, 1
      %p432 = scmp.ne.s32.totalorder %s427, %s429
      %p433 = scmp.eq.s32.totalorder %s110, 0
      %p434 = por %p432, %p433
      %p435 = scmp.ne.s32.totalorder %s427, %s429
      %p436 = scmp.eq.s32.totalorder %s115, 1
      %p437 = por %p435, %p436
      %p438 = scmp.ne.s32.totalorder %s429, %s430
      %p439 = scmp.eq.s32.totalorder %s115, 0
      %p440 = por %p438, %p439
      %p441 = scmp.ne.s32.totalorder %s429, %s430
      %p442 = scmp.eq.s32.totalorder %s116, 1
      %p443 = por %p441, %p442
      %p445 = scmp.ne.s32.totalorder %s430, %s444
      %p446 = scmp.eq.s32.totalorder %s116, 0
      %p447 = por %p445, %p446
      %s449 = sadd.s32 %s448, 1
      %p452 = scmp.eq.s32.totalorder %s110, 1
      %p453 = scmp.ne.s32.totalorder %s448, %s450
      %p454 = scmp.eq.s32.totalorder %s110, 0
      %p455 = por %p453, %p454
      %p456 = scmp.ne.s32.totalorder %s448, %s450
      %p457 = scmp.eq.s32.totalorder %s115, 1
      %p458 = por %p456, %p457
      %p459 = scmp.ne.s32.totalorder %s450, %s451
      %p460 = scmp.eq.s32.totalorder %s115, 0
      %p461 = por %p459, %p460
      %p462 = scmp.ne.s32.totalorder %s450, %s451
      %p463 = scmp.eq.s32.totalorder %s116, 1
      %p464 = por %p462, %p463
      %p466 = scmp.ne.s32.totalorder %s451, %s465
      %p467 = scmp.eq.s32.totalorder %s116, 0
      %p468 = por %p466, %p467
      %s470 = sadd.s32 %s469, 1
      %p473 = scmp.eq.s32.totalorder %s110, 1
      %p474 = scmp.ne.s32.totalorder %s469, %s471
      %p475 = scmp.eq.s32.totalorder %s110, 0
      %p476 = por %p474, %p475
      %p477 = scmp.ne.s32.totalorder %s469, %s471
      %p478 = scmp.eq.s32.totalorder %s115, 1
      %p479 = por %p477, %p478
      %p480 = scmp.ne.s32.totalorder %s471, %s472
      %p481 = scmp.eq.s32.totalorder %s115, 0
      %p482 = por %p480, %p481
      %p483 = scmp.ne.s32.totalorder %s471, %s472
      %p484 = scmp.eq.s32.totalorder %s116, 1
      %p485 = por %p483, %p484
      %p487 = scmp.ne.s32.totalorder %s472, %s486
      %p488 = scmp.eq.s32.totalorder %s116, 0
      %p489 = por %p487, %p488
      %s491 = sadd.s32 %s490, 1
      %p494 = scmp.eq.s32.totalorder %s110, 1
      %p495 = scmp.ne.s32.totalorder %s490, %s492
      %p496 = scmp.eq.s32.totalorder %s110, 0
      %p497 = por %p495, %p496
      %p498 = scmp.ne.s32.totalorder %s490, %s492
      %p499 = scmp.eq.s32.totalorder %s115, 1
      %p500 = por %p498, %p499
      %p501 = scmp.ne.s32.totalorder %s492, %s493
      %p502 = scmp.eq.s32.totalorder %s115, 0
      %p503 = por %p501, %p502
      %p504 = scmp.ne.s32.totalorder %s492, %s493
      %p505 = scmp.eq.s32.totalorder %s116, 1
      %p506 = por %p504, %p505
      %p508 = scmp.ne.s32.totalorder %s493, %s507
      %p509 = scmp.eq.s32.totalorder %s116, 0
      %p510 = por %p508, %p509
      %s512 = sadd.s32 %s511, 1
      %p515 = scmp.eq.s32.totalorder %s110, 1
      %p516 = scmp.ne.s32.totalorder %s511, %s513
      %p517 = scmp.eq.s32.totalorder %s110, 0
      %p518 = por %p516, %p517
      %p519 = scmp.ne.s32.totalorder %s511, %s513
      %p520 = scmp.eq.s32.totalorder %s115, 1
      %p521 = por %p519, %p520
      %p522 = scmp.ne.s32.totalorder %s513, %s514
      %p523 = scmp.eq.s32.totalorder %s115, 0
      %p524 = por %p522, %p523
      %p525 = scmp.ne.s32.totalorder %s513, %s514
      %p526 = scmp.eq.s32.totalorder %s116, 1
      %p527 = por %p525, %p526
      %p529 = scmp.ne.s32.totalorder %s514, %s528
      %p530 = scmp.eq.s32.totalorder %s116, 0
      %p531 = por %p529, %p530
      %s533 = sadd.s32 %s532, 1
      %p536 = scmp.eq.s32.totalorder %s110, 1
      %p537 = scmp.ne.s32.totalorder %s532, %s534
      %p538 = scmp.eq.s32.totalorder %s110, 0
      %p539 = por %p537, %p538
      %p540 = scmp.ne.s32.totalorder %s532, %s534
      %p541 = scmp.eq.s32.totalorder %s115, 1
      %p542 = por %p540, %p541
      %p543 = scmp.ne.s32.totalorder %s534, %s535
      %p544 = scmp.eq.s32.totalorder %s115, 0
      %p545 = por %p543, %p544
      %p546 = scmp.ne.s32.totalorder %s534, %s535
      %p547 = scmp.eq.s32.totalorder %s116, 1
      %p548 = por %p546, %p547
      %p550 = scmp.ne.s32.totalorder %s535, %s549
      %p551 = scmp.eq.s32.totalorder %s116, 0
      %p552 = por %p550, %p551
      %s554 = sadd.s32 %s553, 1
      %p557 = scmp.eq.s32.totalorder %s110, 1
      %p558 = scmp.ne.s32.totalorder %s553, %s555
      %p559 = scmp.eq.s32.totalorder %s110, 0
      %p560 = por %p558, %p559
      %p561 = scmp.ne.s32.totalorder %s553, %s555
      %p562 = scmp.eq.s32.totalorder %s115, 1
      %p563 = por %p561, %p562
      %p564 = scmp.ne.s32.totalorder %s555, %s556
      %p565 = scmp.eq.s32.totalorder %s115, 0
      %p566 = por %p564, %p565
      %p567 = scmp.ne.s32.totalorder %s555, %s556
      %p568 = scmp.eq.s32.totalorder %s116, 1
      %p569 = por %p567, %p568
      %p571 = scmp.ne.s32.totalorder %s556, %s570
      %p572 = scmp.eq.s32.totalorder %s116, 0
      %p573 = por %p571, %p572
      %s575 = sadd.s32 %s574, 1
      %p578 = scmp.eq.s32.totalorder %s110, 1
      %p579 = scmp.ne.s32.totalorder %s574, %s576
      %p580 = scmp.eq.s32.totalorder %s110, 0
      %p581 = por %p579, %p580
      %p582 = scmp.ne.s32.totalorder %s574, %s576
      %p583 = scmp.eq.s32.totalorder %s115, 1
      %p584 = por %p582, %p583
      %p585 = scmp.ne.s32.totalorder %s576, %s577
      %p586 = scmp.eq.s32.totalorder %s115, 0
      %p587 = por %p585, %p586
      %p588 = scmp.ne.s32.totalorder %s576, %s577
      %p589 = scmp.eq.s32.totalorder %s116, 1
      %p590 = por %p588, %p589
      %p592 = scmp.ne.s32.totalorder %s577, %s591
      %p593 = scmp.eq.s32.totalorder %s116, 0
      %p594 = por %p592, %p593
      %s596 = sadd.s32 %s595, 1
      %p599 = scmp.eq.s32.totalorder %s110, 1
      %p600 = scmp.ne.s32.totalorder %s595, %s597
      %p601 = scmp.eq.s32.totalorder %s110, 0
      %p602 = por %p600, %p601
      %p603 = scmp.ne.s32.totalorder %s595, %s597
      %p604 = scmp.eq.s32.totalorder %s115, 1
      %p605 = por %p603, %p604
      %p606 = scmp.ne.s32.totalorder %s597, %s598
      %p607 = scmp.eq.s32.totalorder %s115, 0
      %p608 = por %p606, %p607
      %p609 = scmp.ne.s32.totalorder %s597, %s598
      %p610 = scmp.eq.s32.totalorder %s116, 1
      %p611 = por %p609, %p610
      %p613 = scmp.ne.s32.totalorder %s598, %s612
      %p614 = scmp.eq.s32.totalorder %s116, 0
      %p615 = por %p613, %p614
      %s617 = sadd.s32 %s616, 1
      %p620 = scmp.eq.s32.totalorder %s110, 1
      %p621 = scmp.ne.s32.totalorder %s616, %s618
      %p622 = scmp.eq.s32.totalorder %s110, 0
      %p623 = por %p621, %p622
      %p624 = scmp.ne.s32.totalorder %s616, %s618
      %p625 = scmp.eq.s32.totalorder %s115, 1
      %p626 = por %p624, %p625
      %p627 = scmp.ne.s32.totalorder %s618, %s619
      %p628 = scmp.eq.s32.totalorder %s115, 0
      %p629 = por %p627, %p628
      %p630 = scmp.ne.s32.totalorder %s618, %s619
      %p631 = scmp.eq.s32.totalorder %s116, 1
      %p632 = por %p630, %p631
      %p634 = scmp.ne.s32.totalorder %s619, %s633
      %p635 = scmp.eq.s32.totalorder %s116, 0
      %p636 = por %p634, %p635
      %s638 = sadd.s32 %s637, 1
      %p641 = scmp.eq.s32.totalorder %s110, 1
      %p642 = scmp.ne.s32.totalorder %s637, %s639
      %p643 = scmp.eq.s32.totalorder %s110, 0
      %p644 = por %p642, %p643
      %p645 = scmp.ne.s32.totalorder %s637, %s639
      %p646 = scmp.eq.s32.totalorder %s115, 1
      %p647 = por %p645, %p646
      %p648 = scmp.ne.s32.totalorder %s639, %s640
      %p649 = scmp.eq.s32.totalorder %s115, 0
      %p650 = por %p648, %p649
      %p651 = scmp.ne.s32.totalorder %s639, %s640
      %p652 = scmp.eq.s32.totalorder %s116, 1
      %p653 = por %p651, %p652
      %p655 = scmp.ne.s32.totalorder %s640, %s654
      %p656 = scmp.eq.s32.totalorder %s116, 0
      %p657 = por %p655, %p656
      %s659 = sadd.s32 %s658, 1
      %p662 = scmp.eq.s32.totalorder %s110, 1
      %p663 = scmp.ne.s32.totalorder %s658, %s660
      %p664 = scmp.eq.s32.totalorder %s110, 0
      %p665 = por %p663, %p664
      %p666 = scmp.ne.s32.totalorder %s658, %s660
      %p667 = scmp.eq.s32.totalorder %s115, 1
      %p668 = por %p666, %p667
      %p669 = scmp.ne.s32.totalorder %s660, %s661
      %p670 = scmp.eq.s32.totalorder %s115, 0
      %p671 = por %p669, %p670
      %p672 = scmp.ne.s32.totalorder %s660, %s661
      %p673 = scmp.eq.s32.totalorder %s116, 1
      %p674 = por %p672, %p673
      %p676 = scmp.ne.s32.totalorder %s661, %s675
      %p677 = scmp.eq.s32.totalorder %s116, 0
      %p678 = por %p676, %p677
      %s680 = sadd.s32 %s679, 1
      %p683 = scmp.eq.s32.totalorder %s110, 1
      %p684 = scmp.ne.s32.totalorder %s679, %s681
      %p685 = scmp.eq.s32.totalorder %s110, 0
      %p686 = por %p684, %p685
      %p687 = scmp.ne.s32.totalorder %s679, %s681
      %p688 = scmp.eq.s32.totalorder %s115, 1
      %p689 = por %p687, %p688
      %p690 = scmp.ne.s32.totalorder %s681, %s682
      %p691 = scmp.eq.s32.totalorder %s115, 0
      %p692 = por %p690, %p691
      %p693 = scmp.ne.s32.totalorder %s681, %s682
      %p694 = scmp.eq.s32.totalorder %s116, 1
      %p695 = por %p693, %p694
      %p697 = scmp.ne.s32.totalorder %s682, %s696
      %p698 = scmp.eq.s32.totalorder %s116, 0
      %p699 = por %p697, %p698
      %s701 = sadd.s32 %s700, 1
      %p704 = scmp.eq.s32.totalorder %s110, 1
      %p705 = scmp.ne.s32.totalorder %s700, %s702
      %p706 = scmp.eq.s32.totalorder %s110, 0
      %p707 = por %p705, %p706
      %p708 = scmp.ne.s32.totalorder %s700, %s702
      %p709 = scmp.eq.s32.totalorder %s115, 1
      %p710 = por %p708, %p709
      %p711 = scmp.ne.s32.totalorder %s702, %s703
      %p712 = scmp.eq.s32.totalorder %s115, 0
      %p713 = por %p711, %p712
      %p714 = scmp.ne.s32.totalorder %s702, %s703
      %p715 = scmp.eq.s32.totalorder %s116, 1
      %p716 = por %p714, %p715
      %p718 = scmp.ne.s32.totalorder %s703, %s717
      %p719 = scmp.eq.s32.totalorder %s116, 0
      %p720 = por %p718, %p719
      %s722 = sadd.s32 %s721, 1
      %p725 = scmp.eq.s32.totalorder %s110, 1
      %p726 = scmp.ne.s32.totalorder %s721, %s723
      %p727 = scmp.eq.s32.totalorder %s110, 0
      %p728 = por %p726, %p727
      %p729 = scmp.ne.s32.totalorder %s721, %s723
      %p730 = scmp.eq.s32.totalorder %s115, 1
      %p731 = por %p729, %p730
      %p732 = scmp.ne.s32.totalorder %s723, %s724
      %p733 = scmp.eq.s32.totalorder %s115, 0
      %p734 = por %p732, %p733
      %p735 = scmp.ne.s32.totalorder %s723, %s724
      %p736 = scmp.eq.s32.totalorder %s116, 1
      %p737 = por %p735, %p736
      %p739 = scmp.ne.s32.totalorder %s724, %s738
      %p740 = scmp.eq.s32.totalorder %s116, 0
      %p741 = por %p739, %p740
      %s743 = sadd.s32 %s742, 1
      %p746 = scmp.eq.s32.totalorder %s110, 1
      %p747 = scmp.ne.s32.totalorder %s742, %s744
      %p748 = scmp.eq.s32.totalorder %s110, 0
      %p749 = por %p747, %p748
      %p750 = scmp.ne.s32.totalorder %s742, %s744
      %p751 = scmp.eq.s32.totalorder %s115, 1
      %p752 = por %p750, %p751
      %p753 = scmp.ne.s32.totalorder %s744, %s745
      %p754 = scmp.eq.s32.totalorder %s115, 0
      %p755 = por %p753, %p754
      %p756 = scmp.ne.s32.totalorder %s744, %s745
      %p757 = scmp.eq.s32.totalorder %s116, 1
      %p758 = por %p756, %p757
      %p760 = scmp.ne.s32.totalorder %s745, %s759
      %p761 = scmp.eq.s32.totalorder %s116, 0
      %p762 = por %p760, %p761
      %s764 = sadd.s32 %s763, 1
      %p767 = scmp.eq.s32.totalorder %s110, 1
      %p768 = scmp.ne.s32.totalorder %s763, %s765
      %p769 = scmp.eq.s32.totalorder %s110, 0
      %p770 = por %p768, %p769
      %p771 = scmp.ne.s32.totalorder %s763, %s765
      %p772 = scmp.eq.s32.totalorder %s115, 1
      %p773 = por %p771, %p772
      %p774 = scmp.ne.s32.totalorder %s765, %s766
      %p775 = scmp.eq.s32.totalorder %s115, 0
      %p776 = por %p774, %p775
      %p777 = scmp.ne.s32.totalorder %s765, %s766
      %p778 = scmp.eq.s32.totalorder %s116, 1
      %p779 = por %p777, %p778
      %p781 = scmp.ne.s32.totalorder %s766, %s780
      %p782 = scmp.eq.s32.totalorder %s116, 0
      %p783 = por %p781, %p782
      %s785 = sadd.s32 %s784, 1
      %p788 = scmp.eq.s32.totalorder %s110, 1
      %p789 = scmp.ne.s32.totalorder %s784, %s786
      %p790 = scmp.eq.s32.totalorder %s110, 0
      %p791 = por %p789, %p790
      %p792 = scmp.ne.s32.totalorder %s784, %s786
      %p793 = scmp.eq.s32.totalorder %s115, 1
      %p794 = por %p792, %p793
      %p795 = scmp.ne.s32.totalorder %s786, %s787
      %p796 = scmp.eq.s32.totalorder %s115, 0
      %p797 = por %p795, %p796
      %p798 = scmp.ne.s32.totalorder %s786, %s787
      %p799 = scmp.eq.s32.totalorder %s116, 1
      %p800 = por %p798, %p799
      %p802 = scmp.ne.s32.totalorder %s787, %s801
      %p803 = scmp.eq.s32.totalorder %s116, 0
      %p804 = por %p802, %p803
      %s806 = sadd.s32 %s805, 1
      %p809 = scmp.eq.s32.totalorder %s110, 1
      %p810 = scmp.ne.s32.totalorder %s805, %s807
      %p811 = scmp.eq.s32.totalorder %s110, 0
      %p812 = por %p810, %p811
      %p813 = scmp.ne.s32.totalorder %s805, %s807
      %p814 = scmp.eq.s32.totalorder %s115, 1
      %p815 = por %p813, %p814
      %p816 = scmp.ne.s32.totalorder %s807, %s808
      %p817 = scmp.eq.s32.totalorder %s115, 0
      %p818 = por %p816, %p817
      %p819 = scmp.ne.s32.totalorder %s807, %s808
      %p820 = scmp.eq.s32.totalorder %s116, 1
      %p821 = por %p819, %p820
      %p823 = scmp.ne.s32.totalorder %s808, %s822
      %p824 = scmp.eq.s32.totalorder %s116, 0
      %p825 = por %p823, %p824
      %s827 = sadd.s32 %s826, 1
      %p830 = scmp.eq.s32.totalorder %s110, 1
      %p831 = scmp.ne.s32.totalorder %s826, %s828
      %p832 = scmp.eq.s32.totalorder %s110, 0
      %p833 = por %p831, %p832
      %p834 = scmp.ne.s32.totalorder %s826, %s828
      %p835 = scmp.eq.s32.totalorder %s115, 1
      %p836 = por %p834, %p835
      %p837 = scmp.ne.s32.totalorder %s828, %s829
      %p838 = scmp.eq.s32.totalorder %s115, 0
      %p839 = por %p837, %p838
      %p840 = scmp.ne.s32.totalorder %s828, %s829
      %p841 = scmp.eq.s32.totalorder %s116, 1
      %p842 = por %p840, %p841
      %p844 = scmp.ne.s32.totalorder %s829, %s843
      %p845 = scmp.eq.s32.totalorder %s116, 0
      %p846 = por %p844, %p845
      %s848 = sadd.s32 %s847, 1
      %p851 = scmp.eq.s32.totalorder %s110, 1
      %p852 = scmp.ne.s32.totalorder %s847, %s849
      %p853 = scmp.eq.s32.totalorder %s110, 0
      %p854 = por %p852, %p853
      %p855 = scmp.ne.s32.totalorder %s847, %s849
      %p856 = scmp.eq.s32.totalorder %s115, 1
      %p857 = por %p855, %p856
      %p858 = scmp.ne.s32.totalorder %s849, %s850
      %p859 = scmp.eq.s32.totalorder %s115, 0
      %p860 = por %p858, %p859
      %p861 = scmp.ne.s32.totalorder %s849, %s850
      %p862 = scmp.eq.s32.totalorder %s116, 1
      %p863 = por %p861, %p862
      %p865 = scmp.ne.s32.totalorder %s850, %s864
      %p866 = scmp.eq.s32.totalorder %s116, 0
      %p867 = por %p865, %p866
      %s869 = sadd.s32 %s868, 1
      %p872 = scmp.eq.s32.totalorder %s110, 1
      %p873 = scmp.ne.s32.totalorder %s868, %s870
      %p874 = scmp.eq.s32.totalorder %s110, 0
      %p875 = por %p873, %p874
      %p876 = scmp.ne.s32.totalorder %s868, %s870
      %p877 = scmp.eq.s32.totalorder %s115, 1
      %p878 = por %p876, %p877
      %p879 = scmp.ne.s32.totalorder %s870, %s871
      %p880 = scmp.eq.s32.totalorder %s115, 0
      %p881 = por %p879, %p880
      %p882 = scmp.ne.s32.totalorder %s870, %s871
      %p883 = scmp.eq.s32.totalorder %s116, 1
      %p884 = por %p882, %p883
      %p886 = scmp.ne.s32.totalorder %s871, %s885
      %p887 = scmp.eq.s32.totalorder %s116, 0
      %p888 = por %p886, %p887
      %s890 = sadd.s32 %s889, 1
      %p893 = scmp.eq.s32.totalorder %s110, 1
      %p894 = scmp.ne.s32.totalorder %s889, %s891
      %p895 = scmp.eq.s32.totalorder %s110, 0
      %p896 = por %p894, %p895
      %p897 = scmp.ne.s32.totalorder %s889, %s891
      %p898 = scmp.eq.s32.totalorder %s115, 1
      %p899 = por %p897, %p898
      %p900 = scmp.ne.s32.totalorder %s891, %s892
      %p901 = scmp.eq.s32.totalorder %s115, 0
      %p902 = por %p900, %p901
      %p903 = scmp.ne.s32.totalorder %s891, %s892
      %p904 = scmp.eq.s32.totalorder %s116, 1
      %p905 = por %p903, %p904
      %p907 = scmp.ne.s32.totalorder %s892, %s906
      %p908 = scmp.eq.s32.totalorder %s116, 0
      %p909 = por %p907, %p908
      %s911 = sadd.s32 %s910, 1
      %p914 = scmp.eq.s32.totalorder %s110, 1
      %p915 = scmp.ne.s32.totalorder %s910, %s912
      %p916 = scmp.eq.s32.totalorder %s110, 0
      %p917 = por %p915, %p916
      %p918 = scmp.ne.s32.totalorder %s910, %s912
      %p919 = scmp.eq.s32.totalorder %s115, 1
      %p920 = por %p918, %p919
      %p921 = scmp.ne.s32.totalorder %s912, %s913
      %p922 = scmp.eq.s32.totalorder %s115, 0
      %p923 = por %p921, %p922
      %p924 = scmp.ne.s32.totalorder %s912, %s913
      %p925 = scmp.eq.s32.totalorder %s116, 1
      %p926 = por %p924, %p925
      %p928 = scmp.ne.s32.totalorder %s913, %s927
      %p929 = scmp.eq.s32.totalorder %s116, 0
      %p930 = por %p928, %p929
      %s932 = sadd.s32 %s931, 1
      %p935 = scmp.eq.s32.totalorder %s110, 1
      %p936 = scmp.ne.s32.totalorder %s931, %s933
      %p937 = scmp.eq.s32.totalorder %s110, 0
      %p938 = por %p936, %p937
      %p939 = scmp.ne.s32.totalorder %s931, %s933
      %p940 = scmp.eq.s32.totalorder %s115, 1
      %p941 = por %p939, %p940
      %p942 = scmp.ne.s32.totalorder %s933, %s934
      %p943 = scmp.eq.s32.totalorder %s115, 0
      %p944 = por %p942, %p943
      %p945 = scmp.ne.s32.totalorder %s933, %s934
      %p946 = scmp.eq.s32.totalorder %s116, 1
      %p947 = por %p945, %p946
      %p949 = scmp.ne.s32.totalorder %s934, %s948
      %p950 = scmp.eq.s32.totalorder %s116, 0
      %p951 = por %p949, %p950
      %s953 = sadd.s32 %s952, 1
      %p956 = scmp.eq.s32.totalorder %s110, 1
      %p957 = scmp.ne.s32.totalorder %s952, %s954
      %p958 = scmp.eq.s32.totalorder %s110, 0
      %p959 = por %p957, %p958
      %p960 = scmp.ne.s32.totalorder %s952, %s954
      %p961 = scmp.eq.s32.totalorder %s115, 1
      %p962 = por %p960, %p961
      %p963 = scmp.ne.s32.totalorder %s954, %s955
      %p964 = scmp.eq.s32.totalorder %s115, 0
      %p965 = por %p963, %p964
      %p966 = scmp.ne.s32.totalorder %s954, %s955
      %p967 = scmp.eq.s32.totalorder %s116, 1
      %p968 = por %p966, %p967
      %p970 = scmp.ne.s32.totalorder %s955, %s969
      %p971 = scmp.eq.s32.totalorder %s116, 0
      %p972 = por %p970, %p971
      %s974 = sadd.s32 %s973, 1
      %p977 = scmp.eq.s32.totalorder %s110, 1
      %p978 = scmp.ne.s32.totalorder %s973, %s975
      %p979 = scmp.eq.s32.totalorder %s110, 0
      %p980 = por %p978, %p979
      %p981 = scmp.ne.s32.totalorder %s973, %s975
      %p982 = scmp.eq.s32.totalorder %s115, 1
      %p983 = por %p981, %p982
      %p984 = scmp.ne.s32.totalorder %s975, %s976
      %p985 = scmp.eq.s32.totalorder %s115, 0
      %p986 = por %p984, %p985
      %p987 = scmp.ne.s32.totalorder %s975, %s976
      %p988 = scmp.eq.s32.totalorder %s116, 1
      %p989 = por %p987, %p988
      %p991 = scmp.ne.s32.totalorder %s976, %s990
      %p992 = scmp.eq.s32.totalorder %s116, 0
      %p993 = por %p991, %p992
      %s995 = sadd.s32 %s994, 1
      %p998 = scmp.eq.s32.totalorder %s110, 1
      %p999 = scmp.ne.s32.totalorder %s994, %s996
      %p1000 = scmp.eq.s32.totalorder %s110, 0
      %p1001 = por %p999, %p1000
      %p1002 = scmp.ne.s32.totalorder %s994, %s996
      %p1003 = scmp.eq.s32.totalorder %s115, 1
      %p1004 = por %p1002, %p1003
      %p1005 = scmp.ne.s32.totalorder %s996, %s997
      %p1006 = scmp.eq.s32.totalorder %s115, 0
      %p1007 = por %p1005, %p1006
      %p1008 = scmp.ne.s32.totalorder %s996, %s997
      %p1009 = scmp.eq.s32.totalorder %s116, 1
      %p1010 = por %p1008, %p1009
      %p1012 = scmp.ne.s32.totalorder %s997, %s1011
      %p1013 = scmp.eq.s32.totalorder %s116, 0
      %p1014 = por %p1012, %p1013
      %s1015 = ssub.s32 %s110, %s117
      %p1016 = scmp.eq.s32.totalorder %s1015, 0
      %s1018 = sadd.s32 %s1017, 1
      %s1019 = scalar_select %p1016, %s1017, %s1018
      %p1022 = pneg %p1016
      %p1023 = scmp.eq.s32.totalorder %s110, 1
      %p1024 = por %p1022, %p1023
      %p1025 = scmp.ne.s32.totalorder %s1017, %s1020
      %p1026 = scmp.eq.s32.totalorder %s110, 0
      %p1027 = por %p1025, %p1026
      %p1028 = scmp.ne.s32.totalorder %s1017, %s1020
      %p1029 = scmp.eq.s32.totalorder %s115, 1
      %p1030 = por %p1028, %p1029
      %p1031 = scmp.ne.s32.totalorder %s1020, %s1021
      %p1032 = scmp.eq.s32.totalorder %s115, 0
      %p1033 = por %p1031, %p1032
      %p1034 = scmp.ne.s32.totalorder %s1020, %s1021
      %p1035 = scmp.eq.s32.totalorder %s116, 1
      %p1036 = por %p1034, %p1035
      %p1038 = scmp.ne.s32.totalorder %s1021, %s1037
      %p1039 = scmp.eq.s32.totalorder %s116, 0
      %p1040 = por %p1038, %p1039
      %s1041 = ssub.s32 %s110, %s117
      %p1042 = scmp.eq.s32.totalorder %s1041, 0
      %s1044 = sadd.s32 %s1043, 1
      %s1045 = scalar_select %p1042, %s1043, %s1044
      %p1048 = pneg %p1042
      %p1049 = scmp.eq.s32.totalorder %s110, 1
      %p1050 = por %p1048, %p1049
      %p1051 = scmp.ne.s32.totalorder %s1043, %s1046
      %p1052 = scmp.eq.s32.totalorder %s110, 0
      %p1053 = por %p1051, %p1052
      %p1054 = scmp.ne.s32.totalorder %s1043, %s1046
      %p1055 = scmp.eq.s32.totalorder %s115, 1
      %p1056 = por %p1054, %p1055
      %p1057 = scmp.ne.s32.totalorder %s1046, %s1047
      %p1058 = scmp.eq.s32.totalorder %s115, 0
      %p1059 = por %p1057, %p1058
      %p1060 = scmp.ne.s32.totalorder %s1046, %s1047
      %p1061 = scmp.eq.s32.totalorder %s116, 1
      %p1062 = por %p1060, %p1061
      %p1064 = scmp.ne.s32.totalorder %s1047, %s1063
      %p1065 = scmp.eq.s32.totalorder %s116, 0
      %p1066 = por %p1064, %p1065
      %s1067 = ssub.s32 %s110, %s117
      %p1068 = scmp.eq.s32.totalorder %s1067, 0
      %s1070 = sadd.s32 %s1069, 1
      %s1071 = scalar_select %p1068, %s1069, %s1070
      %p1074 = pneg %p1068
      %p1075 = scmp.eq.s32.totalorder %s110, 1
      %p1076 = por %p1074, %p1075
      %p1077 = scmp.ne.s32.totalorder %s1069, %s1072
      %p1078 = scmp.eq.s32.totalorder %s110, 0
      %p1079 = por %p1077, %p1078
      %p1080 = scmp.ne.s32.totalorder %s1069, %s1072
      %p1081 = scmp.eq.s32.totalorder %s115, 1
      %p1082 = por %p1080, %p1081
      %p1083 = scmp.ne.s32.totalorder %s1072, %s1073
      %p1084 = scmp.eq.s32.totalorder %s115, 0
      %p1085 = por %p1083, %p1084
      %p1086 = scmp.ne.s32.totalorder %s1072, %s1073
      %p1087 = scmp.eq.s32.totalorder %s116, 1
      %p1088 = por %p1086, %p1087
      %p1090 = scmp.ne.s32.totalorder %s1073, %s1089
      %p1091 = scmp.eq.s32.totalorder %s116, 0
      %p1092 = por %p1090, %p1091
      %p1093 = scmp.le.s32.totalorder 1, %s110
      %p1094 = scmp.lt.s32.totalorder %s110, 3
      %p1095 = pnand %p1093, %p1094
      %p1096 = pneg %p1095
      // Predicated region
      $region9: #{_lambda_.1} parent=5 // pred_check
        _
      $region10: #{_lambda_.1} parent=5 // pred_check_branch
        %1098 = sbr.rel (%p1095) target = $region12
      $region11: #{_lambda_.1} parent=5 // pred_region
        %s1099 = ssub.s32 %s110, 1
        // Predicated region
        $region13: #{_lambda_.1} parent=11 // pred_check
          %p1100 = pneg %p209
        $region14: #{_lambda_.1} parent=11 // pred_check_branch
          %1102 = sbr.rel (%p1100) target = $region16
        $region15: #{_lambda_.1} parent=11 // pred_region
          _
        $region16: #{_lambda_.1} parent=11 // pred_fallthru
          _
        // Predicated region
        $region17: #{_lambda_.1} parent=11 // pred_check
          %p1103 = pneg %p230
        $region18: #{_lambda_.1} parent=11 // pred_check_branch
          %1105 = sbr.rel (%p1103) target = $region20
        $region19: #{_lambda_.1} parent=11 // pred_region
          _
        $region20: #{_lambda_.1} parent=11 // pred_fallthru
          _
        // Predicated region
        $region21: #{_lambda_.1} parent=11 // pred_check
          %p1106 = pneg %p251
        $region22: #{_lambda_.1} parent=11 // pred_check_branch
          %1108 = sbr.rel (%p1106) target = $region24
        $region23: #{_lambda_.1} parent=11 // pred_region
          %s1110 = ssub.s32 32, 32
          %1111 = vsyncadd [#allocation5], %s1110
          %s1113 = sshll.u32 [#allocation4], 4
          %s1114 = int_to_ptr.vmem [resolvable:$true] %s1113
          %1116 = dma.hbm_to_vmem [thread:$0]  %s11, 32, %s1114, [#allocation5]
        $region24: #{_lambda_.1} parent=11 // pred_fallthru
          _
        // Predicated region
        $region25: #{_lambda_.1} parent=11 // pred_check
          %p1117 = pneg %p272
        $region26: #{_lambda_.1} parent=11 // pred_check_branch
          %1119 = sbr.rel (%p1117) target = $region28
        $region27: #{_lambda_.1} parent=11 // pred_region
          %s1121 = ssub.s32 128, 128
          %1122 = vsyncadd [#allocation5], %s1121
          %s1123 = sshll.u32 [#allocation6], 4
          %s1124 = int_to_ptr.vmem [resolvable:$true] %s1123
          %1129 = dma.hbm_to_vmem [thread:$0]  %s13, 128, %s1124, [#allocation5], 64, 64, 4
        $region28: #{_lambda_.1} parent=11 // pred_fallthru
          _
        // Predicated region
        $region29: #{_lambda_.1} parent=11 // pred_check
          %p1130 = pneg %p293
        $region30: #{_lambda_.1} parent=11 // pred_check_branch
          %1132 = sbr.rel (%p1130) target = $region32
        $region31: #{_lambda_.1} parent=11 // pred_region
          %s1134 = ssub.s32 16, 16
          %1135 = vsyncadd [#allocation8], %s1134
          %s1137 = sshll.u32 [#allocation7], 4
          %s1138 = int_to_ptr.vmem [resolvable:$true] %s1137
          %1140 = dma.hbm_to_vmem [thread:$0]  %s15, 16, %s1138, [#allocation8]
        $region32: #{_lambda_.1} parent=11 // pred_fallthru
          _
        // Predicated region
        $region33: #{_lambda_.1} parent=11 // pred_check
          %p1141 = pneg %p314
        $region34: #{_lambda_.1} parent=11 // pred_check_branch
          %1143 = sbr.rel (%p1141) target = $region36
        $region35: #{_lambda_.1} parent=11 // pred_region
          _
        $region36: #{_lambda_.1} parent=11 // pred_fallthru
          _
        // Predicated region
        $region37: #{_lambda_.1} parent=11 // pred_check
          %p1144 = pneg %p335
        $region38: #{_lambda_.1} parent=11 // pred_check_branch
          %1146 = sbr.rel (%p1144) target = $region40
        $region39: #{_lambda_.1} parent=11 // pred_region
          %s1148 = ssub.s32 16, 16
          %1149 = vsyncadd [#allocation8], %s1148
          %s1151 = sshll.u32 [#allocation9], 4
          %s1152 = int_to_ptr.vmem [resolvable:$true] %s1151
          %1154 = dma.hbm_to_vmem [thread:$0]  %s19, 16, %s1152, [#allocation8]
        $region40: #{_lambda_.1} parent=11 // pred_fallthru
          _
        // Predicated region
        $region41: #{_lambda_.1} parent=11 // pred_check
          %p1155 = pneg %p356
        $region42: #{_lambda_.1} parent=11 // pred_check_branch
          %1157 = sbr.rel (%p1155) target = $region44
        $region43: #{_lambda_.1} parent=11 // pred_region
          _
        $region44: #{_lambda_.1} parent=11 // pred_fallthru
          _
        // Predicated region
        $region45: #{_lambda_.1} parent=11 // pred_check
          %p1158 = pneg %p377
        $region46: #{_lambda_.1} parent=11 // pred_check_branch
          %1160 = sbr.rel (%p1158) target = $region48
        $region47: #{_lambda_.1} parent=11 // pred_region
          %s1162 = ssub.s32 16, 16
          %1163 = vsyncadd [#allocation11], %s1162
          %s1165 = sshll.u32 [#allocation10], 4
          %s1166 = int_to_ptr.vmem [resolvable:$true] %s1165
          %1168 = dma.hbm_to_vmem [thread:$0]  %s23, 16, %s1166, [#allocation11]
        $region48: #{_lambda_.1} parent=11 // pred_fallthru
          _
        // Predicated region
        $region49: #{_lambda_.1} parent=11 // pred_check
          %p1169 = pneg %p398
        $region50: #{_lambda_.1} parent=11 // pred_check_branch
          %1171 = sbr.rel (%p1169) target = $region52
        $region51: #{_lambda_.1} parent=11 // pred_region
          _
        $region52: #{_lambda_.1} parent=11 // pred_fallthru
          _
        // Predicated region
        $region53: #{_lambda_.1} parent=11 // pred_check
          %p1172 = pneg %p419
        $region54: #{_lambda_.1} parent=11 // pred_check_branch
          %1174 = sbr.rel (%p1172) target = $region56
        $region55: #{_lambda_.1} parent=11 // pred_region
          _
        $region56: #{_lambda_.1} parent=11 // pred_fallthru
          _
        // Predicated region
        $region57: #{_lambda_.1} parent=11 // pred_check
          %p1175 = pneg %p440
        $region58: #{_lambda_.1} parent=11 // pred_check_branch
          %1177 = sbr.rel (%p1175) target = $region60
        $region59: #{_lambda_.1} parent=11 // pred_region
          %s1179 = ssub.s32 16, 16
          %1180 = vsyncadd [#allocation11], %s1179
          %s1182 = sshll.u32 [#allocation12], 4
          %s1183 = int_to_ptr.vmem [resolvable:$true] %s1182
          %1185 = dma.hbm_to_vmem [thread:$0]  %s29, 16, %s1183, [#allocation11]
        $region60: #{_lambda_.1} parent=11 // pred_fallthru
          _
        // Predicated region
        $region61: #{_lambda_.1} parent=11 // pred_check
          %p1186 = pneg %p461
        $region62: #{_lambda_.1} parent=11 // pred_check_branch
          %1188 = sbr.rel (%p1186) target = $region64
        $region63: #{_lambda_.1} parent=11 // pred_region
          _
        $region64: #{_lambda_.1} parent=11 // pred_fallthru
          _
        // Predicated region
        $region65: #{_lambda_.1} parent=11 // pred_check
          %p1189 = pneg %p482
        $region66: #{_lambda_.1} parent=11 // pred_check_branch
          %1191 = sbr.rel (%p1189) target = $region68
        $region67: #{_lambda_.1} parent=11 // pred_region
          %s1193 = ssub.s32 16, 16
          %1194 = vsyncadd [#allocation14], %s1193
          %s1196 = sshll.u32 [#allocation13], 4
          %s1197 = int_to_ptr.vmem [resolvable:$true] %s1196
          %1199 = dma.hbm_to_vmem [thread:$0]  %s33, 16, %s1197, [#allocation14]
        $region68: #{_lambda_.1} parent=11 // pred_fallthru
          _
        // Predicated region
        $region69: #{_lambda_.1} parent=11 // pred_check
          %p1200 = pneg %p503
        $region70: #{_lambda_.1} parent=11 // pred_check_branch
          %1202 = sbr.rel (%p1200) target = $region72
        $region71: #{_lambda_.1} parent=11 // pred_region
          _
        $region72: #{_lambda_.1} parent=11 // pred_fallthru
          _
        // Predicated region
        $region73: #{_lambda_.1} parent=11 // pred_check
          %p1203 = pneg %p524
        $region74: #{_lambda_.1} parent=11 // pred_check_branch
          %1205 = sbr.rel (%p1203) target = $region76
        $region75: #{_lambda_.1} parent=11 // pred_region
          %s1207 = ssub.s32 16, 16
          %1208 = vsyncadd [#allocation14], %s1207
          %s1210 = sshll.u32 [#allocation15], 4
          %s1211 = int_to_ptr.vmem [resolvable:$true] %s1210
          %1213 = dma.hbm_to_vmem [thread:$0]  %s37, 16, %s1211, [#allocation14]
        $region76: #{_lambda_.1} parent=11 // pred_fallthru
          _
        // Predicated region
        $region77: #{_lambda_.1} parent=11 // pred_check
          %p1214 = pneg %p545
        $region78: #{_lambda_.1} parent=11 // pred_check_branch
          %1216 = sbr.rel (%p1214) target = $region80
        $region79: #{_lambda_.1} parent=11 // pred_region
          _
        $region80: #{_lambda_.1} parent=11 // pred_fallthru
          _
        // Predicated region
        $region81: #{_lambda_.1} parent=11 // pred_check
          %p1217 = pneg %p566
        $region82: #{_lambda_.1} parent=11 // pred_check_branch
          %1219 = sbr.rel (%p1217) target = $region84
        $region83: #{_lambda_.1} parent=11 // pred_region
          %s1221 = ssub.s32 16, 16
          %1222 = vsyncadd [#allocation17], %s1221
          %s1224 = sshll.u32 [#allocation16], 4
          %s1225 = int_to_ptr.vmem [resolvable:$true] %s1224
          %1227 = dma.hbm_to_vmem [thread:$0]  %s41, 16, %s1225, [#allocation17]
        $region84: #{_lambda_.1} parent=11 // pred_fallthru
          _
        // Predicated region
        $region85: #{_lambda_.1} parent=11 // pred_check
          %p1228 = pneg %p587
        $region86: #{_lambda_.1} parent=11 // pred_check_branch
          %1230 = sbr.rel (%p1228) target = $region88
        $region87: #{_lambda_.1} parent=11 // pred_region
          _
        $region88: #{_lambda_.1} parent=11 // pred_fallthru
          _
        // Predicated region
        $region89: #{_lambda_.1} parent=11 // pred_check
          %p1231 = pneg %p608
        $region90: #{_lambda_.1} parent=11 // pred_check_branch
          %1233 = sbr.rel (%p1231) target = $region92
        $region91: #{_lambda_.1} parent=11 // pred_region
          %s1235 = ssub.s32 16, 16
          %1236 = vsyncadd [#allocation17], %s1235
          %s1238 = sshll.u32 [#allocation18], 4
          %s1239 = int_to_ptr.vmem [resolvable:$true] %s1238
          %1241 = dma.hbm_to_vmem [thread:$0]  %s45, 16, %s1239, [#allocation17]
        $region92: #{_lambda_.1} parent=11 // pred_fallthru
          _
        // Predicated region
        $region93: #{_lambda_.1} parent=11 // pred_check
          %p1242 = pneg %p629
        $region94: #{_lambda_.1} parent=11 // pred_check_branch
          %1244 = sbr.rel (%p1242) target = $region96
        $region95: #{_lambda_.1} parent=11 // pred_region
          _
        $region96: #{_lambda_.1} parent=11 // pred_fallthru
          _
        // Predicated region
        $region97: #{_lambda_.1} parent=11 // pred_check
          %p1245 = pneg %p650
        $region98: #{_lambda_.1} parent=11 // pred_check_branch
          %1247 = sbr.rel (%p1245) target = $region100
        $region99: #{_lambda_.1} parent=11 // pred_region
          %s1249 = ssub.s32 16, 16
          %1250 = vsyncadd [#allocation20], %s1249
          %s1252 = sshll.u32 [#allocation19], 4
          %s1253 = int_to_ptr.vmem [resolvable:$true] %s1252
          %1255 = dma.hbm_to_vmem [thread:$0]  %s49, 16, %s1253, [#allocation20]
        $region100: #{_lambda_.1} parent=11 // pred_fallthru
          _
        // Predicated region
        $region101: #{_lambda_.1} parent=11 // pred_check
          %p1256 = pneg %p671
        $region102: #{_lambda_.1} parent=11 // pred_check_branch
          %1258 = sbr.rel (%p1256) target = $region104
        $region103: #{_lambda_.1} parent=11 // pred_region
          _
        $region104: #{_lambda_.1} parent=11 // pred_fallthru
          _
        // Predicated region
        $region105: #{_lambda_.1} parent=11 // pred_check
          %p1259 = pneg %p692
        $region106: #{_lambda_.1} parent=11 // pred_check_branch
          %1261 = sbr.rel (%p1259) target = $region108
        $region107: #{_lambda_.1} parent=11 // pred_region
          %s1263 = ssub.s32 256, 256
          %1264 = vsyncadd [#allocation20], %s1263
          %s1265 = sshll.u32 [#allocation21], 4
          %s1266 = int_to_ptr.vmem [resolvable:$true] %s1265
          %1271 = dma.hbm_to_vmem [thread:$0]  %s53, 256, %s1266, [#allocation20], 64, 64, 4
        $region108: #{_lambda_.1} parent=11 // pred_fallthru
          _
        // Predicated region
        $region109: #{_lambda_.1} parent=11 // pred_check
          %p1272 = pneg %p713
        $region110: #{_lambda_.1} parent=11 // pred_check_branch
          %1274 = sbr.rel (%p1272) target = $region112
        $region111: #{_lambda_.1} parent=11 // pred_region
          %s1276 = ssub.s32 256, 256
          %1277 = vsyncadd [#allocation23], %s1276
          %s1278 = sshll.u32 [#allocation22], 4
          %s1279 = int_to_ptr.vmem [resolvable:$true] %s1278
          %1284 = dma.hbm_to_vmem [thread:$0]  %s55, 256, %s1279, [#allocation23], 64, 64, 4
        $region112: #{_lambda_.1} parent=11 // pred_fallthru
          _
        // Predicated region
        $region113: #{_lambda_.1} parent=11 // pred_check
          %p1285 = pneg %p734
        $region114: #{_lambda_.1} parent=11 // pred_check_branch
          %1287 = sbr.rel (%p1285) target = $region116
        $region115: #{_lambda_.1} parent=11 // pred_region
          %s1289 = ssub.s32 16, 16
          %1290 = vsyncadd [#allocation23], %s1289
          %s1292 = sshll.u32 [#allocation24], 4
          %s1293 = int_to_ptr.vmem [resolvable:$true] %s1292
          %1295 = dma.hbm_to_vmem [thread:$0]  %s57, 16, %s1293, [#allocation23]
        $region116: #{_lambda_.1} parent=11 // pred_fallthru
          _
        // Predicated region
        $region117: #{_lambda_.1} parent=11 // pred_check
          %p1296 = pneg %p755
        $region118: #{_lambda_.1} parent=11 // pred_check_branch
          %1298 = sbr.rel (%p1296) target = $region120
        $region119: #{_lambda_.1} parent=11 // pred_region
          _
        $region120: #{_lambda_.1} parent=11 // pred_fallthru
          _
        // Predicated region
        $region121: #{_lambda_.1} parent=11 // pred_check
          %p1299 = pneg %p776
        $region122: #{_lambda_.1} parent=11 // pred_check_branch
          %1301 = sbr.rel (%p1299) target = $region124
        $region123: #{_lambda_.1} parent=11 // pred_region
          %s1303 = ssub.s32 16, 16
          %1304 = vsyncadd [#allocation26], %s1303
          %s1306 = sshll.u32 [#allocation25], 4
          %s1307 = int_to_ptr.vmem [resolvable:$true] %s1306
          %1309 = dma.hbm_to_vmem [thread:$0]  %s61, 16, %s1307, [#allocation26]
        $region124: #{_lambda_.1} parent=11 // pred_fallthru
          _
        // Predicated region
        $region125: #{_lambda_.1} parent=11 // pred_check
          %p1310 = pneg %p797
        $region126: #{_lambda_.1} parent=11 // pred_check_branch
          %1312 = sbr.rel (%p1310) target = $region128
        $region127: #{_lambda_.1} parent=11 // pred_region
          %s1314 = ssub.s32 256, 256
          %1315 = vsyncadd [#allocation26], %s1314
          %s1316 = sshll.u32 [#allocation27], 4
          %s1317 = int_to_ptr.vmem [resolvable:$true] %s1316
          %1322 = dma.hbm_to_vmem [thread:$0]  %s63, 256, %s1317, [#allocation26], 64, 64, 4
        $region128: #{_lambda_.1} parent=11 // pred_fallthru
          _
        // Predicated region
        $region129: #{_lambda_.1} parent=11 // pred_check
          %p1323 = pneg %p818
        $region130: #{_lambda_.1} parent=11 // pred_check_branch
          %1325 = sbr.rel (%p1323) target = $region132
        $region131: #{_lambda_.1} parent=11 // pred_region
          %s1327 = ssub.s32 16, 16
          %1328 = vsyncadd [#allocation29], %s1327
          %s1330 = sshll.u32 [#allocation28], 4
          %s1331 = int_to_ptr.vmem [resolvable:$true] %s1330
          %1333 = dma.hbm_to_vmem [thread:$0]  %s65, 16, %s1331, [#allocation29]
        $region132: #{_lambda_.1} parent=11 // pred_fallthru
          _
        // Predicated region
        $region133: #{_lambda_.1} parent=11 // pred_check
          %p1334 = pneg %p839
        $region134: #{_lambda_.1} parent=11 // pred_check_branch
          %1336 = sbr.rel (%p1334) target = $region136
        $region135: #{_lambda_.1} parent=11 // pred_region
          _
        $region136: #{_lambda_.1} parent=11 // pred_fallthru
          _
        // Predicated region
        $region137: #{_lambda_.1} parent=11 // pred_check
          %p1337 = pneg %p860
        $region138: #{_lambda_.1} parent=11 // pred_check_branch
          %1339 = sbr.rel (%p1337) target = $region140
        $region139: #{_lambda_.1} parent=11 // pred_region
          %s1341 = ssub.s32 256, 256
          %1342 = vsyncadd [#allocation29], %s1341
          %s1343 = sshll.u32 [#allocation30], 4
          %s1344 = int_to_ptr.vmem [resolvable:$true] %s1343
          %1349 = dma.hbm_to_vmem [thread:$0]  %s69, 256, %s1344, [#allocation29], 64, 64, 4
        $region140: #{_lambda_.1} parent=11 // pred_fallthru
          _
        // Predicated region
        $region141: #{_lambda_.1} parent=11 // pred_check
          %p1350 = pneg %p881
        $region142: #{_lambda_.1} parent=11 // pred_check_branch
          %1352 = sbr.rel (%p1350) target = $region144
        $region143: #{_lambda_.1} parent=11 // pred_region
          %s1354 = ssub.s32 16, 16
          %1355 = vsyncadd [#allocation32], %s1354
          %s1357 = sshll.u32 [#allocation31], 4
          %s1358 = int_to_ptr.vmem [resolvable:$true] %s1357
          %1360 = dma.hbm_to_vmem [thread:$0]  %s71, 16, %s1358, [#allocation32]
        $region144: #{_lambda_.1} parent=11 // pred_fallthru
          _
        // Predicated region
        $region145: #{_lambda_.1} parent=11 // pred_check
          %p1361 = pneg %p902
        $region146: #{_lambda_.1} parent=11 // pred_check_branch
          %1363 = sbr.rel (%p1361) target = $region148
        $region147: #{_lambda_.1} parent=11 // pred_region
          _
        $region148: #{_lambda_.1} parent=11 // pred_fallthru
          _
        // Predicated region
        $region149: #{_lambda_.1} parent=11 // pred_check
          %p1364 = pneg %p923
        $region150: #{_lambda_.1} parent=11 // pred_check_branch
          %1366 = sbr.rel (%p1364) target = $region152
        $region151: #{_lambda_.1} parent=11 // pred_region
          %s1368 = ssub.s32 16, 16
          %1369 = vsyncadd [#allocation32], %s1368
          %s1371 = sshll.u32 [#allocation33], 4
          %s1372 = int_to_ptr.vmem [resolvable:$true] %s1371
          %1374 = dma.hbm_to_vmem [thread:$0]  %s75, 16, %s1372, [#allocation32]
        $region152: #{_lambda_.1} parent=11 // pred_fallthru
          _
        // Predicated region
        $region153: #{_lambda_.1} parent=11 // pred_check
          %p1375 = pneg %p944
        $region154: #{_lambda_.1} parent=11 // pred_check_branch
          %1377 = sbr.rel (%p1375) target = $region156
        $region155: #{_lambda_.1} parent=11 // pred_region
          %s1379 = ssub.s32 256, 256
          %1380 = vsyncadd [#allocation35], %s1379
          %s1381 = sshll.u32 [#allocation34], 4
          %s1382 = int_to_ptr.vmem [resolvable:$true] %s1381
          %1387 = dma.hbm_to_vmem [thread:$0]  %s77, 256, %s1382, [#allocation35], 64, 64, 4
        $region156: #{_lambda_.1} parent=11 // pred_fallthru
          _
        // Predicated region
        $region157: #{_lambda_.1} parent=11 // pred_check
          %p1388 = pneg %p965
        $region158: #{_lambda_.1} parent=11 // pred_check_branch
          %1390 = sbr.rel (%p1388) target = $region160
        $region159: #{_lambda_.1} parent=11 // pred_region
          %s1392 = ssub.s32 16, 16
          %1393 = vsyncadd [#allocation35], %s1392
          %s1395 = sshll.u32 [#allocation36], 4
          %s1396 = int_to_ptr.vmem [resolvable:$true] %s1395
          %1398 = dma.hbm_to_vmem [thread:$0]  %s79, 16, %s1396, [#allocation35]
        $region160: #{_lambda_.1} parent=11 // pred_fallthru
          _
        // Predicated region
        $region161: #{_lambda_.1} parent=11 // pred_check
          %p1399 = pneg %p986
        $region162: #{_lambda_.1} parent=11 // pred_check_branch
          %1401 = sbr.rel (%p1399) target = $region164
        $region163: #{_lambda_.1} parent=11 // pred_region
          _
        $region164: #{_lambda_.1} parent=11 // pred_fallthru
          _
        // Predicated region
        $region165: #{_lambda_.1} parent=11 // pred_check
          %p1402 = pneg %p1007
        $region166: #{_lambda_.1} parent=11 // pred_check_branch
          %1404 = sbr.rel (%p1402) target = $region168
        $region167: #{_lambda_.1} parent=11 // pred_region
          _
        $region168: #{_lambda_.1} parent=11 // pred_fallthru
          _
      $region12: #{_lambda_.1} parent=5 // pred_fallthru
        _
      %p1405 = scmp.lt.s32.totalorder %s110, 2
      // Predicated region
      $region169: #{_lambda_.1} parent=5 // pred_check
        %p1406 = pneg %p1405
      $region170: #{_lambda_.1} parent=5 // pred_check_branch
        %1408 = sbr.rel (%p1406) target = $region172
      $region171: #{_lambda_.1} parent=5 // pred_region
        // Predicated region
        $region173: #{_lambda_.1} parent=171 // pred_check
          %p1409 = pneg %p130
        $region174: #{_lambda_.1} parent=171 // pred_check_branch
          %1411 = sbr.rel (%p1409) target = $region176
        $region175: #{_lambda_.1} parent=171 // pred_region
          %s1412 = sand.u32 %s120, 1
          %s1413 = scalar_lea.sflag [#allocation3], %s1412
          %s1414 = sand.u32 %s120, 1
          %s1415 = smul.addr %s1414, 4
          %s1416 = scalar_lea.vmem [#allocation2], %s1415
          %s1418 = ssub.s32 64, 64
          %1419 = vsyncadd %s1413, %s1418
          %s1420 = smul.addr %s110, 64
          %s1421 = scalar_lea.hbm %s1, %s1420
          %s1423 = sshll.u32 %s1416, 4
          %s1424 = int_to_ptr.vmem [resolvable:$true] %s1423
          %1426 = dma.hbm_to_vmem [thread:$0]  %s1421, 64, %s1424, %s1413
        $region176: #{_lambda_.1} parent=171 // pred_fallthru
          _
        // Predicated region
        $region177: #{_lambda_.1} parent=171 // pred_check
          %p1427 = pneg %p156
        $region178: #{_lambda_.1} parent=171 // pred_check_branch
          %1429 = sbr.rel (%p1427) target = $region180
        $region179: #{_lambda_.1} parent=171 // pred_region
          %p1430 = scmp.lt.s32.totalorder %s110, 1
          %s1431 = scalar_select %p1430, %s110, 1
          %s1432 = smul.addr %s1431, 2
          %s1433 = smul.addr %s1432, 8
          %s1434 = scalar_lea.vmem %s3, %s1433
        $region180: #{_lambda_.1} parent=171 // pred_fallthru
          _
        // Predicated region
        $region181: #{_lambda_.1} parent=171 // pred_check
          %p1435 = pneg %p182
        $region182: #{_lambda_.1} parent=171 // pred_check_branch
          %1437 = sbr.rel (%p1435) target = $region184
        $region183: #{_lambda_.1} parent=171 // pred_region
          %p1438 = scmp.lt.s32.totalorder %s110, 1
          %s1439 = scalar_select %p1438, %s110, 1
          %s1440 = smul.addr %s1439, 2
          %s1441 = smul.addr %s1440, 8
          %s1442 = scalar_lea.vmem %s5, %s1441
        $region184: #{_lambda_.1} parent=171 // pred_fallthru
          _
      $region172: #{_lambda_.1} parent=5 // pred_fallthru
        _
      %p1443 = scmp.le.s32.totalorder 1, %s110
      %p1444 = scmp.lt.s32.totalorder %s110, 3
      %p1445 = pnand %p1443, %p1444
      %p1446 = pneg %p1445
      // Predicated region
      $region185: #{_lambda_.1} parent=5 // pred_check
        _
      $region186: #{_lambda_.1} parent=5 // pred_check_branch
        %1448 = sbr.rel (%p1445) target = $region188
      $region187: #{_lambda_.1} parent=5 // pred_region
        %s1449 = ssub.s32 %s110, 1
        %s1450 = sand.u32 %s123, 1
        %s1451 = scalar_lea.sflag [#allocation3], %s1450
        %s1452 = sand.u32 %s123, 1
        %s1453 = smul.addr %s1452, 4
        %s1454 = scalar_lea.vmem [#allocation2], %s1453
        // Predicated region
        $region189: #{_lambda_.1} parent=187 // pred_check
          %p1455 = pneg %p136
        $region190: #{_lambda_.1} parent=187 // pred_check_branch
          %1457 = sbr.rel (%p1455) target = $region192
        $region191: #{_lambda_.1} parent=187 // pred_region
          %1458 = dma.done %s1451, 64
        $region192: #{_lambda_.1} parent=187 // pred_fallthru
          _
        // Predicated region
        $region193: #{_lambda_.1} parent=187 // pred_check
          %p1459 = pneg %p251
        $region194: #{_lambda_.1} parent=187 // pred_check_branch
          %1461 = sbr.rel (%p1459) target = $region196
        $region195: #{_lambda_.1} parent=187 // pred_region
          %1462 = dma.done [#allocation5], 32
        $region196: #{_lambda_.1} parent=187 // pred_fallthru
          _
        // Predicated region
        $region197: #{_lambda_.1} parent=187 // pred_check
          %p1463 = pneg %p272
        $region198: #{_lambda_.1} parent=187 // pred_check_branch
          %1465 = sbr.rel (%p1463) target = $region200
        $region199: #{_lambda_.1} parent=187 // pred_region
          %1466 = dma.done [#allocation5], 128
        $region200: #{_lambda_.1} parent=187 // pred_fallthru
          _
        // Predicated region
        $region201: #{_lambda_.1} parent=187 // pred_check
          %p1467 = pneg %p293
        $region202: #{_lambda_.1} parent=187 // pred_check_branch
          %1469 = sbr.rel (%p1467) target = $region204
        $region203: #{_lambda_.1} parent=187 // pred_region
          %1470 = dma.done [#allocation8], 16
        $region204: #{_lambda_.1} parent=187 // pred_fallthru
          _
        // Predicated region
        $region205: #{_lambda_.1} parent=187 // pred_check
          %p1471 = pneg %p335
        $region206: #{_lambda_.1} parent=187 // pred_check_branch
          %1473 = sbr.rel (%p1471) target = $region208
        $region207: #{_lambda_.1} parent=187 // pred_region
          %1474 = dma.done [#allocation8], 16
        $region208: #{_lambda_.1} parent=187 // pred_fallthru
          _
        // Predicated region
        $region209: #{_lambda_.1} parent=187 // pred_check
          %p1475 = pneg %p377
        $region210: #{_lambda_.1} parent=187 // pred_check_branch
          %1477 = sbr.rel (%p1475) target = $region212
        $region211: #{_lambda_.1} parent=187 // pred_region
          %1478 = dma.done [#allocation11], 16
        $region212: #{_lambda_.1} parent=187 // pred_fallthru
          _
        // Predicated region
        $region213: #{_lambda_.1} parent=187 // pred_check
          %p1479 = pneg %p440
        $region214: #{_lambda_.1} parent=187 // pred_check_branch
          %1481 = sbr.rel (%p1479) target = $region216
        $region215: #{_lambda_.1} parent=187 // pred_region
          %1482 = dma.done [#allocation11], 16
        $region216: #{_lambda_.1} parent=187 // pred_fallthru
          _
        // Predicated region
        $region217: #{_lambda_.1} parent=187 // pred_check
          %p1483 = pneg %p482
        $region218: #{_lambda_.1} parent=187 // pred_check_branch
          %1485 = sbr.rel (%p1483) target = $region220
        $region219: #{_lambda_.1} parent=187 // pred_region
          %1486 = dma.done [#allocation14], 16
        $region220: #{_lambda_.1} parent=187 // pred_fallthru
          _
        // Predicated region
        $region221: #{_lambda_.1} parent=187 // pred_check
          %p1487 = pneg %p524
        $region222: #{_lambda_.1} parent=187 // pred_check_branch
          %1489 = sbr.rel (%p1487) target = $region224
        $region223: #{_lambda_.1} parent=187 // pred_region
          %1490 = dma.done [#allocation14], 16
        $region224: #{_lambda_.1} parent=187 // pred_fallthru
          _
        // Predicated region
        $region225: #{_lambda_.1} parent=187 // pred_check
          %p1491 = pneg %p566
        $region226: #{_lambda_.1} parent=187 // pred_check_branch
          %1493 = sbr.rel (%p1491) target = $region228
        $region227: #{_lambda_.1} parent=187 // pred_region
          %1494 = dma.done [#allocation17], 16
        $region228: #{_lambda_.1} parent=187 // pred_fallthru
          _
        // Predicated region
        $region229: #{_lambda_.1} parent=187 // pred_check
          %p1495 = pneg %p608
        $region230: #{_lambda_.1} parent=187 // pred_check_branch
          %1497 = sbr.rel (%p1495) target = $region232
        $region231: #{_lambda_.1} parent=187 // pred_region
          %1498 = dma.done [#allocation17], 16
        $region232: #{_lambda_.1} parent=187 // pred_fallthru
          _
        // Predicated region
        $region233: #{_lambda_.1} parent=187 // pred_check
          %p1499 = pneg %p650
        $region234: #{_lambda_.1} parent=187 // pred_check_branch
          %1501 = sbr.rel (%p1499) target = $region236
        $region235: #{_lambda_.1} parent=187 // pred_region
          %1502 = dma.done [#allocation20], 16
        $region236: #{_lambda_.1} parent=187 // pred_fallthru
          _
        // Predicated region
        $region237: #{_lambda_.1} parent=187 // pred_check
          %p1503 = pneg %p692
        $region238: #{_lambda_.1} parent=187 // pred_check_branch
          %1505 = sbr.rel (%p1503) target = $region240
        $region239: #{_lambda_.1} parent=187 // pred_region
          %1506 = dma.done [#allocation20], 256
        $region240: #{_lambda_.1} parent=187 // pred_fallthru
          _
        // Predicated region
        $region241: #{_lambda_.1} parent=187 // pred_check
          %p1507 = pneg %p713
        $region242: #{_lambda_.1} parent=187 // pred_check_branch
          %1509 = sbr.rel (%p1507) target = $region244
        $region243: #{_lambda_.1} parent=187 // pred_region
          %1510 = dma.done [#allocation23], 256
        $region244: #{_lambda_.1} parent=187 // pred_fallthru
          _
        // Predicated region
        $region245: #{_lambda_.1} parent=187 // pred_check
          %p1511 = pneg %p734
        $region246: #{_lambda_.1} parent=187 // pred_check_branch
          %1513 = sbr.rel (%p1511) target = $region248
        $region247: #{_lambda_.1} parent=187 // pred_region
          %1514 = dma.done [#allocation23], 16
        $region248: #{_lambda_.1} parent=187 // pred_fallthru
          _
        // Predicated region
        $region249: #{_lambda_.1} parent=187 // pred_check
          %p1515 = pneg %p776
        $region250: #{_lambda_.1} parent=187 // pred_check_branch
          %1517 = sbr.rel (%p1515) target = $region252
        $region251: #{_lambda_.1} parent=187 // pred_region
          %1518 = dma.done [#allocation26], 16
        $region252: #{_lambda_.1} parent=187 // pred_fallthru
          _
        // Predicated region
        $region253: #{_lambda_.1} parent=187 // pred_check
          %p1519 = pneg %p797
        $region254: #{_lambda_.1} parent=187 // pred_check_branch
          %1521 = sbr.rel (%p1519) target = $region256
        $region255: #{_lambda_.1} parent=187 // pred_region
          %1522 = dma.done [#allocation26], 256
        $region256: #{_lambda_.1} parent=187 // pred_fallthru
          _
        // Predicated region
        $region257: #{_lambda_.1} parent=187 // pred_check
          %p1523 = pneg %p818
        $region258: #{_lambda_.1} parent=187 // pred_check_branch
          %1525 = sbr.rel (%p1523) target = $region260
        $region259: #{_lambda_.1} parent=187 // pred_region
          %1526 = dma.done [#allocation29], 16
        $region260: #{_lambda_.1} parent=187 // pred_fallthru
          _
        // Predicated region
        $region261: #{_lambda_.1} parent=187 // pred_check
          %p1527 = pneg %p860
        $region262: #{_lambda_.1} parent=187 // pred_check_branch
          %1529 = sbr.rel (%p1527) target = $region264
        $region263: #{_lambda_.1} parent=187 // pred_region
          %1530 = dma.done [#allocation29], 256
        $region264: #{_lambda_.1} parent=187 // pred_fallthru
          _
        // Predicated region
        $region265: #{_lambda_.1} parent=187 // pred_check
          %p1531 = pneg %p881
        $region266: #{_lambda_.1} parent=187 // pred_check_branch
          %1533 = sbr.rel (%p1531) target = $region268
        $region267: #{_lambda_.1} parent=187 // pred_region
          %1534 = dma.done [#allocation32], 16
        $region268: #{_lambda_.1} parent=187 // pred_fallthru
          _
        // Predicated region
        $region269: #{_lambda_.1} parent=187 // pred_check
          %p1535 = pneg %p923
        $region270: #{_lambda_.1} parent=187 // pred_check_branch
          %1537 = sbr.rel (%p1535) target = $region272
        $region271: #{_lambda_.1} parent=187 // pred_region
          %1538 = dma.done [#allocation32], 16
        $region272: #{_lambda_.1} parent=187 // pred_fallthru
          _
        // Predicated region
        $region273: #{_lambda_.1} parent=187 // pred_check
          %p1539 = pneg %p944
        $region274: #{_lambda_.1} parent=187 // pred_check_branch
          %1541 = sbr.rel (%p1539) target = $region276
        $region275: #{_lambda_.1} parent=187 // pred_region
          %1542 = dma.done [#allocation35], 256
        $region276: #{_lambda_.1} parent=187 // pred_fallthru
          _
        // Predicated region
        $region277: #{_lambda_.1} parent=187 // pred_check
          %p1543 = pneg %p965
        $region278: #{_lambda_.1} parent=187 // pred_check_branch
          %1545 = sbr.rel (%p1543) target = $region280
        $region279: #{_lambda_.1} parent=187 // pred_region
          %1546 = dma.done [#allocation35], 16
        $region280: #{_lambda_.1} parent=187 // pred_fallthru
          _
        %s1547 = sand.u32 %s123, 1
        %s1548 = scalar_lea.sflag [#allocation3], %s1547
        %s1549 = sand.u32 %s123, 1
        %s1550 = smul.addr %s1549, 4
        %s1551 = scalar_lea.vmem [#allocation2], %s1550
        %p1552 = pneg %p136
        %p1553 = pneg %p133
        %p1554 = scmp.lt.s32.totalorder %s115, 1
        %s1555 = scalar_select %p1554, %s115, 1
        %s1556 = smul.addr %s1555, 2
        %s1557 = smul.addr %s1556, 8
        %s1558 = scalar_lea.vmem %s3, %s1557
        %p1559 = pneg %p162
        %p1560 = pneg %p159
        %p1561 = scmp.lt.s32.totalorder %s115, 1
        %s1562 = scalar_select %p1561, %s115, 1
        %s1563 = smul.addr %s1562, 2
        %s1564 = smul.addr %s1563, 8
        %s1565 = scalar_lea.vmem %s5, %s1564
        %p1566 = pneg %p188
        %p1567 = pneg %p185
        %p1568 = pneg %p209
        %p1569 = pneg %p206
        %p1570 = pneg %p230
        %p1571 = pneg %p227
        %p1572 = pneg %p251
        %p1573 = pneg %p248
        %p1574 = pneg %p272
        %p1575 = pneg %p269
        %p1576 = pneg %p293
        %p1577 = pneg %p290
        %p1578 = pneg %p314
        %p1579 = pneg %p311
        %p1580 = pneg %p335
        %p1581 = pneg %p332
        %p1582 = pneg %p356
        %p1583 = pneg %p353
        %p1584 = pneg %p377
        %p1585 = pneg %p374
        %p1586 = pneg %p398
        %p1587 = pneg %p395
        %p1588 = pneg %p419
        %p1589 = pneg %p416
        %p1590 = pneg %p440
        %p1591 = pneg %p437
        %p1592 = pneg %p461
        %p1593 = pneg %p458
        %p1594 = pneg %p482
        %p1595 = pneg %p479
        %p1596 = pneg %p503
        %p1597 = pneg %p500
        %p1598 = pneg %p524
        %p1599 = pneg %p521
        %p1600 = pneg %p545
        %p1601 = pneg %p542
        %p1602 = pneg %p566
        %p1603 = pneg %p563
        %p1604 = pneg %p587
        %p1605 = pneg %p584
        %p1606 = pneg %p608
        %p1607 = pneg %p605
        %p1608 = pneg %p629
        %p1609 = pneg %p626
        %p1610 = pneg %p650
        %p1611 = pneg %p647
        %p1612 = pneg %p671
        %p1613 = pneg %p668
        %p1614 = pneg %p692
        %p1615 = pneg %p689
        %p1616 = pneg %p713
        %p1617 = pneg %p710
        %p1618 = pneg %p734
        %p1619 = pneg %p731
        %p1620 = pneg %p755
        %p1621 = pneg %p752
        %p1622 = pneg %p776
        %p1623 = pneg %p773
        %p1624 = pneg %p797
        %p1625 = pneg %p794
        %p1626 = pneg %p818
        %p1627 = pneg %p815
        %p1628 = pneg %p839
        %p1629 = pneg %p836
        %p1630 = pneg %p860
        %p1631 = pneg %p857
        %p1632 = pneg %p881
        %p1633 = pneg %p878
        %p1634 = pneg %p902
        %p1635 = pneg %p899
        %p1636 = pneg %p923
        %p1637 = pneg %p920
        %p1638 = pneg %p944
        %p1639 = pneg %p941
        %p1640 = pneg %p965
        %p1641 = pneg %p962
        %p1642 = pneg %p986
        %p1643 = pneg %p983
        %p1644 = pneg %p1007
        %p1645 = pneg %p1004
        %p1646 = pneg %p1033
        %p1647 = pneg %p1030
        %p1648 = scmp.lt.s32.totalorder %s115, 1
        %s1649 = scalar_select %p1648, %s115, 1
        %s1650 = smul.addr %s1649, 2
        %s1651 = smul.addr %s1650, 8
        %s1652 = scalar_lea.vmem %s85, %s1651
        %p1653 = pneg %p1059
        %p1654 = pneg %p1056
        %p1655 = scmp.lt.s32.totalorder %s115, 1
        %s1656 = scalar_select %p1655, %s115, 1
        %s1657 = smul.addr %s1656, 2
        %s1658 = smul.addr %s1657, 8
        %s1659 = scalar_lea.vmem %s87, %s1658
        %p1660 = pneg %p1085
        %p1661 = pneg %p1082
        %p1662 = scmp.lt.s32.totalorder %s115, 1
        %s1663 = scalar_select %p1662, %s115, 1
        %s1664 = smul.addr %s1663, 2
        %s1665 = smul.addr %s1664, 8
        %s1666 = scalar_lea.vmem %s89, %s1665
        %p1667 = scmp.lt.s32.totalorder %s115, 1
        %s1668 = scalar_select %p1667, %s115, 1
        %s1669 = smul.addr %s1668, 2
        %s1670 = smul.addr %s1669, 8
        %s1671 = scalar_lea.vmem %s3, %s1670
        %p1672 = scmp.lt.s32.totalorder %s115, 1
        %s1673 = scalar_select %p1672, %s115, 1
        %s1674 = smul.addr %s1673, 2
        %s1675 = smul.addr %s1674, 8
        %s1676 = scalar_lea.vmem %s5, %s1675
        %p1677 = scmp.lt.s32.totalorder %s115, 1
        %s1678 = scalar_select %p1677, %s115, 1
        %s1679 = smul.addr %s1678, 2
        %s1680 = smul.addr %s1679, 8
        %s1681 = scalar_lea.vmem %s85, %s1680
        %p1682 = scmp.lt.s32.totalorder %s115, 1
        %s1683 = scalar_select %p1682, %s115, 1
        %s1684 = smul.addr %s1683, 2
        %s1685 = smul.addr %s1684, 8
        %s1686 = scalar_lea.vmem %s87, %s1685
        %p1687 = scmp.lt.s32.totalorder %s115, 1
        %s1688 = scalar_select %p1687, %s115, 1
        %s1689 = smul.addr %s1688, 2
        %s1690 = smul.addr %s1689, 8
        %s1691 = scalar_lea.vmem %s89, %s1690
        %v1693 = vld [vmem:[%s1454] sm:$0xf]
        %v1694 = vld [vmem:[%s1671] sm:$0xff]
        %v1695 = vld [vmem:[%s1671 + $0x8] sm:$0xf]
        %v1696 = vld [vmem:[%s1676] sm:$0xff]
        %v1697 = vld [vmem:[%s1676 + $0x8] sm:$0xf]
        %v1698 = vld [vmem:[%s7] sm:$0xf]
        %v1699 = vld [vmem:[%s7 + $0x4] sm:$0x3]
        %v1700 = vld [vmem:[%s9] sm:$0xf]
        %v1701 = vld [vmem:[%s9 + $0x4] sm:$0x3]
        %v1702 = vld [vmem:[#allocation4] sm:$0x3]
        %v1703 = vld [vmem:[#allocation6] sm:$0xf]
        %v1704 = vld [vmem:[#allocation6 + $0x4] sm:$0xf]
        %v1705 = vpack.c.bf16 %v1693, %v1693
        %v1706 = vld [vmem:[#allocation7] sm:$0x1]
        %v1708 = vlaneseq
        %v1709 = vshrl.u32 %v1708, 7
        %v1710 = vsub.s32 0, %v1709
        %v1711 = vrot.slane %v1706, %v1710
        %v1715 = vunpack.c.l.b16 %v1703
        %v1716 = vunpack.c.l.b16 %v1704
        %v1717 = vpack.c.b16 %v1716, %v1715
        %vm1719 = vcmask 130048
        %v1721 = vsel %vm1719, %v1705, 0
        %1723 = vmatprep.subr.bf16.mxu0 0
        %1724 = vmatpush1.bf16.msra.mxu0 %v1717
        %1725 = vmatprep.subr.bf16.mxu0 0
        %1726 = vmatpush1.bf16.msra.mxu0 0
        %1727 = vmatprep.subr.bf16.mxu0 0
        %1728 = vmatpush1.bf16.msra.mxu0 0
        %1729 = vmatprep.subr.bf16.mxu0 0
        %1730 = vmatpush1.bf16.msra.mxu0 0
        %1731 = vmatprep.subr.bf16.mxu0 0
        %1732 = vmatpush1.bf16.msra.mxu0 0
        %1733 = vmatprep.subr.bf16.mxu0 0
        %1734 = vmatpush1.bf16.msra.mxu0 0
        %1735 = vmatprep.subr.bf16.mxu0 0
        %1736 = vmatpush1.bf16.msra.mxu0 0
        %1737 = vmatprep.subr.bf16.mxu0 0
        %1738 = vmatpush1.bf16.msra.mxu0 0
        %1739 = vmatprep.subr.bf16.mxu0 0
        %1740 = vmatpush1.bf16.msra.mxu0 0
        %1741 = vmatprep.subr.bf16.mxu0 0
        %1742 = vmatpush1.bf16.msra.mxu0 0
        %1743 = vmatprep.subr.bf16.mxu0 0
        %1744 = vmatpush1.bf16.msra.mxu0 0
        %1745 = vmatprep.subr.bf16.mxu0 0
        %1746 = vmatpush1.bf16.msra.mxu0 0
        %1747 = vmatprep.subr.bf16.mxu0 0
        %1748 = vmatpush1.bf16.msra.mxu0 0
        %1749 = vmatprep.subr.bf16.mxu0 0
        %1750 = vmatpush1.bf16.msra.mxu0 0
        %1751 = vmatprep.subr.bf16.mxu0 0
        %1752 = vmatpush1.bf16.msra.mxu0 0
        %1753 = vmatprep.subr.bf16.mxu0 0
        %1754 = vmatpush1.bf16.msra.mxu0 0
        %1755 = vmatprep.mubr.bf16.mxu0 0
        %1756 = vmatmul.mubr.bf16.gmra.mrb[0].mxu0 %v1721
        %v1757 = vpop.f32.mrb[0].mxu0
        %v1758 = vadd.f32 %v1711, %v1757
        %v1759 = vpop.f32.mrb[0].mxu0
        %v1760 = vpop.f32.mrb[0].mxu0
        %v1761 = vpop.f32.mrb[0].mxu0
        %1762 = vdwg.mxu0
        %v1763 = vmax.f32 %v1758, 0.0
        %v1764 = vld [vmem:[%s17] sm:$0xf]
        %v1765 = vld [vmem:[%s17 + $0x4] sm:$0xf]
        %v1766 = vld [vmem:[%s17 + $0x8] sm:$0xf]
        %v1767 = vld [vmem:[%s17 + $0xc] sm:$0xf]
        %v1768 = vpack.c.bf16 %v1763, %v1763
        %v1769 = vld [vmem:[#allocation9] sm:$0x1]
        %v1771 = vlaneseq
        %v1772 = vshrl.u32 %v1771, 7
        %v1773 = vsub.s32 0, %v1772
        %v1774 = vrot.slane %v1769, %v1773
        %v1780 = vunpack.c.l.b16 %v1764
        %v1781 = vunpack.c.l.b16 %v1765
        %v1782 = vunpack.c.l.b16 %v1766
        %v1783 = vunpack.c.l.b16 %v1767
        %v1784 = vpack.c.b16 %v1781, %v1780
        %v1785 = vpack.c.b16 %v1783, %v1782
        %vm1788 = vcmask 261120
        %v1790 = vsel %vm1788, %v1768, 0
        %1792 = vmatprep.subr.bf16.mxu0 0
        %1793 = vmatpush1.bf16.msra.mxu0 %v1784
        %1794 = vmatprep.subr.bf16.mxu0 0
        %1795 = vmatpush1.bf16.msra.mxu0 %v1785
        %1796 = vmatprep.subr.bf16.mxu0 0
        %1797 = vmatpush1.bf16.msra.mxu0 0
        %1798 = vmatprep.subr.bf16.mxu0 0
        %1799 = vmatpush1.bf16.msra.mxu0 0
        %1800 = vmatprep.subr.bf16.mxu0 0
        %1801 = vmatpush1.bf16.msra.mxu0 0
        %1802 = vmatprep.subr.bf16.mxu0 0
        %1803 = vmatpush1.bf16.msra.mxu0 0
        %1804 = vmatprep.subr.bf16.mxu0 0
        %1805 = vmatpush1.bf16.msra.mxu0 0
        %1806 = vmatprep.subr.bf16.mxu0 0
        %1807 = vmatpush1.bf16.msra.mxu0 0
        %1808 = vmatprep.subr.bf16.mxu0 0
        %1809 = vmatpush1.bf16.msra.mxu0 0
        %1810 = vmatprep.subr.bf16.mxu0 0
        %1811 = vmatpush1.bf16.msra.mxu0 0
        %1812 = vmatprep.subr.bf16.mxu0 0
        %1813 = vmatpush1.bf16.msra.mxu0 0
        %1814 = vmatprep.subr.bf16.mxu0 0
        %1815 = vmatpush1.bf16.msra.mxu0 0
        %1816 = vmatprep.subr.bf16.mxu0 0
        %1817 = vmatpush1.bf16.msra.mxu0 0
        %1818 = vmatprep.subr.bf16.mxu0 0
        %1819 = vmatpush1.bf16.msra.mxu0 0
        %1820 = vmatprep.subr.bf16.mxu0 0
        %1821 = vmatpush1.bf16.msra.mxu0 0
        %1822 = vmatprep.subr.bf16.mxu0 0
        %1823 = vmatpush1.bf16.msra.mxu0 0
        %1824 = vmatprep.mubr.bf16.mxu0 0
        %1825 = vmatmul.mubr.bf16.gmra.mrb[0].mxu0 %v1790
        %v1826 = vpop.f32.mrb[0].mxu0
        %v1827 = vadd.f32 %v1774, %v1826
        %v1828 = vpop.f32.mrb[0].mxu0
        %v1829 = vpop.f32.mrb[0].mxu0
        %v1830 = vpop.f32.mrb[0].mxu0
        %1831 = vdwg.mxu0
        %v1832 = vmax.f32 %v1827, 0.0
        %v1833 = vld [vmem:[%s21] sm:$0xf]
        %v1834 = vld [vmem:[%s21 + $0x4] sm:$0xf]
        %v1835 = vld [vmem:[%s21 + $0x8] sm:$0xf]
        %v1836 = vld [vmem:[%s21 + $0xc] sm:$0xf]
        %v1837 = vpack.c.bf16 %v1832, %v1832
        %v1838 = vld [vmem:[#allocation10] sm:$0x1]
        %v1840 = vlaneseq
        %v1841 = vshrl.u32 %v1840, 7
        %v1842 = vsub.s32 0, %v1841
        %v1843 = vrot.slane %v1838, %v1842
        %v1849 = vunpack.c.l.b16 %v1833
        %v1850 = vunpack.c.l.b16 %v1834
        %v1851 = vunpack.c.l.b16 %v1835
        %v1852 = vunpack.c.l.b16 %v1836
        %v1853 = vpack.c.b16 %v1850, %v1849
        %v1854 = vpack.c.b16 %v1852, %v1851
        %v1858 = vsel %vm1788, %v1837, 0
        %1860 = vmatprep.subr.bf16.mxu0 0
        %1861 = vmatpush1.bf16.msra.mxu0 %v1853
        %1862 = vmatprep.subr.bf16.mxu0 0
        %1863 = vmatpush1.bf16.msra.mxu0 %v1854
        %1864 = vmatprep.subr.bf16.mxu0 0
        %1865 = vmatpush1.bf16.msra.mxu0 0
        %1866 = vmatprep.subr.bf16.mxu0 0
        %1867 = vmatpush1.bf16.msra.mxu0 0
        %1868 = vmatprep.subr.bf16.mxu0 0
        %1869 = vmatpush1.bf16.msra.mxu0 0
        %1870 = vmatprep.subr.bf16.mxu0 0
        %1871 = vmatpush1.bf16.msra.mxu0 0
        %1872 = vmatprep.subr.bf16.mxu0 0
        %1873 = vmatpush1.bf16.msra.mxu0 0
        %1874 = vmatprep.subr.bf16.mxu0 0
        %1875 = vmatpush1.bf16.msra.mxu0 0
        %1876 = vmatprep.subr.bf16.mxu0 0
        %1877 = vmatpush1.bf16.msra.mxu0 0
        %1878 = vmatprep.subr.bf16.mxu0 0
        %1879 = vmatpush1.bf16.msra.mxu0 0
        %1880 = vmatprep.subr.bf16.mxu0 0
        %1881 = vmatpush1.bf16.msra.mxu0 0
        %1882 = vmatprep.subr.bf16.mxu0 0
        %1883 = vmatpush1.bf16.msra.mxu0 0
        %1884 = vmatprep.subr.bf16.mxu0 0
        %1885 = vmatpush1.bf16.msra.mxu0 0
        %1886 = vmatprep.subr.bf16.mxu0 0
        %1887 = vmatpush1.bf16.msra.mxu0 0
        %1888 = vmatprep.subr.bf16.mxu0 0
        %1889 = vmatpush1.bf16.msra.mxu0 0
        %1890 = vmatprep.subr.bf16.mxu0 0
        %1891 = vmatpush1.bf16.msra.mxu0 0
        %1892 = vmatprep.mubr.bf16.mxu0 0
        %1893 = vmatmul.mubr.bf16.gmra.mrb[0].mxu0 %v1858
        %v1894 = vpop.f32.mrb[0].mxu0
        %v1895 = vadd.f32 %v1843, %v1894
        %v1896 = vpop.f32.mrb[0].mxu0
        %v1897 = vpop.f32.mrb[0].mxu0
        %v1898 = vpop.f32.mrb[0].mxu0
        %1899 = vdwg.mxu0
        %v1900 = vpack.c.bf16 %v1895, %v1895
        %v1903 = vunpack.c.l.b16 %v1698
        %v1904 = vunpack.c.l.b16 %v1699
        %v1905 = vpack.c.b16 %v1904, %v1903
        %vm1906 = vcmask 31744
        %v1908 = vsel %vm1906, %v1905, 0
        %vm1910 = vcmask 1041408
        %v1912 = vsel %vm1910, %v1900, 0
        %1914 = vmatprep.subr.bf16.mxu0 0
        %1915 = vmatpush1.bf16.msra.mxu0 %v1912
        %1916 = vmatprep.subr.bf16.mxu0 0
        %1917 = vmatpush1.bf16.msra.mxu0 0
        %1918 = vmatprep.subr.bf16.mxu0 0
        %1919 = vmatpush1.bf16.msra.mxu0 0
        %1920 = vmatprep.subr.bf16.mxu0 0
        %1921 = vmatpush1.bf16.msra.mxu0 0
        %1922 = vmatprep.subr.bf16.mxu0 0
        %1923 = vmatpush1.bf16.msra.mxu0 0
        %1924 = vmatprep.subr.bf16.mxu0 0
        %1925 = vmatpush1.bf16.msra.mxu0 0
        %1926 = vmatprep.subr.bf16.mxu0 0
        %1927 = vmatpush1.bf16.msra.mxu0 0
        %1928 = vmatprep.subr.bf16.mxu0 0
        %1929 = vmatpush1.bf16.msra.mxu0 0
        %1930 = vmatprep.subr.bf16.mxu0 0
        %1931 = vmatpush1.bf16.msra.mxu0 0
        %1932 = vmatprep.subr.bf16.mxu0 0
        %1933 = vmatpush1.bf16.msra.mxu0 0
        %1934 = vmatprep.subr.bf16.mxu0 0
        %1935 = vmatpush1.bf16.msra.mxu0 0
        %1936 = vmatprep.subr.bf16.mxu0 0
        %1937 = vmatpush1.bf16.msra.mxu0 0
        %1938 = vmatprep.subr.bf16.mxu0 0
        %1939 = vmatpush1.bf16.msra.mxu0 0
        %1940 = vmatprep.subr.bf16.mxu0 0
        %1941 = vmatpush1.bf16.msra.mxu0 0
        %1942 = vmatprep.subr.bf16.mxu0 0
        %1943 = vmatpush1.bf16.msra.mxu0 0
        %1944 = vmatprep.subr.bf16.mxu0 0
        %1945 = vmatpush1.bf16.msra.mxu0 0
        %1946 = vmatprep.mubr.bf16.mxu0 0
        %1947 = vmatmul.mubr.bf16.gmra.mrb[0].mxu0 %v1908
        %v1948 = vpop.f32.mrb[0].mxu0
        %v1949 = vadd.f32 0.0, %v1948
        %v1950 = vpop.f32.mrb[0].mxu0
        %v1951 = vpop.f32.mrb[0].mxu0
        %v1952 = vadd.f32 0.0, %v1951
        %v1953 = vpop.f32.mrb[0].mxu0
        %1954 = vdwg.mxu0
        %v1957 = vunpack.c.l.b16 %v1700
        %v1958 = vunpack.c.l.b16 %v1701
        %v1959 = vpack.c.b16 %v1958, %v1957
        %v1961 = vsel %vm1906, %v1959, 0
        %1963 = vmatprep.subr.bf16.mxu0 0
        %1964 = vmatpush1.bf16.msra.mxu0 %v1912
        %1965 = vmatprep.subr.bf16.mxu0 0
        %1966 = vmatpush1.bf16.msra.mxu0 0
        %1967 = vmatprep.subr.bf16.mxu0 0
        %1968 = vmatpush1.bf16.msra.mxu0 0
        %1969 = vmatprep.subr.bf16.mxu0 0
        %1970 = vmatpush1.bf16.msra.mxu0 0
        %1971 = vmatprep.subr.bf16.mxu0 0
        %1972 = vmatpush1.bf16.msra.mxu0 0
        %1973 = vmatprep.subr.bf16.mxu0 0
        %1974 = vmatpush1.bf16.msra.mxu0 0
        %1975 = vmatprep.subr.bf16.mxu0 0
        %1976 = vmatpush1.bf16.msra.mxu0 0
        %1977 = vmatprep.subr.bf16.mxu0 0
        %1978 = vmatpush1.bf16.msra.mxu0 0
        %1979 = vmatprep.subr.bf16.mxu0 0
        %1980 = vmatpush1.bf16.msra.mxu0 0
        %1981 = vmatprep.subr.bf16.mxu0 0
        %1982 = vmatpush1.bf16.msra.mxu0 0
        %1983 = vmatprep.subr.bf16.mxu0 0
        %1984 = vmatpush1.bf16.msra.mxu0 0
        %1985 = vmatprep.subr.bf16.mxu0 0
        %1986 = vmatpush1.bf16.msra.mxu0 0
        %1987 = vmatprep.subr.bf16.mxu0 0
        %1988 = vmatpush1.bf16.msra.mxu0 0
        %1989 = vmatprep.subr.bf16.mxu0 0
        %1990 = vmatpush1.bf16.msra.mxu0 0
        %1991 = vmatprep.subr.bf16.mxu0 0
        %1992 = vmatpush1.bf16.msra.mxu0 0
        %1993 = vmatprep.subr.bf16.mxu0 0
        %1994 = vmatpush1.bf16.msra.mxu0 0
        %1995 = vmatprep.mubr.bf16.mxu0 0
        %1996 = vmatmul.mubr.bf16.gmra.mrb[0].mxu0 %v1961
        %v1997 = vpop.f32.mrb[0].mxu0
        %v1998 = vadd.f32 0.0, %v1997
        %v1999 = vpop.f32.mrb[0].mxu0
        %v2000 = vpop.f32.mrb[0].mxu0
        %v2001 = vadd.f32 0.0, %v2000
        %v2002 = vpop.f32.mrb[0].mxu0
        %2003 = vdwg.mxu0
        %v2004 = vld [vmem:[%s25] sm:$0xf]
        %v2005 = vld [vmem:[%s25 + $0x4] sm:$0xf]
        %v2006 = vld [vmem:[%s25 + $0x8] sm:$0xf]
        %v2007 = vld [vmem:[%s25 + $0xc] sm:$0xf]
        %v2008 = vpack.c.bf16 %v1952, %v1949
        %v2009 = vld [vmem:[%s27] sm:$0xf]
        %v2010 = vld [vmem:[%s27 + $0x4] sm:$0xf]
        %v2011 = vld [vmem:[%s27 + $0x8] sm:$0xf]
        %v2012 = vld [vmem:[%s27 + $0xc] sm:$0xf]
        %v2013 = vpack.c.bf16 %v2001, %v1998
        %v2018 = vunpack.c.l.b16 %v2009
        %v2019 = vunpack.c.l.b16 %v2010
        %v2020 = vunpack.c.l.b16 %v2011
        %v2021 = vunpack.c.l.b16 %v2012
        %v2022 = vpack.c.b16 %v2019, %v2018
        %v2023 = vpack.c.b16 %v2021, %v2020
        %v2027 = vsel %vm1788, %v2013, 0
        %2029 = vmatprep.subr.bf16.mxu0 0
        %2030 = vmatpush1.bf16.msra.mxu0 %v2022
        %2031 = vmatprep.subr.bf16.mxu0 0
        %2032 = vmatpush1.bf16.msra.mxu0 %v2023
        %2033 = vmatprep.subr.bf16.mxu0 0
        %2034 = vmatpush1.bf16.msra.mxu0 0
        %2035 = vmatprep.subr.bf16.mxu0 0
        %2036 = vmatpush1.bf16.msra.mxu0 0
        %2037 = vmatprep.subr.bf16.mxu0 0
        %2038 = vmatpush1.bf16.msra.mxu0 0
        %2039 = vmatprep.subr.bf16.mxu0 0
        %2040 = vmatpush1.bf16.msra.mxu0 0
        %2041 = vmatprep.subr.bf16.mxu0 0
        %2042 = vmatpush1.bf16.msra.mxu0 0
        %2043 = vmatprep.subr.bf16.mxu0 0
        %2044 = vmatpush1.bf16.msra.mxu0 0
        %2045 = vmatprep.subr.bf16.mxu0 0
        %2046 = vmatpush1.bf16.msra.mxu0 0
        %2047 = vmatprep.subr.bf16.mxu0 0
        %2048 = vmatpush1.bf16.msra.mxu0 0
        %2049 = vmatprep.subr.bf16.mxu0 0
        %2050 = vmatpush1.bf16.msra.mxu0 0
        %2051 = vmatprep.subr.bf16.mxu0 0
        %2052 = vmatpush1.bf16.msra.mxu0 0
        %2053 = vmatprep.subr.bf16.mxu0 0
        %2054 = vmatpush1.bf16.msra.mxu0 0
        %2055 = vmatprep.subr.bf16.mxu0 0
        %2056 = vmatpush1.bf16.msra.mxu0 0
        %2057 = vmatprep.subr.bf16.mxu0 0
        %2058 = vmatpush1.bf16.msra.mxu0 0
        %2059 = vmatprep.subr.bf16.mxu0 0
        %2060 = vmatpush1.bf16.msra.mxu0 0
        %2061 = vmatprep.mubr.bf16.mxu0 0
        %2062 = vmatmul.mubr.bf16.gmra.mrb[0].mxu0 %v2027
        %v2063 = vpop.f32.mrb[0].mxu0
        %v2064 = vadd.f32 0.0, %v2063
        %v2065 = vpop.f32.mrb[0].mxu0
        %v2066 = vpop.f32.mrb[0].mxu0
        %v2067 = vadd.f32 0.0, %v2066
        %v2068 = vpop.f32.mrb[0].mxu0
        %2069 = vdwg.mxu0
        %v2074 = vunpack.c.l.b16 %v2004
        %v2075 = vunpack.c.l.b16 %v2005
        %v2076 = vunpack.c.l.b16 %v2006
        %v2077 = vunpack.c.l.b16 %v2007
        %v2078 = vpack.c.b16 %v2075, %v2074
        %v2079 = vpack.c.b16 %v2077, %v2076
        %v2083 = vsel %vm1788, %v2008, 0
        %2085 = vmatprep.subr.bf16.mxu0 0
        %2086 = vmatpush1.bf16.msra.mxu0 %v2078
        %2087 = vmatprep.subr.bf16.mxu0 0
        %2088 = vmatpush1.bf16.msra.mxu0 %v2079
        %2089 = vmatprep.subr.bf16.mxu0 0
        %2090 = vmatpush1.bf16.msra.mxu0 0
        %2091 = vmatprep.subr.bf16.mxu0 0
        %2092 = vmatpush1.bf16.msra.mxu0 0
        %2093 = vmatprep.subr.bf16.mxu0 0
        %2094 = vmatpush1.bf16.msra.mxu0 0
        %2095 = vmatprep.subr.bf16.mxu0 0
        %2096 = vmatpush1.bf16.msra.mxu0 0
        %2097 = vmatprep.subr.bf16.mxu0 0
        %2098 = vmatpush1.bf16.msra.mxu0 0
        %2099 = vmatprep.subr.bf16.mxu0 0
        %2100 = vmatpush1.bf16.msra.mxu0 0
        %2101 = vmatprep.subr.bf16.mxu0 0
        %2102 = vmatpush1.bf16.msra.mxu0 0
        %2103 = vmatprep.subr.bf16.mxu0 0
        %2104 = vmatpush1.bf16.msra.mxu0 0
        %2105 = vmatprep.subr.bf16.mxu0 0
        %2106 = vmatpush1.bf16.msra.mxu0 0
        %2107 = vmatprep.subr.bf16.mxu0 0
        %2108 = vmatpush1.bf16.msra.mxu0 0
        %2109 = vmatprep.subr.bf16.mxu0 0
        %2110 = vmatpush1.bf16.msra.mxu0 0
        %2111 = vmatprep.subr.bf16.mxu0 0
        %2112 = vmatpush1.bf16.msra.mxu0 0
        %2113 = vmatprep.subr.bf16.mxu0 0
        %2114 = vmatpush1.bf16.msra.mxu0 0
        %2115 = vmatprep.subr.bf16.mxu0 0
        %2116 = vmatpush1.bf16.msra.mxu0 0
        %2117 = vmatprep.mubr.bf16.mxu0 0
        %2118 = vmatmul.mubr.bf16.gmra.mrb[0].mxu0 %v2083
        %v2119 = vpop.f32.mrb[0].mxu0
        %v2120 = vadd.f32 %v2064, %v2119
        %v2121 = vpop.f32.mrb[0].mxu0
        %v2122 = vpop.f32.mrb[0].mxu0
        %v2123 = vadd.f32 %v2067, %v2122
        %v2124 = vpop.f32.mrb[0].mxu0
        %2125 = vdwg.mxu0
        %v2126 = vld [vmem:[#allocation12] sm:$0x1]
        %v2128 = vlaneseq
        %v2129 = vshrl.u32 %v2128, 7
        %v2130 = vsub.s32 0, %v2129
        %v2131 = vrot.slane %v2126, %v2130
        %v2133 = vadd.f32 %v2120, %v2131
        %v2134 = vadd.f32 %v2123, %v2131
        %v2135 = vmax.f32 %v2133, 0.0
        %v2136 = vmax.f32 %v2134, 0.0
        %v2137 = vld [vmem:[%s31] sm:$0xf]
        %v2138 = vld [vmem:[%s31 + $0x4] sm:$0xf]
        %v2139 = vld [vmem:[%s31 + $0x8] sm:$0xf]
        %v2140 = vld [vmem:[%s31 + $0xc] sm:$0xf]
        %v2141 = vpack.c.bf16 %v2136, %v2135
        %v2142 = vld [vmem:[#allocation13] sm:$0x1]
        %v2144 = vlaneseq
        %v2145 = vshrl.u32 %v2144, 7
        %v2146 = vsub.s32 0, %v2145
        %v2147 = vrot.slane %v2142, %v2146
        %v2153 = vunpack.c.l.b16 %v2137
        %v2154 = vunpack.c.l.b16 %v2138
        %v2155 = vunpack.c.l.b16 %v2139
        %v2156 = vunpack.c.l.b16 %v2140
        %v2157 = vpack.c.b16 %v2154, %v2153
        %v2158 = vpack.c.b16 %v2156, %v2155
        %v2162 = vsel %vm1788, %v2141, 0
        %2164 = vmatprep.subr.bf16.mxu0 0
        %2165 = vmatpush1.bf16.msra.mxu0 %v2157
        %2166 = vmatprep.subr.bf16.mxu0 0
        %2167 = vmatpush1.bf16.msra.mxu0 %v2158
        %2168 = vmatprep.subr.bf16.mxu0 0
        %2169 = vmatpush1.bf16.msra.mxu0 0
        %2170 = vmatprep.subr.bf16.mxu0 0
        %2171 = vmatpush1.bf16.msra.mxu0 0
        %2172 = vmatprep.subr.bf16.mxu0 0
        %2173 = vmatpush1.bf16.msra.mxu0 0
        %2174 = vmatprep.subr.bf16.mxu0 0
        %2175 = vmatpush1.bf16.msra.mxu0 0
        %2176 = vmatprep.subr.bf16.mxu0 0
        %2177 = vmatpush1.bf16.msra.mxu0 0
        %2178 = vmatprep.subr.bf16.mxu0 0
        %2179 = vmatpush1.bf16.msra.mxu0 0
        %2180 = vmatprep.subr.bf16.mxu0 0
        %2181 = vmatpush1.bf16.msra.mxu0 0
        %2182 = vmatprep.subr.bf16.mxu0 0
        %2183 = vmatpush1.bf16.msra.mxu0 0
        %2184 = vmatprep.subr.bf16.mxu0 0
        %2185 = vmatpush1.bf16.msra.mxu0 0
        %2186 = vmatprep.subr.bf16.mxu0 0
        %2187 = vmatpush1.bf16.msra.mxu0 0
        %2188 = vmatprep.subr.bf16.mxu0 0
        %2189 = vmatpush1.bf16.msra.mxu0 0
        %2190 = vmatprep.subr.bf16.mxu0 0
        %2191 = vmatpush1.bf16.msra.mxu0 0
        %2192 = vmatprep.subr.bf16.mxu0 0
        %2193 = vmatpush1.bf16.msra.mxu0 0
        %2194 = vmatprep.subr.bf16.mxu0 0
        %2195 = vmatpush1.bf16.msra.mxu0 0
        %2196 = vmatprep.mubr.bf16.mxu0 0
        %2197 = vmatmul.mubr.bf16.gmra.mrb[0].mxu0 %v2162
        %v2198 = vpop.f32.mrb[0].mxu0
        %v2199 = vadd.f32 %v2147, %v2198
        %v2200 = vpop.f32.mrb[0].mxu0
        %v2201 = vpop.f32.mrb[0].mxu0
        %v2202 = vadd.f32 %v2147, %v2201
        %v2203 = vpop.f32.mrb[0].mxu0
        %2204 = vdwg.mxu0
        %v2205 = vmax.f32 %v2199, 0.0
        %v2206 = vmax.f32 %v2202, 0.0
        %v2207 = vld [vmem:[%s35] sm:$0xf]
        %v2208 = vld [vmem:[%s35 + $0x4] sm:$0xf]
        %v2209 = vld [vmem:[%s35 + $0x8] sm:$0xf]
        %v2210 = vld [vmem:[%s35 + $0xc] sm:$0xf]
        %v2211 = vpack.c.bf16 %v2206, %v2205
        %v2212 = vld [vmem:[#allocation15] sm:$0x1]
        %v2214 = vlaneseq
        %v2215 = vshrl.u32 %v2214, 7
        %v2216 = vsub.s32 0, %v2215
        %v2217 = vrot.slane %v2212, %v2216
        %v2223 = vunpack.c.l.b16 %v2207
        %v2224 = vunpack.c.l.b16 %v2208
        %v2225 = vunpack.c.l.b16 %v2209
        %v2226 = vunpack.c.l.b16 %v2210
        %v2227 = vpack.c.b16 %v2224, %v2223
        %v2228 = vpack.c.b16 %v2226, %v2225
        %v2232 = vsel %vm1788, %v2211, 0
        %2234 = vmatprep.subr.bf16.mxu0 0
        %2235 = vmatpush1.bf16.msra.mxu0 %v2227
        %2236 = vmatprep.subr.bf16.mxu0 0
        %2237 = vmatpush1.bf16.msra.mxu0 %v2228
        %2238 = vmatprep.subr.bf16.mxu0 0
        %2239 = vmatpush1.bf16.msra.mxu0 0
        %2240 = vmatprep.subr.bf16.mxu0 0
        %2241 = vmatpush1.bf16.msra.mxu0 0
        %2242 = vmatprep.subr.bf16.mxu0 0
        %2243 = vmatpush1.bf16.msra.mxu0 0
        %2244 = vmatprep.subr.bf16.mxu0 0
        %2245 = vmatpush1.bf16.msra.mxu0 0
        %2246 = vmatprep.subr.bf16.mxu0 0
        %2247 = vmatpush1.bf16.msra.mxu0 0
        %2248 = vmatprep.subr.bf16.mxu0 0
        %2249 = vmatpush1.bf16.msra.mxu0 0
        %2250 = vmatprep.subr.bf16.mxu0 0
        %2251 = vmatpush1.bf16.msra.mxu0 0
        %2252 = vmatprep.subr.bf16.mxu0 0
        %2253 = vmatpush1.bf16.msra.mxu0 0
        %2254 = vmatprep.subr.bf16.mxu0 0
        %2255 = vmatpush1.bf16.msra.mxu0 0
        %2256 = vmatprep.subr.bf16.mxu0 0
        %2257 = vmatpush1.bf16.msra.mxu0 0
        %2258 = vmatprep.subr.bf16.mxu0 0
        %2259 = vmatpush1.bf16.msra.mxu0 0
        %2260 = vmatprep.subr.bf16.mxu0 0
        %2261 = vmatpush1.bf16.msra.mxu0 0
        %2262 = vmatprep.subr.bf16.mxu0 0
        %2263 = vmatpush1.bf16.msra.mxu0 0
        %2264 = vmatprep.subr.bf16.mxu0 0
        %2265 = vmatpush1.bf16.msra.mxu0 0
        %2266 = vmatprep.mubr.bf16.mxu0 0
        %2267 = vmatmul.mubr.bf16.gmra.mrb[0].mxu0 %v2232
        %v2268 = vpop.f32.mrb[0].mxu0
        %v2269 = vadd.f32 %v2217, %v2268
        %v2270 = vpop.f32.mrb[0].mxu0
        %v2271 = vpop.f32.mrb[0].mxu0
        %v2272 = vadd.f32 %v2217, %v2271
        %v2273 = vpop.f32.mrb[0].mxu0
        %2274 = vdwg.mxu0
        %v2275 = vpack.c.bf16 %v2272, %v2269
        %vm2276 = vcmask 97280
        %v2278 = vsel %vm2276, %v1702, 0
        %vm2280 = vcmask 1045504
        %v2282 = vsel %vm2280, %v2275, 0
        %2284 = vmatprep.subr.bf16.mxu0 0
        %2285 = vmatpush1.bf16.msra.mxu0 %v2282
        %2286 = vmatprep.subr.bf16.mxu0 0
        %2287 = vmatpush1.bf16.msra.mxu0 0
        %2288 = vmatprep.subr.bf16.mxu0 0
        %2289 = vmatpush1.bf16.msra.mxu0 0
        %2290 = vmatprep.subr.bf16.mxu0 0
        %2291 = vmatpush1.bf16.msra.mxu0 0
        %2292 = vmatprep.subr.bf16.mxu0 0
        %2293 = vmatpush1.bf16.msra.mxu0 0
        %2294 = vmatprep.subr.bf16.mxu0 0
        %2295 = vmatpush1.bf16.msra.mxu0 0
        %2296 = vmatprep.subr.bf16.mxu0 0
        %2297 = vmatpush1.bf16.msra.mxu0 0
        %2298 = vmatprep.subr.bf16.mxu0 0
        %2299 = vmatpush1.bf16.msra.mxu0 0
        %2300 = vmatprep.subr.bf16.mxu0 0
        %2301 = vmatpush1.bf16.msra.mxu0 0
        %2302 = vmatprep.subr.bf16.mxu0 0
        %2303 = vmatpush1.bf16.msra.mxu0 0
        %2304 = vmatprep.subr.bf16.mxu0 0
        %2305 = vmatpush1.bf16.msra.mxu0 0
        %2306 = vmatprep.subr.bf16.mxu0 0
        %2307 = vmatpush1.bf16.msra.mxu0 0
        %2308 = vmatprep.subr.bf16.mxu0 0
        %2309 = vmatpush1.bf16.msra.mxu0 0
        %2310 = vmatprep.subr.bf16.mxu0 0
        %2311 = vmatpush1.bf16.msra.mxu0 0
        %2312 = vmatprep.subr.bf16.mxu0 0
        %2313 = vmatpush1.bf16.msra.mxu0 0
        %2314 = vmatprep.subr.bf16.mxu0 0
        %2315 = vmatpush1.bf16.msra.mxu0 0
        %2316 = vmatprep.mubr.bf16.mxu0 0
        %2317 = vmatmul.mubr.bf16.gmra.mrb[0].mxu0 %v2278
        %v2318 = vpop.f32.mrb[0].mxu0
        %v2319 = vadd.f32 0.0, %v2318
        %v2320 = vpop.f32.mrb[0].mxu0
        %v2321 = vpop.f32.mrb[0].mxu0
        %v2322 = vpop.f32.mrb[0].mxu0
        %2323 = vdwg.mxu0
        %v2324 = vld [vmem:[%s39] sm:$0xf]
        %v2325 = vld [vmem:[%s39 + $0x4] sm:$0xf]
        %v2326 = vld [vmem:[%s39 + $0x8] sm:$0xf]
        %v2327 = vld [vmem:[%s39 + $0xc] sm:$0xf]
        %v2328 = vpack.c.bf16 %v2319, %v2319
        %v2329 = vld [vmem:[#allocation16] sm:$0x1]
        %v2331 = vlaneseq
        %v2332 = vshrl.u32 %v2331, 7
        %v2333 = vsub.s32 0, %v2332
        %v2334 = vrot.slane %v2329, %v2333
        %v2340 = vunpack.c.l.b16 %v2324
        %v2341 = vunpack.c.l.b16 %v2325
        %v2342 = vunpack.c.l.b16 %v2326
        %v2343 = vunpack.c.l.b16 %v2327
        %v2344 = vpack.c.b16 %v2341, %v2340
        %v2345 = vpack.c.b16 %v2343, %v2342
        %v2349 = vsel %vm1788, %v2328, 0
        %2351 = vmatprep.subr.bf16.mxu0 0
        %2352 = vmatpush1.bf16.msra.mxu0 %v2344
        %2353 = vmatprep.subr.bf16.mxu0 0
        %2354 = vmatpush1.bf16.msra.mxu0 %v2345
        %2355 = vmatprep.subr.bf16.mxu0 0
        %2356 = vmatpush1.bf16.msra.mxu0 0
        %2357 = vmatprep.subr.bf16.mxu0 0
        %2358 = vmatpush1.bf16.msra.mxu0 0
        %2359 = vmatprep.subr.bf16.mxu0 0
        %2360 = vmatpush1.bf16.msra.mxu0 0
        %2361 = vmatprep.subr.bf16.mxu0 0
        %2362 = vmatpush1.bf16.msra.mxu0 0
        %2363 = vmatprep.subr.bf16.mxu0 0
        %2364 = vmatpush1.bf16.msra.mxu0 0
        %2365 = vmatprep.subr.bf16.mxu0 0
        %2366 = vmatpush1.bf16.msra.mxu0 0
        %2367 = vmatprep.subr.bf16.mxu0 0
        %2368 = vmatpush1.bf16.msra.mxu0 0
        %2369 = vmatprep.subr.bf16.mxu0 0
        %2370 = vmatpush1.bf16.msra.mxu0 0
        %2371 = vmatprep.subr.bf16.mxu0 0
        %2372 = vmatpush1.bf16.msra.mxu0 0
        %2373 = vmatprep.subr.bf16.mxu0 0
        %2374 = vmatpush1.bf16.msra.mxu0 0
        %2375 = vmatprep.subr.bf16.mxu0 0
        %2376 = vmatpush1.bf16.msra.mxu0 0
        %2377 = vmatprep.subr.bf16.mxu0 0
        %2378 = vmatpush1.bf16.msra.mxu0 0
        %2379 = vmatprep.subr.bf16.mxu0 0
        %2380 = vmatpush1.bf16.msra.mxu0 0
        %2381 = vmatprep.subr.bf16.mxu0 0
        %2382 = vmatpush1.bf16.msra.mxu0 0
        %2383 = vmatprep.mubr.bf16.mxu0 0
        %2384 = vmatmul.mubr.bf16.gmra.mrb[0].mxu0 %v2349
        %v2385 = vpop.f32.mrb[0].mxu0
        %v2386 = vadd.f32 %v2334, %v2385
        %v2387 = vpop.f32.mrb[0].mxu0
        %v2388 = vpop.f32.mrb[0].mxu0
        %v2389 = vpop.f32.mrb[0].mxu0
        %2390 = vdwg.mxu0
        %v2391 = vmax.f32 %v2386, 0.0
        %v2392 = vld [vmem:[%s43] sm:$0xf]
        %v2393 = vld [vmem:[%s43 + $0x4] sm:$0xf]
        %v2394 = vld [vmem:[%s43 + $0x8] sm:$0xf]
        %v2395 = vld [vmem:[%s43 + $0xc] sm:$0xf]
        %v2396 = vpack.c.bf16 %v2391, %v2391
        %v2397 = vld [vmem:[#allocation18] sm:$0x1]
        %v2399 = vlaneseq
        %v2400 = vshrl.u32 %v2399, 7
        %v2401 = vsub.s32 0, %v2400
        %v2402 = vrot.slane %v2397, %v2401
        %v2408 = vunpack.c.l.b16 %v2392
        %v2409 = vunpack.c.l.b16 %v2393
        %v2410 = vunpack.c.l.b16 %v2394
        %v2411 = vunpack.c.l.b16 %v2395
        %v2412 = vpack.c.b16 %v2409, %v2408
        %v2413 = vpack.c.b16 %v2411, %v2410
        %v2417 = vsel %vm1788, %v2396, 0
        %2419 = vmatprep.subr.bf16.mxu0 0
        %2420 = vmatpush1.bf16.msra.mxu0 %v2412
        %2421 = vmatprep.subr.bf16.mxu0 0
        %2422 = vmatpush1.bf16.msra.mxu0 %v2413
        %2423 = vmatprep.subr.bf16.mxu0 0
        %2424 = vmatpush1.bf16.msra.mxu0 0
        %2425 = vmatprep.subr.bf16.mxu0 0
        %2426 = vmatpush1.bf16.msra.mxu0 0
        %2427 = vmatprep.subr.bf16.mxu0 0
        %2428 = vmatpush1.bf16.msra.mxu0 0
        %2429 = vmatprep.subr.bf16.mxu0 0
        %2430 = vmatpush1.bf16.msra.mxu0 0
        %2431 = vmatprep.subr.bf16.mxu0 0
        %2432 = vmatpush1.bf16.msra.mxu0 0
        %2433 = vmatprep.subr.bf16.mxu0 0
        %2434 = vmatpush1.bf16.msra.mxu0 0
        %2435 = vmatprep.subr.bf16.mxu0 0
        %2436 = vmatpush1.bf16.msra.mxu0 0
        %2437 = vmatprep.subr.bf16.mxu0 0
        %2438 = vmatpush1.bf16.msra.mxu0 0
        %2439 = vmatprep.subr.bf16.mxu0 0
        %2440 = vmatpush1.bf16.msra.mxu0 0
        %2441 = vmatprep.subr.bf16.mxu0 0
        %2442 = vmatpush1.bf16.msra.mxu0 0
        %2443 = vmatprep.subr.bf16.mxu0 0
        %2444 = vmatpush1.bf16.msra.mxu0 0
        %2445 = vmatprep.subr.bf16.mxu0 0
        %2446 = vmatpush1.bf16.msra.mxu0 0
        %2447 = vmatprep.subr.bf16.mxu0 0
        %2448 = vmatpush1.bf16.msra.mxu0 0
        %2449 = vmatprep.subr.bf16.mxu0 0
        %2450 = vmatpush1.bf16.msra.mxu0 0
        %2451 = vmatprep.mubr.bf16.mxu0 0
        %2452 = vmatmul.mubr.bf16.gmra.mrb[0].mxu0 %v2417
        %v2453 = vpop.f32.mrb[0].mxu0
        %v2454 = vadd.f32 %v2402, %v2453
        %v2455 = vpop.f32.mrb[0].mxu0
        %v2456 = vpop.f32.mrb[0].mxu0
        %v2457 = vpop.f32.mrb[0].mxu0
        %2458 = vdwg.mxu0
        %v2459 = vmax.f32 %v2454, 0.0
        %v2460 = vld [vmem:[%s47] sm:$0xf]
        %v2461 = vld [vmem:[%s47 + $0x4] sm:$0xf]
        %v2462 = vld [vmem:[%s47 + $0x8] sm:$0xf]
        %v2463 = vld [vmem:[%s47 + $0xc] sm:$0xf]
        %v2464 = vpack.c.bf16 %v2459, %v2459
        %v2465 = vld [vmem:[#allocation19] sm:$0x1]
        %v2467 = vlaneseq
        %v2468 = vshrl.u32 %v2467, 7
        %v2469 = vsub.s32 0, %v2468
        %v2470 = vrot.slane %v2465, %v2469
        %v2476 = vunpack.c.l.b16 %v2460
        %v2477 = vunpack.c.l.b16 %v2461
        %v2478 = vunpack.c.l.b16 %v2462
        %v2479 = vunpack.c.l.b16 %v2463
        %v2480 = vpack.c.b16 %v2477, %v2476
        %v2481 = vpack.c.b16 %v2479, %v2478
        %v2485 = vsel %vm1788, %v2464, 0
        %2487 = vmatprep.subr.bf16.mxu0 0
        %2488 = vmatpush1.bf16.msra.mxu0 %v2480
        %2489 = vmatprep.subr.bf16.mxu0 0
        %2490 = vmatpush1.bf16.msra.mxu0 %v2481
        %2491 = vmatprep.subr.bf16.mxu0 0
        %2492 = vmatpush1.bf16.msra.mxu0 0
        %2493 = vmatprep.subr.bf16.mxu0 0
        %2494 = vmatpush1.bf16.msra.mxu0 0
        %2495 = vmatprep.subr.bf16.mxu0 0
        %2496 = vmatpush1.bf16.msra.mxu0 0
        %2497 = vmatprep.subr.bf16.mxu0 0
        %2498 = vmatpush1.bf16.msra.mxu0 0
        %2499 = vmatprep.subr.bf16.mxu0 0
        %2500 = vmatpush1.bf16.msra.mxu0 0
        %2501 = vmatprep.subr.bf16.mxu0 0
        %2502 = vmatpush1.bf16.msra.mxu0 0
        %2503 = vmatprep.subr.bf16.mxu0 0
        %2504 = vmatpush1.bf16.msra.mxu0 0
        %2505 = vmatprep.subr.bf16.mxu0 0
        %2506 = vmatpush1.bf16.msra.mxu0 0
        %2507 = vmatprep.subr.bf16.mxu0 0
        %2508 = vmatpush1.bf16.msra.mxu0 0
        %2509 = vmatprep.subr.bf16.mxu0 0
        %2510 = vmatpush1.bf16.msra.mxu0 0
        %2511 = vmatprep.subr.bf16.mxu0 0
        %2512 = vmatpush1.bf16.msra.mxu0 0
        %2513 = vmatprep.subr.bf16.mxu0 0
        %2514 = vmatpush1.bf16.msra.mxu0 0
        %2515 = vmatprep.subr.bf16.mxu0 0
        %2516 = vmatpush1.bf16.msra.mxu0 0
        %2517 = vmatprep.subr.bf16.mxu0 0
        %2518 = vmatpush1.bf16.msra.mxu0 0
        %2519 = vmatprep.mubr.bf16.mxu0 0
        %2520 = vmatmul.mubr.bf16.gmra.mrb[0].mxu0 %v2485
        %v2521 = vpop.f32.mrb[0].mxu0
        %v2522 = vadd.f32 %v2470, %v2521
        %v2523 = vpop.f32.mrb[0].mxu0
        %v2524 = vpop.f32.mrb[0].mxu0
        %v2525 = vpop.f32.mrb[0].mxu0
        %2526 = vdwg.mxu0
        %v2527 = vpack.c.bf16 %v2522, %v2522
        %v2529 = vsel %vm1910, %v2527, 0
        %2531 = vmatprep.subr.bf16.mxu0 0
        %2532 = vmatpush1.bf16.msra.mxu0 %v2529
        %2533 = vmatprep.subr.bf16.mxu0 0
        %2534 = vmatpush1.bf16.msra.mxu0 0
        %2535 = vmatprep.subr.bf16.mxu0 0
        %2536 = vmatpush1.bf16.msra.mxu0 0
        %2537 = vmatprep.subr.bf16.mxu0 0
        %2538 = vmatpush1.bf16.msra.mxu0 0
        %2539 = vmatprep.subr.bf16.mxu0 0
        %2540 = vmatpush1.bf16.msra.mxu0 0
        %2541 = vmatprep.subr.bf16.mxu0 0
        %2542 = vmatpush1.bf16.msra.mxu0 0
        %2543 = vmatprep.subr.bf16.mxu0 0
        %2544 = vmatpush1.bf16.msra.mxu0 0
        %2545 = vmatprep.subr.bf16.mxu0 0
        %2546 = vmatpush1.bf16.msra.mxu0 0
        %2547 = vmatprep.subr.bf16.mxu0 0
        %2548 = vmatpush1.bf16.msra.mxu0 0
        %2549 = vmatprep.subr.bf16.mxu0 0
        %2550 = vmatpush1.bf16.msra.mxu0 0
        %2551 = vmatprep.subr.bf16.mxu0 0
        %2552 = vmatpush1.bf16.msra.mxu0 0
        %2553 = vmatprep.subr.bf16.mxu0 0
        %2554 = vmatpush1.bf16.msra.mxu0 0
        %2555 = vmatprep.subr.bf16.mxu0 0
        %2556 = vmatpush1.bf16.msra.mxu0 0
        %2557 = vmatprep.subr.bf16.mxu0 0
        %2558 = vmatpush1.bf16.msra.mxu0 0
        %2559 = vmatprep.subr.bf16.mxu0 0
        %2560 = vmatpush1.bf16.msra.mxu0 0
        %2561 = vmatprep.subr.bf16.mxu0 0
        %2562 = vmatpush1.bf16.msra.mxu0 0
        %2563 = vmatprep.mubr.bf16.mxu0 0
        %2564 = vmatmul.mubr.bf16.gmra.mrb[0].mxu0 %v1908
        %v2565 = vpop.f32.mrb[0].mxu0
        %v2566 = vadd.f32 0.0, %v2565
        %v2567 = vpop.f32.mrb[0].mxu0
        %v2568 = vpop.f32.mrb[0].mxu0
        %v2569 = vadd.f32 0.0, %v2568
        %v2570 = vpop.f32.mrb[0].mxu0
        %2571 = vdwg.mxu0
        %2572 = vmatprep.subr.bf16.mxu0 0
        %2573 = vmatpush1.bf16.msra.mxu0 %v2529
        %2574 = vmatprep.subr.bf16.mxu0 0
        %2575 = vmatpush1.bf16.msra.mxu0 0
        %2576 = vmatprep.subr.bf16.mxu0 0
        %2577 = vmatpush1.bf16.msra.mxu0 0
        %2578 = vmatprep.subr.bf16.mxu0 0
        %2579 = vmatpush1.bf16.msra.mxu0 0
        %2580 = vmatprep.subr.bf16.mxu0 0
        %2581 = vmatpush1.bf16.msra.mxu0 0
        %2582 = vmatprep.subr.bf16.mxu0 0
        %2583 = vmatpush1.bf16.msra.mxu0 0
        %2584 = vmatprep.subr.bf16.mxu0 0
        %2585 = vmatpush1.bf16.msra.mxu0 0
        %2586 = vmatprep.subr.bf16.mxu0 0
        %2587 = vmatpush1.bf16.msra.mxu0 0
        %2588 = vmatprep.subr.bf16.mxu0 0
        %2589 = vmatpush1.bf16.msra.mxu0 0
        %2590 = vmatprep.subr.bf16.mxu0 0
        %2591 = vmatpush1.bf16.msra.mxu0 0
        %2592 = vmatprep.subr.bf16.mxu0 0
        %2593 = vmatpush1.bf16.msra.mxu0 0
        %2594 = vmatprep.subr.bf16.mxu0 0
        %2595 = vmatpush1.bf16.msra.mxu0 0
        %2596 = vmatprep.subr.bf16.mxu0 0
        %2597 = vmatpush1.bf16.msra.mxu0 0
        %2598 = vmatprep.subr.bf16.mxu0 0
        %2599 = vmatpush1.bf16.msra.mxu0 0
        %2600 = vmatprep.subr.bf16.mxu0 0
        %2601 = vmatpush1.bf16.msra.mxu0 0
        %2602 = vmatprep.subr.bf16.mxu0 0
        %2603 = vmatpush1.bf16.msra.mxu0 0
        %2604 = vmatprep.mubr.bf16.mxu0 0
        %2605 = vmatmul.mubr.bf16.gmra.mrb[0].mxu0 %v1961
        %v2606 = vpop.f32.mrb[0].mxu0
        %v2607 = vadd.f32 0.0, %v2606
        %v2608 = vpop.f32.mrb[0].mxu0
        %v2609 = vpop.f32.mrb[0].mxu0
        %v2610 = vadd.f32 0.0, %v2609
        %v2611 = vpop.f32.mrb[0].mxu0
        %2612 = vdwg.mxu0
        %v2613 = vld [vmem:[%s51] sm:$0xf]
        %v2614 = vld [vmem:[%s51 + $0x4] sm:$0xf]
        %v2615 = vld [vmem:[%s51 + $0x8] sm:$0xf]
        %v2616 = vld [vmem:[%s51 + $0xc] sm:$0xf]
        %v2617 = vpack.c.bf16 %v2569, %v2566
        %v2618 = vld [vmem:[#allocation21] sm:$0xf]
        %v2619 = vld [vmem:[#allocation21 + $0x4] sm:$0xf]
        %v2620 = vld [vmem:[#allocation21 + $0x8] sm:$0xf]
        %v2621 = vld [vmem:[#allocation21 + $0xc] sm:$0xf]
        %v2622 = vpack.c.bf16 %v2610, %v2607
        %v2627 = vunpack.c.l.b16 %v2618
        %v2628 = vunpack.c.l.b16 %v2619
        %v2629 = vunpack.c.l.b16 %v2620
        %v2630 = vunpack.c.l.b16 %v2621
        %v2631 = vpack.c.b16 %v2628, %v2627
        %v2632 = vpack.c.b16 %v2630, %v2629
        %v2636 = vsel %vm1788, %v2622, 0
        %2638 = vmatprep.subr.bf16.mxu0 0
        %2639 = vmatpush1.bf16.msra.mxu0 %v2631
        %2640 = vmatprep.subr.bf16.mxu0 0
        %2641 = vmatpush1.bf16.msra.mxu0 %v2632
        %2642 = vmatprep.subr.bf16.mxu0 0
        %2643 = vmatpush1.bf16.msra.mxu0 0
        %2644 = vmatprep.subr.bf16.mxu0 0
        %2645 = vmatpush1.bf16.msra.mxu0 0
        %2646 = vmatprep.subr.bf16.mxu0 0
        %2647 = vmatpush1.bf16.msra.mxu0 0
        %2648 = vmatprep.subr.bf16.mxu0 0
        %2649 = vmatpush1.bf16.msra.mxu0 0
        %2650 = vmatprep.subr.bf16.mxu0 0
        %2651 = vmatpush1.bf16.msra.mxu0 0
        %2652 = vmatprep.subr.bf16.mxu0 0
        %2653 = vmatpush1.bf16.msra.mxu0 0
        %2654 = vmatprep.subr.bf16.mxu0 0
        %2655 = vmatpush1.bf16.msra.mxu0 0
        %2656 = vmatprep.subr.bf16.mxu0 0
        %2657 = vmatpush1.bf16.msra.mxu0 0
        %2658 = vmatprep.subr.bf16.mxu0 0
        %2659 = vmatpush1.bf16.msra.mxu0 0
        %2660 = vmatprep.subr.bf16.mxu0 0
        %2661 = vmatpush1.bf16.msra.mxu0 0
        %2662 = vmatprep.subr.bf16.mxu0 0
        %2663 = vmatpush1.bf16.msra.mxu0 0
        %2664 = vmatprep.subr.bf16.mxu0 0
        %2665 = vmatpush1.bf16.msra.mxu0 0
        %2666 = vmatprep.subr.bf16.mxu0 0
        %2667 = vmatpush1.bf16.msra.mxu0 0
        %2668 = vmatprep.subr.bf16.mxu0 0
        %2669 = vmatpush1.bf16.msra.mxu0 0
        %2670 = vmatprep.mubr.bf16.mxu0 0
        %2671 = vmatmul.mubr.bf16.gmra.mrb[0].mxu0 %v2636
        %v2672 = vpop.f32.mrb[0].mxu0
        %v2673 = vadd.f32 0.0, %v2672
        %v2674 = vpop.f32.mrb[0].mxu0
        %v2675 = vpop.f32.mrb[0].mxu0
        %v2676 = vadd.f32 0.0, %v2675
        %v2677 = vpop.f32.mrb[0].mxu0
        %2678 = vdwg.mxu0
        %v2683 = vunpack.c.l.b16 %v2613
        %v2684 = vunpack.c.l.b16 %v2614
        %v2685 = vunpack.c.l.b16 %v2615
        %v2686 = vunpack.c.l.b16 %v2616
        %v2687 = vpack.c.b16 %v2684, %v2683
        %v2688 = vpack.c.b16 %v2686, %v2685
        %v2692 = vsel %vm1788, %v2617, 0
        %2694 = vmatprep.subr.bf16.mxu0 0
        %2695 = vmatpush1.bf16.msra.mxu0 %v2687
        %2696 = vmatprep.subr.bf16.mxu0 0
        %2697 = vmatpush1.bf16.msra.mxu0 %v2688
        %2698 = vmatprep.subr.bf16.mxu0 0
        %2699 = vmatpush1.bf16.msra.mxu0 0
        %2700 = vmatprep.subr.bf16.mxu0 0
        %2701 = vmatpush1.bf16.msra.mxu0 0
        %2702 = vmatprep.subr.bf16.mxu0 0
        %2703 = vmatpush1.bf16.msra.mxu0 0
        %2704 = vmatprep.subr.bf16.mxu0 0
        %2705 = vmatpush1.bf16.msra.mxu0 0
        %2706 = vmatprep.subr.bf16.mxu0 0
        %2707 = vmatpush1.bf16.msra.mxu0 0
        %2708 = vmatprep.subr.bf16.mxu0 0
        %2709 = vmatpush1.bf16.msra.mxu0 0
        %2710 = vmatprep.subr.bf16.mxu0 0
        %2711 = vmatpush1.bf16.msra.mxu0 0
        %2712 = vmatprep.subr.bf16.mxu0 0
        %2713 = vmatpush1.bf16.msra.mxu0 0
        %2714 = vmatprep.subr.bf16.mxu0 0
        %2715 = vmatpush1.bf16.msra.mxu0 0
        %2716 = vmatprep.subr.bf16.mxu0 0
        %2717 = vmatpush1.bf16.msra.mxu0 0
        %2718 = vmatprep.subr.bf16.mxu0 0
        %2719 = vmatpush1.bf16.msra.mxu0 0
        %2720 = vmatprep.subr.bf16.mxu0 0
        %2721 = vmatpush1.bf16.msra.mxu0 0
        %2722 = vmatprep.subr.bf16.mxu0 0
        %2723 = vmatpush1.bf16.msra.mxu0 0
        %2724 = vmatprep.subr.bf16.mxu0 0
        %2725 = vmatpush1.bf16.msra.mxu0 0
        %2726 = vmatprep.mubr.bf16.mxu0 0
        %2727 = vmatmul.mubr.bf16.gmra.mrb[0].mxu0 %v2692
        %v2728 = vpop.f32.mrb[0].mxu0
        %v2729 = vadd.f32 %v2673, %v2728
        %v2730 = vpop.f32.mrb[0].mxu0
        %v2731 = vpop.f32.mrb[0].mxu0
        %v2732 = vadd.f32 %v2676, %v2731
        %v2733 = vpop.f32.mrb[0].mxu0
        %2734 = vdwg.mxu0
        %v2735 = vld [vmem:[#allocation22] sm:$0xf]
        %v2736 = vld [vmem:[#allocation22 + $0x4] sm:$0xf]
        %v2737 = vld [vmem:[#allocation22 + $0x8] sm:$0xf]
        %v2738 = vld [vmem:[#allocation22 + $0xc] sm:$0xf]
        %v2743 = vunpack.c.l.b16 %v2735
        %v2744 = vunpack.c.l.b16 %v2736
        %v2745 = vunpack.c.l.b16 %v2737
        %v2746 = vunpack.c.l.b16 %v2738
        %v2747 = vpack.c.b16 %v2744, %v2743
        %v2748 = vpack.c.b16 %v2746, %v2745
        %v2751 = vsel %vm1788, %v2275, 0
        %2753 = vmatprep.subr.bf16.mxu0 0
        %2754 = vmatpush1.bf16.msra.mxu0 %v2747
        %2755 = vmatprep.subr.bf16.mxu0 0
        %2756 = vmatpush1.bf16.msra.mxu0 %v2748
        %2757 = vmatprep.subr.bf16.mxu0 0
        %2758 = vmatpush1.bf16.msra.mxu0 0
        %2759 = vmatprep.subr.bf16.mxu0 0
        %2760 = vmatpush1.bf16.msra.mxu0 0
        %2761 = vmatprep.subr.bf16.mxu0 0
        %2762 = vmatpush1.bf16.msra.mxu0 0
        %2763 = vmatprep.subr.bf16.mxu0 0
        %2764 = vmatpush1.bf16.msra.mxu0 0
        %2765 = vmatprep.subr.bf16.mxu0 0
        %2766 = vmatpush1.bf16.msra.mxu0 0
        %2767 = vmatprep.subr.bf16.mxu0 0
        %2768 = vmatpush1.bf16.msra.mxu0 0
        %2769 = vmatprep.subr.bf16.mxu0 0
        %2770 = vmatpush1.bf16.msra.mxu0 0
        %2771 = vmatprep.subr.bf16.mxu0 0
        %2772 = vmatpush1.bf16.msra.mxu0 0
        %2773 = vmatprep.subr.bf16.mxu0 0
        %2774 = vmatpush1.bf16.msra.mxu0 0
        %2775 = vmatprep.subr.bf16.mxu0 0
        %2776 = vmatpush1.bf16.msra.mxu0 0
        %2777 = vmatprep.subr.bf16.mxu0 0
        %2778 = vmatpush1.bf16.msra.mxu0 0
        %2779 = vmatprep.subr.bf16.mxu0 0
        %2780 = vmatpush1.bf16.msra.mxu0 0
        %2781 = vmatprep.subr.bf16.mxu0 0
        %2782 = vmatpush1.bf16.msra.mxu0 0
        %2783 = vmatprep.subr.bf16.mxu0 0
        %2784 = vmatpush1.bf16.msra.mxu0 0
        %2785 = vmatprep.mubr.bf16.mxu0 0
        %2786 = vmatmul.mubr.bf16.gmra.mrb[0].mxu0 %v2751
        %v2787 = vpop.f32.mrb[0].mxu0
        %v2788 = vadd.f32 0.0, %v2787
        %v2789 = vpop.f32.mrb[0].mxu0
        %v2790 = vpop.f32.mrb[0].mxu0
        %v2791 = vadd.f32 0.0, %v2790
        %v2792 = vpop.f32.mrb[0].mxu0
        %2793 = vdwg.mxu0
        %v2794 = vadd.f32 %v2729, %v2788
        %v2795 = vadd.f32 %v2732, %v2791
        %v2796 = vld [vmem:[#allocation24] sm:$0x1]
        %v2798 = vlaneseq
        %v2799 = vshrl.u32 %v2798, 7
        %v2800 = vsub.s32 0, %v2799
        %v2801 = vrot.slane %v2796, %v2800
        %v2803 = vadd.f32 %v2794, %v2801
        %v2804 = vadd.f32 %v2795, %v2801
        %v2805 = vmax.f32 %v2803, 0.0
        %v2806 = vmax.f32 %v2804, 0.0
        %v2807 = vld [vmem:[%s59] sm:$0xf]
        %v2808 = vld [vmem:[%s59 + $0x4] sm:$0xf]
        %v2809 = vld [vmem:[%s59 + $0x8] sm:$0xf]
        %v2810 = vld [vmem:[%s59 + $0xc] sm:$0xf]
        %v2811 = vpack.c.bf16 %v2806, %v2805
        %v2812 = vld [vmem:[#allocation25] sm:$0x1]
        %v2814 = vlaneseq
        %v2815 = vshrl.u32 %v2814, 7
        %v2816 = vsub.s32 0, %v2815
        %v2817 = vrot.slane %v2812, %v2816
        %v2823 = vunpack.c.l.b16 %v2807
        %v2824 = vunpack.c.l.b16 %v2808
        %v2825 = vunpack.c.l.b16 %v2809
        %v2826 = vunpack.c.l.b16 %v2810
        %v2827 = vpack.c.b16 %v2824, %v2823
        %v2828 = vpack.c.b16 %v2826, %v2825
        %v2832 = vsel %vm1788, %v2811, 0
        %2834 = vmatprep.subr.bf16.mxu0 0
        %2835 = vmatpush1.bf16.msra.mxu0 %v2827
        %2836 = vmatprep.subr.bf16.mxu0 0
        %2837 = vmatpush1.bf16.msra.mxu0 %v2828
        %2838 = vmatprep.subr.bf16.mxu0 0
        %2839 = vmatpush1.bf16.msra.mxu0 0
        %2840 = vmatprep.subr.bf16.mxu0 0
        %2841 = vmatpush1.bf16.msra.mxu0 0
        %2842 = vmatprep.subr.bf16.mxu0 0
        %2843 = vmatpush1.bf16.msra.mxu0 0
        %2844 = vmatprep.subr.bf16.mxu0 0
        %2845 = vmatpush1.bf16.msra.mxu0 0
        %2846 = vmatprep.subr.bf16.mxu0 0
        %2847 = vmatpush1.bf16.msra.mxu0 0
        %2848 = vmatprep.subr.bf16.mxu0 0
        %2849 = vmatpush1.bf16.msra.mxu0 0
        %2850 = vmatprep.subr.bf16.mxu0 0
        %2851 = vmatpush1.bf16.msra.mxu0 0
        %2852 = vmatprep.subr.bf16.mxu0 0
        %2853 = vmatpush1.bf16.msra.mxu0 0
        %2854 = vmatprep.subr.bf16.mxu0 0
        %2855 = vmatpush1.bf16.msra.mxu0 0
        %2856 = vmatprep.subr.bf16.mxu0 0
        %2857 = vmatpush1.bf16.msra.mxu0 0
        %2858 = vmatprep.subr.bf16.mxu0 0
        %2859 = vmatpush1.bf16.msra.mxu0 0
        %2860 = vmatprep.subr.bf16.mxu0 0
        %2861 = vmatpush1.bf16.msra.mxu0 0
        %2862 = vmatprep.subr.bf16.mxu0 0
        %2863 = vmatpush1.bf16.msra.mxu0 0
        %2864 = vmatprep.subr.bf16.mxu0 0
        %2865 = vmatpush1.bf16.msra.mxu0 0
        %2866 = vmatprep.mubr.bf16.mxu0 0
        %2867 = vmatmul.mubr.bf16.gmra.mrb[0].mxu0 %v2832
        %v2868 = vpop.f32.mrb[0].mxu0
        %v2869 = vadd.f32 %v2817, %v2868
        %v2870 = vpop.f32.mrb[0].mxu0
        %v2871 = vpop.f32.mrb[0].mxu0
        %v2872 = vadd.f32 %v2817, %v2871
        %v2873 = vpop.f32.mrb[0].mxu0
        %2874 = vdwg.mxu0
        %v2875 = vmax.f32 %v2869, 0.0
        %v2876 = vmax.f32 %v2872, 0.0
        %v2877 = vld [vmem:[#allocation27] sm:$0xf]
        %v2878 = vld [vmem:[#allocation27 + $0x4] sm:$0xf]
        %v2879 = vld [vmem:[#allocation27 + $0x8] sm:$0xf]
        %v2880 = vld [vmem:[#allocation27 + $0xc] sm:$0xf]
        %v2881 = vpack.c.bf16 %v2876, %v2875
        %v2882 = vld [vmem:[#allocation28] sm:$0x1]
        %v2884 = vlaneseq
        %v2885 = vshrl.u32 %v2884, 7
        %v2886 = vsub.s32 0, %v2885
        %v2887 = vrot.slane %v2882, %v2886
        %v2893 = vunpack.c.l.b16 %v2877
        %v2894 = vunpack.c.l.b16 %v2878
        %v2895 = vunpack.c.l.b16 %v2879
        %v2896 = vunpack.c.l.b16 %v2880
        %v2897 = vpack.c.b16 %v2894, %v2893
        %v2898 = vpack.c.b16 %v2896, %v2895
        %v2902 = vsel %vm1788, %v2881, 0
        %2904 = vmatprep.subr.bf16.mxu0 0
        %2905 = vmatpush1.bf16.msra.mxu0 %v2897
        %2906 = vmatprep.subr.bf16.mxu0 0
        %2907 = vmatpush1.bf16.msra.mxu0 %v2898
        %2908 = vmatprep.subr.bf16.mxu0 0
        %2909 = vmatpush1.bf16.msra.mxu0 0
        %2910 = vmatprep.subr.bf16.mxu0 0
        %2911 = vmatpush1.bf16.msra.mxu0 0
        %2912 = vmatprep.subr.bf16.mxu0 0
        %2913 = vmatpush1.bf16.msra.mxu0 0
        %2914 = vmatprep.subr.bf16.mxu0 0
        %2915 = vmatpush1.bf16.msra.mxu0 0
        %2916 = vmatprep.subr.bf16.mxu0 0
        %2917 = vmatpush1.bf16.msra.mxu0 0
        %2918 = vmatprep.subr.bf16.mxu0 0
        %2919 = vmatpush1.bf16.msra.mxu0 0
        %2920 = vmatprep.subr.bf16.mxu0 0
        %2921 = vmatpush1.bf16.msra.mxu0 0
        %2922 = vmatprep.subr.bf16.mxu0 0
        %2923 = vmatpush1.bf16.msra.mxu0 0
        %2924 = vmatprep.subr.bf16.mxu0 0
        %2925 = vmatpush1.bf16.msra.mxu0 0
        %2926 = vmatprep.subr.bf16.mxu0 0
        %2927 = vmatpush1.bf16.msra.mxu0 0
        %2928 = vmatprep.subr.bf16.mxu0 0
        %2929 = vmatpush1.bf16.msra.mxu0 0
        %2930 = vmatprep.subr.bf16.mxu0 0
        %2931 = vmatpush1.bf16.msra.mxu0 0
        %2932 = vmatprep.subr.bf16.mxu0 0
        %2933 = vmatpush1.bf16.msra.mxu0 0
        %2934 = vmatprep.subr.bf16.mxu0 0
        %2935 = vmatpush1.bf16.msra.mxu0 0
        %2936 = vmatprep.mubr.bf16.mxu0 0
        %2937 = vmatmul.mubr.bf16.gmra.mrb[0].mxu0 %v2902
        %v2938 = vpop.f32.mrb[0].mxu0
        %v2939 = vadd.f32 %v2887, %v2938
        %v2940 = vpop.f32.mrb[0].mxu0
        %v2941 = vpop.f32.mrb[0].mxu0
        %v2942 = vadd.f32 %v2887, %v2941
        %v2943 = vpop.f32.mrb[0].mxu0
        %2944 = vdwg.mxu0
        %v2945 = vld [vmem:[%s67] sm:$0xf]
        %v2946 = vld [vmem:[%s67 + $0x4] sm:$0xf]
        %v2947 = vld [vmem:[%s67 + $0x8] sm:$0xf]
        %v2948 = vld [vmem:[%s67 + $0xc] sm:$0xf]
        %v2949 = vpack.c.bf16 %v2942, %v2939
        %v2950 = vld [vmem:[#allocation30] sm:$0xf]
        %v2951 = vld [vmem:[#allocation30 + $0x4] sm:$0xf]
        %v2952 = vld [vmem:[#allocation30 + $0x8] sm:$0xf]
        %v2953 = vld [vmem:[#allocation30 + $0xc] sm:$0xf]
        %v2954 = vpack.c.bf16 %v1695, %v1694
        %v2959 = vunpack.c.l.b16 %v2950
        %v2960 = vunpack.c.l.b16 %v2951
        %v2961 = vunpack.c.l.b16 %v2952
        %v2962 = vunpack.c.l.b16 %v2953
        %v2963 = vpack.c.b16 %v2960, %v2959
        %v2964 = vpack.c.b16 %v2962, %v2961
        %v2968 = vsel %vm1788, %v2954, 0
        %2970 = vmatprep.subr.bf16.mxu0 0
        %2971 = vmatpush1.bf16.msra.mxu0 %v2963
        %2972 = vmatprep.subr.bf16.mxu0 0
        %2973 = vmatpush1.bf16.msra.mxu0 %v2964
        %2974 = vmatprep.subr.bf16.mxu0 0
        %2975 = vmatpush1.bf16.msra.mxu0 0
        %2976 = vmatprep.subr.bf16.mxu0 0
        %2977 = vmatpush1.bf16.msra.mxu0 0
        %2978 = vmatprep.subr.bf16.mxu0 0
        %2979 = vmatpush1.bf16.msra.mxu0 0
        %2980 = vmatprep.subr.bf16.mxu0 0
        %2981 = vmatpush1.bf16.msra.mxu0 0
        %2982 = vmatprep.subr.bf16.mxu0 0
        %2983 = vmatpush1.bf16.msra.mxu0 0
        %2984 = vmatprep.subr.bf16.mxu0 0
        %2985 = vmatpush1.bf16.msra.mxu0 0
        %2986 = vmatprep.subr.bf16.mxu0 0
        %2987 = vmatpush1.bf16.msra.mxu0 0
        %2988 = vmatprep.subr.bf16.mxu0 0
        %2989 = vmatpush1.bf16.msra.mxu0 0
        %2990 = vmatprep.subr.bf16.mxu0 0
        %2991 = vmatpush1.bf16.msra.mxu0 0
        %2992 = vmatprep.subr.bf16.mxu0 0
        %2993 = vmatpush1.bf16.msra.mxu0 0
        %2994 = vmatprep.subr.bf16.mxu0 0
        %2995 = vmatpush1.bf16.msra.mxu0 0
        %2996 = vmatprep.subr.bf16.mxu0 0
        %2997 = vmatpush1.bf16.msra.mxu0 0
        %2998 = vmatprep.subr.bf16.mxu0 0
        %2999 = vmatpush1.bf16.msra.mxu0 0
        %3000 = vmatprep.subr.bf16.mxu0 0
        %3001 = vmatpush1.bf16.msra.mxu0 0
        %3002 = vmatprep.mubr.bf16.mxu0 0
        %3003 = vmatmul.mubr.bf16.gmra.mrb[0].mxu0 %v2968
        %v3004 = vpop.f32.mrb[0].mxu0
        %v3005 = vadd.f32 0.0, %v3004
        %v3006 = vpop.f32.mrb[0].mxu0
        %v3007 = vpop.f32.mrb[0].mxu0
        %v3008 = vadd.f32 0.0, %v3007
        %v3009 = vpop.f32.mrb[0].mxu0
        %3010 = vdwg.mxu0
        %v3015 = vunpack.c.l.b16 %v2945
        %v3016 = vunpack.c.l.b16 %v2946
        %v3017 = vunpack.c.l.b16 %v2947
        %v3018 = vunpack.c.l.b16 %v2948
        %v3019 = vpack.c.b16 %v3016, %v3015
        %v3020 = vpack.c.b16 %v3018, %v3017
        %v3024 = vsel %vm1788, %v2949, 0
        %3026 = vmatprep.subr.bf16.mxu0 0
        %3027 = vmatpush1.bf16.msra.mxu0 %v3019
        %3028 = vmatprep.subr.bf16.mxu0 0
        %3029 = vmatpush1.bf16.msra.mxu0 %v3020
        %3030 = vmatprep.subr.bf16.mxu0 0
        %3031 = vmatpush1.bf16.msra.mxu0 0
        %3032 = vmatprep.subr.bf16.mxu0 0
        %3033 = vmatpush1.bf16.msra.mxu0 0
        %3034 = vmatprep.subr.bf16.mxu0 0
        %3035 = vmatpush1.bf16.msra.mxu0 0
        %3036 = vmatprep.subr.bf16.mxu0 0
        %3037 = vmatpush1.bf16.msra.mxu0 0
        %3038 = vmatprep.subr.bf16.mxu0 0
        %3039 = vmatpush1.bf16.msra.mxu0 0
        %3040 = vmatprep.subr.bf16.mxu0 0
        %3041 = vmatpush1.bf16.msra.mxu0 0
        %3042 = vmatprep.subr.bf16.mxu0 0
        %3043 = vmatpush1.bf16.msra.mxu0 0
        %3044 = vmatprep.subr.bf16.mxu0 0
        %3045 = vmatpush1.bf16.msra.mxu0 0
        %3046 = vmatprep.subr.bf16.mxu0 0
        %3047 = vmatpush1.bf16.msra.mxu0 0
        %3048 = vmatprep.subr.bf16.mxu0 0
        %3049 = vmatpush1.bf16.msra.mxu0 0
        %3050 = vmatprep.subr.bf16.mxu0 0
        %3051 = vmatpush1.bf16.msra.mxu0 0
        %3052 = vmatprep.subr.bf16.mxu0 0
        %3053 = vmatpush1.bf16.msra.mxu0 0
        %3054 = vmatprep.subr.bf16.mxu0 0
        %3055 = vmatpush1.bf16.msra.mxu0 0
        %3056 = vmatprep.subr.bf16.mxu0 0
        %3057 = vmatpush1.bf16.msra.mxu0 0
        %3058 = vmatprep.mubr.bf16.mxu0 0
        %3059 = vmatmul.mubr.bf16.gmra.mrb[0].mxu0 %v3024
        %v3060 = vpop.f32.mrb[0].mxu0
        %v3061 = vadd.f32 %v3005, %v3060
        %v3062 = vpop.f32.mrb[0].mxu0
        %v3063 = vpop.f32.mrb[0].mxu0
        %v3064 = vadd.f32 %v3008, %v3063
        %v3065 = vpop.f32.mrb[0].mxu0
        %3066 = vdwg.mxu0
        %v3067 = vld [vmem:[#allocation31] sm:$0x1]
        %v3069 = vlaneseq
        %v3070 = vshrl.u32 %v3069, 7
        %v3071 = vsub.s32 0, %v3070
        %v3072 = vrot.slane %v3067, %v3071
        %v3074 = vadd.f32 %v3061, %v3072
        %v3075 = vadd.f32 %v3064, %v3072
        %v3076 = vsub.f32 0.0, %v3074
        %v3077 = vsub.f32 0.0, %v3075
        %v3078 = vmul.f32 %v3076, 1.442695
        %v3079 = vpow.pop %v3078
        %v3080 = vmul.f32 %v3077, 1.442695
        %v3081 = vpow.pop %v3080
        %v3082 = vadd.f32 %v3079, 1.0
        %v3083 = vadd.f32 %v3081, 1.0
        %v3084 = vrcp.pop %v3082
        %v3085 = vrcp.pop %v3083
        %v3086 = vtanh.pop %v3074
        %v3087 = vtanh.pop %v3075
        %3090 = vrot.lane.b32.xlu0 %v1696, 32
        %v3091 = vpop.permute.xlu0 %3090
        %3092 = vrot.lane.b32.xlu0 %v1697, 32
        %v3093 = vpop.permute.xlu0 %3092
        %v3096 = vmul.f32 %v3084, %v3091
        %v3097 = vmul.f32 %v3085, %v3093
        %3100 = vrot.lane.b32.xlu0 %v3086, 64
        %v3101 = vpop.permute.xlu0 %3100
        %3102 = vrot.lane.b32.xlu0 %v3087, 64
        %v3103 = vpop.permute.xlu0 %3102
        %v3106 = vmul.f32 %v3084, %v3101
        %v3107 = vmul.f32 %v3085, %v3103
        %3110 = vrot.lane.b32.xlu0 %v3106, 32
        %v3111 = vpop.permute.xlu0 %3110
        %3112 = vrot.lane.b32.xlu0 %v3107, 32
        %v3113 = vpop.permute.xlu0 %3112
        %v3116 = vadd.f32 %v3096, %v3111
        %v3117 = vadd.f32 %v3097, %v3113
        %v3118 = vtanh.pop %v3116
        %v3119 = vtanh.pop %v3117
        %3122 = vrot.lane.b32.xlu0 %v3118, 64
        %v3123 = vpop.permute.xlu0 %3122
        %3124 = vrot.lane.b32.xlu0 %v3119, 64
        %v3125 = vpop.permute.xlu0 %3124
        %v3128 = vmul.f32 %v3084, %v3123
        %v3129 = vmul.f32 %v3085, %v3125
        %3132 = vrot.lane.b32.xlu0 %v3116, 96
        %v3133 = vpop.permute.xlu0 %3132
        %3134 = vrot.lane.b32.xlu0 %v3117, 96
        %v3135 = vpop.permute.xlu0 %3134
        %3138 = vst.msk [vmem:[%s1691] sm:$0xff] %vm1788, %v3133
        %vm3139 = vcmask 257024
        %3140 = vst.msk [vmem:[%s1691 + $0x8] sm:$0xf] %vm3139, %v3135
        %3143 = vrot.lane.b32.xlu0 %v3128, 32
        %v3144 = vpop.permute.xlu0 %3143
        %3145 = vrot.lane.b32.xlu0 %v3129, 32
        %v3146 = vpop.permute.xlu0 %3145
        %3149 = vst.msk [vmem:[%s1686] sm:$0xff] %vm1788, %v3144
        %3150 = vst.msk [vmem:[%s1686 + $0x8] sm:$0xf] %vm3139, %v3146
        %v3151 = vld [vmem:[%s73] sm:$0xf]
        %v3152 = vld [vmem:[%s73 + $0x4] sm:$0xf]
        %v3153 = vld [vmem:[%s73 + $0x8] sm:$0xf]
        %v3154 = vld [vmem:[%s73 + $0xc] sm:$0xf]
        %v3155 = vpack.c.bf16 %v3129, %v3128
        %v3156 = vld [vmem:[#allocation33] sm:$0x1]
        %v3158 = vlaneseq
        %v3159 = vshrl.u32 %v3158, 7
        %v3160 = vsub.s32 0, %v3159
        %v3161 = vrot.slane %v3156, %v3160
        %3164 = vrot.lane.b32.xlu0 %v3155, 32
        %v3165 = vpop.permute.xlu0 %3164
        %v3170 = vunpack.c.l.b16 %v3151
        %v3171 = vunpack.c.l.b16 %v3152
        %v3172 = vunpack.c.l.b16 %v3153
        %v3173 = vunpack.c.l.b16 %v3154
        %v3174 = vpack.c.b16 %v3171, %v3170
        %v3175 = vpack.c.b16 %v3173, %v3172
        %v3179 = vsel %vm1788, %v3165, 0
        %3181 = vmatprep.subr.bf16.mxu0 0
        %3182 = vmatpush1.bf16.msra.mxu0 %v3174
        %3183 = vmatprep.subr.bf16.mxu0 0
        %3184 = vmatpush1.bf16.msra.mxu0 %v3175
        %3185 = vmatprep.subr.bf16.mxu0 0
        %3186 = vmatpush1.bf16.msra.mxu0 0
        %3187 = vmatprep.subr.bf16.mxu0 0
        %3188 = vmatpush1.bf16.msra.mxu0 0
        %3189 = vmatprep.subr.bf16.mxu0 0
        %3190 = vmatpush1.bf16.msra.mxu0 0
        %3191 = vmatprep.subr.bf16.mxu0 0
        %3192 = vmatpush1.bf16.msra.mxu0 0
        %3193 = vmatprep.subr.bf16.mxu0 0
        %3194 = vmatpush1.bf16.msra.mxu0 0
        %3195 = vmatprep.subr.bf16.mxu0 0
        %3196 = vmatpush1.bf16.msra.mxu0 0
        %3197 = vmatprep.subr.bf16.mxu0 0
        %3198 = vmatpush1.bf16.msra.mxu0 0
        %3199 = vmatprep.subr.bf16.mxu0 0
        %3200 = vmatpush1.bf16.msra.mxu0 0
        %3201 = vmatprep.subr.bf16.mxu0 0
        %3202 = vmatpush1.bf16.msra.mxu0 0
        %3203 = vmatprep.subr.bf16.mxu0 0
        %3204 = vmatpush1.bf16.msra.mxu0 0
        %3205 = vmatprep.subr.bf16.mxu0 0
        %3206 = vmatpush1.bf16.msra.mxu0 0
        %3207 = vmatprep.subr.bf16.mxu0 0
        %3208 = vmatpush1.bf16.msra.mxu0 0
        %3209 = vmatprep.subr.bf16.mxu0 0
        %3210 = vmatpush1.bf16.msra.mxu0 0
        %3211 = vmatprep.subr.bf16.mxu0 0
        %3212 = vmatpush1.bf16.msra.mxu0 0
        %3213 = vmatprep.mubr.bf16.mxu0 0
        %3214 = vmatmul.mubr.bf16.gmra.mrb[0].mxu0 %v3179
        %v3215 = vpop.f32.mrb[0].mxu0
        %v3216 = vadd.f32 %v3161, %v3215
        %v3217 = vpop.f32.mrb[0].mxu0
        %v3218 = vpop.f32.mrb[0].mxu0
        %v3219 = vadd.f32 %v3161, %v3218
        %v3220 = vpop.f32.mrb[0].mxu0
        %3221 = vdwg.mxu0
        %v3222 = vmax.f32 %v3216, 0.0
        %v3223 = vmax.f32 %v3219, 0.0
        %v3224 = vld [vmem:[#allocation34] sm:$0xf]
        %v3225 = vld [vmem:[#allocation34 + $0x4] sm:$0xf]
        %v3226 = vld [vmem:[#allocation34 + $0x8] sm:$0xf]
        %v3227 = vld [vmem:[#allocation34 + $0xc] sm:$0xf]
        %v3228 = vpack.c.bf16 %v3223, %v3222
        %v3229 = vld [vmem:[#allocation36] sm:$0x1]
        %v3231 = vlaneseq
        %v3232 = vshrl.u32 %v3231, 7
        %v3233 = vsub.s32 0, %v3232
        %v3234 = vrot.slane %v3229, %v3233
        %v3240 = vunpack.c.l.b16 %v3224
        %v3241 = vunpack.c.l.b16 %v3225
        %v3242 = vunpack.c.l.b16 %v3226
        %v3243 = vunpack.c.l.b16 %v3227
        %v3244 = vpack.c.b16 %v3241, %v3240
        %v3245 = vpack.c.b16 %v3243, %v3242
        %v3249 = vsel %vm1788, %v3228, 0
        %3251 = vmatprep.subr.bf16.mxu0 0
        %3252 = vmatpush1.bf16.msra.mxu0 %v3244
        %3253 = vmatprep.subr.bf16.mxu0 0
        %3254 = vmatpush1.bf16.msra.mxu0 %v3245
        %3255 = vmatprep.subr.bf16.mxu0 0
        %3256 = vmatpush1.bf16.msra.mxu0 0
        %3257 = vmatprep.subr.bf16.mxu0 0
        %3258 = vmatpush1.bf16.msra.mxu0 0
        %3259 = vmatprep.subr.bf16.mxu0 0
        %3260 = vmatpush1.bf16.msra.mxu0 0
        %3261 = vmatprep.subr.bf16.mxu0 0
        %3262 = vmatpush1.bf16.msra.mxu0 0
        %3263 = vmatprep.subr.bf16.mxu0 0
        %3264 = vmatpush1.bf16.msra.mxu0 0
        %3265 = vmatprep.subr.bf16.mxu0 0
        %3266 = vmatpush1.bf16.msra.mxu0 0
        %3267 = vmatprep.subr.bf16.mxu0 0
        %3268 = vmatpush1.bf16.msra.mxu0 0
        %3269 = vmatprep.subr.bf16.mxu0 0
        %3270 = vmatpush1.bf16.msra.mxu0 0
        %3271 = vmatprep.subr.bf16.mxu0 0
        %3272 = vmatpush1.bf16.msra.mxu0 0
        %3273 = vmatprep.subr.bf16.mxu0 0
        %3274 = vmatpush1.bf16.msra.mxu0 0
        %3275 = vmatprep.subr.bf16.mxu0 0
        %3276 = vmatpush1.bf16.msra.mxu0 0
        %3277 = vmatprep.subr.bf16.mxu0 0
        %3278 = vmatpush1.bf16.msra.mxu0 0
        %3279 = vmatprep.subr.bf16.mxu0 0
        %3280 = vmatpush1.bf16.msra.mxu0 0
        %3281 = vmatprep.subr.bf16.mxu0 0
        %3282 = vmatpush1.bf16.msra.mxu0 0
        %3283 = vmatprep.mubr.bf16.mxu0 0
        %3284 = vmatmul.mubr.bf16.gmra.mrb[0].mxu0 %v3249
        %v3285 = vpop.f32.mrb[0].mxu0
        %v3286 = vadd.f32 %v3234, %v3285
        %v3287 = vpop.f32.mrb[0].mxu0
        %v3288 = vpop.f32.mrb[0].mxu0
        %v3289 = vadd.f32 %v3234, %v3288
        %v3290 = vpop.f32.mrb[0].mxu0
        %3291 = vdwg.mxu0
        %v3292 = vmax.f32 %v3286, 0.0
        %v3293 = vmax.f32 %v3289, 0.0
        %v3294 = vld [vmem:[%s81] sm:$0xf]
        %v3295 = vld [vmem:[%s81 + $0x4] sm:$0xf]
        %v3296 = vld [vmem:[%s81 + $0x8] sm:$0xf]
        %v3297 = vld [vmem:[%s81 + $0xc] sm:$0xf]
        %v3298 = vpack.c.bf16 %v3293, %v3292
        %v3299 = vld [vmem:[%s83] sm:$0x1]
        %v3301 = vlaneseq
        %v3302 = vshrl.u32 %v3301, 7
        %v3303 = vsub.s32 0, %v3302
        %v3304 = vrot.slane %v3299, %v3303
        %v3310 = vunpack.c.l.b16 %v3294
        %v3311 = vunpack.c.l.b16 %v3295
        %v3312 = vunpack.c.l.b16 %v3296
        %v3313 = vunpack.c.l.b16 %v3297
        %v3314 = vpack.c.b16 %v3311, %v3310
        %v3315 = vpack.c.b16 %v3313, %v3312
        %v3319 = vsel %vm1788, %v3298, 0
        %3321 = vmatprep.subr.bf16.mxu0 0
        %3322 = vmatpush1.bf16.msra.mxu0 %v3314
        %3323 = vmatprep.subr.bf16.mxu0 0
        %3324 = vmatpush1.bf16.msra.mxu0 %v3315
        %3325 = vmatprep.subr.bf16.mxu0 0
        %3326 = vmatpush1.bf16.msra.mxu0 0
        %3327 = vmatprep.subr.bf16.mxu0 0
        %3328 = vmatpush1.bf16.msra.mxu0 0
        %3329 = vmatprep.subr.bf16.mxu0 0
        %3330 = vmatpush1.bf16.msra.mxu0 0
        %3331 = vmatprep.subr.bf16.mxu0 0
        %3332 = vmatpush1.bf16.msra.mxu0 0
        %3333 = vmatprep.subr.bf16.mxu0 0
        %3334 = vmatpush1.bf16.msra.mxu0 0
        %3335 = vmatprep.subr.bf16.mxu0 0
        %3336 = vmatpush1.bf16.msra.mxu0 0
        %3337 = vmatprep.subr.bf16.mxu0 0
        %3338 = vmatpush1.bf16.msra.mxu0 0
        %3339 = vmatprep.subr.bf16.mxu0 0
        %3340 = vmatpush1.bf16.msra.mxu0 0
        %3341 = vmatprep.subr.bf16.mxu0 0
        %3342 = vmatpush1.bf16.msra.mxu0 0
        %3343 = vmatprep.subr.bf16.mxu0 0
        %3344 = vmatpush1.bf16.msra.mxu0 0
        %3345 = vmatprep.subr.bf16.mxu0 0
        %3346 = vmatpush1.bf16.msra.mxu0 0
        %3347 = vmatprep.subr.bf16.mxu0 0
        %3348 = vmatpush1.bf16.msra.mxu0 0
        %3349 = vmatprep.subr.bf16.mxu0 0
        %3350 = vmatpush1.bf16.msra.mxu0 0
        %3351 = vmatprep.subr.bf16.mxu0 0
        %3352 = vmatpush1.bf16.msra.mxu0 0
        %3353 = vmatprep.mubr.bf16.mxu0 0
        %3354 = vmatmul.mubr.bf16.gmra.mrb[0].mxu0 %v3319
        %v3355 = vpop.f32.mrb[0].mxu0
        %v3356 = vadd.f32 %v3304, %v3355
        %v3357 = vpop.f32.mrb[0].mxu0
        %v3358 = vpop.f32.mrb[0].mxu0
        %v3359 = vadd.f32 %v3304, %v3358
        %v3360 = vpop.f32.mrb[0].mxu0
        %3361 = vdwg.mxu0
        %3362 = vst [vmem:[%s1681] sm:$0xff] %v3356
        %3363 = vst [vmem:[%s1681 + $0x8] sm:$0xf] %v3359
        %p3364 = scmp.lt.s32.totalorder %s115, 1
        %s3365 = scalar_select %p3364, %s115, 1
        %s3366 = smul.addr %s3365, 2
        %s3367 = smul.addr %s3366, 8
        %s3368 = scalar_lea.vmem %s85, %s3367
        %p3369 = scmp.lt.s32.totalorder %s115, 1
        %s3370 = scalar_select %p3369, %s115, 1
        %s3371 = smul.addr %s3370, 2
        %s3372 = smul.addr %s3371, 8
        %s3373 = scalar_lea.vmem %s87, %s3372
        %p3374 = scmp.lt.s32.totalorder %s115, 1
        %s3375 = scalar_select %p3374, %s115, 1
        %s3376 = smul.addr %s3375, 2
        %s3377 = smul.addr %s3376, 8
        %s3378 = scalar_lea.vmem %s89, %s3377
        // Predicated region
        $region281: #{_lambda_.1} parent=187 // pred_check
          %p3379 = pneg %p1030
        $region282: #{_lambda_.1} parent=187 // pred_check_branch
          %3381 = sbr.rel (%p3379) target = $region284
        $region283: #{_lambda_.1} parent=187 // pred_region
          _
        $region284: #{_lambda_.1} parent=187 // pred_fallthru
          _
        // Predicated region
        $region285: #{_lambda_.1} parent=187 // pred_check
          %p3382 = pneg %p1056
        $region286: #{_lambda_.1} parent=187 // pred_check_branch
          %3384 = sbr.rel (%p3382) target = $region288
        $region287: #{_lambda_.1} parent=187 // pred_region
          _
        $region288: #{_lambda_.1} parent=187 // pred_fallthru
          _
        // Predicated region
        $region289: #{_lambda_.1} parent=187 // pred_check
          %p3385 = pneg %p1082
        $region290: #{_lambda_.1} parent=187 // pred_check_branch
          %3387 = sbr.rel (%p3385) target = $region292
        $region291: #{_lambda_.1} parent=187 // pred_region
          _
        $region292: #{_lambda_.1} parent=187 // pred_fallthru
          _
      $region188: #{_lambda_.1} parent=5 // pred_fallthru
        _
      %p3388 = scmp.le.s32.totalorder 2, %s110
      // Predicated region
      $region293: #{_lambda_.1} parent=5 // pred_check
        %p3389 = pneg %p3388
      $region294: #{_lambda_.1} parent=5 // pred_check_branch
        %3391 = sbr.rel (%p3389) target = $region296
      $region295: #{_lambda_.1} parent=5 // pred_region
        %s3392 = ssub.s32 %s110, 2
        // Predicated region
        $region297: #{_lambda_.1} parent=295 // pred_check
          %p3393 = pneg %p1036
        $region298: #{_lambda_.1} parent=295 // pred_check_branch
          %3395 = sbr.rel (%p3393) target = $region300
        $region299: #{_lambda_.1} parent=295 // pred_region
          %p3396 = scmp.lt.s32.totalorder %s116, 1
          %s3397 = scalar_select %p3396, %s116, 1
          %s3398 = smul.addr %s3397, 2
          %s3399 = smul.addr %s3398, 8
          %s3400 = scalar_lea.vmem %s85, %s3399
        $region300: #{_lambda_.1} parent=295 // pred_fallthru
          _
        // Predicated region
        $region301: #{_lambda_.1} parent=295 // pred_check
          %p3401 = pneg %p1062
        $region302: #{_lambda_.1} parent=295 // pred_check_branch
          %3403 = sbr.rel (%p3401) target = $region304
        $region303: #{_lambda_.1} parent=295 // pred_region
          %p3404 = scmp.lt.s32.totalorder %s116, 1
          %s3405 = scalar_select %p3404, %s116, 1
          %s3406 = smul.addr %s3405, 2
          %s3407 = smul.addr %s3406, 8
          %s3408 = scalar_lea.vmem %s87, %s3407
        $region304: #{_lambda_.1} parent=295 // pred_fallthru
          _
        // Predicated region
        $region305: #{_lambda_.1} parent=295 // pred_check
          %p3409 = pneg %p1088
        $region306: #{_lambda_.1} parent=295 // pred_check_branch
          %3411 = sbr.rel (%p3409) target = $region308
        $region307: #{_lambda_.1} parent=295 // pred_region
          %p3412 = scmp.lt.s32.totalorder %s116, 1
          %s3413 = scalar_select %p3412, %s116, 1
          %s3414 = smul.addr %s3413, 2
          %s3415 = smul.addr %s3414, 8
          %s3416 = scalar_lea.vmem %s89, %s3415
        $region308: #{_lambda_.1} parent=295 // pred_fallthru
          _
      $region296: #{_lambda_.1} parent=5 // pred_fallthru
        _
    $region6: #{_lambda_.1} parent=1 // loop_footer
      %s114 = sadd.s32 1, %s110
    $region7: #{_lambda_.1} parent=1 // loop_footer_branch
      %109 = sbr.rel target = $region3
    $region8: #{_lambda_.1} parent=1 // loop_exit
      _
    %3417 = vsyncpa [#allocation3], 1
    %s3418 = scalar_lea.sflag [#allocation3], 1
    %3419 = vsyncpa %s3418, 1
    %3420 = vsyncpa [#allocation5], 1
    %3421 = vsyncpa [#allocation8], 1
    %3422 = vsyncpa [#allocation11], 1
    %3423 = vsyncpa [#allocation14], 1
    %3424 = vsyncpa [#allocation17], 1
    %3425 = vsyncpa [#allocation20], 1
    %3426 = vsyncpa [#allocation23], 1
    %3427 = vsyncpa [#allocation26], 1
    %3428 = vsyncpa [#allocation29], 1
    %3429 = vsyncpa [#allocation32], 1
    %3430 = vsyncpa [#allocation35], 1

</llo_original>
